<compile_context>
chip_gen: v7x
topology: tpu7x:2x2x1
jax: 0.10.0
libtpu: 0.0.40
codegen_flags: <defaults>
</compile_context>

<pallas_src>
import functools

import jax
import jax.numpy as jnp
from jax.experimental import pallas as pl
from jax.experimental.pallas import tpu as pltpu


def _attention_kernel(x_ref, wqkv_ref, bqkv_ref, wout_ref, bout_ref,
                      o_ref, oheads_ref, *, heads, hp):
    """One batch tile: fused QKV projection + batched multi-head attention + output proj."""
    bt_tile, n, dim = x_ref.shape
    m = bt_tile * n
    d_pad = heads * hp
    mm_dtype = wqkv_ref.dtype            # bf16 fast path / f32 validation path

    # (bt_tile, n, dim) -> (bt_tile*n, dim): leading-dim merge.
    x2 = x_ref[...].reshape(m, dim)

    # ---- Fused QKV projection: ONE wide MXU matmul (N = 3*d_pad = 384) + one bias add.
    # q-scale is folded into the q block of wqkv/bqkv by the wrapper.
    qkv = jnp.dot(x2, wqkv_ref[...], preferred_element_type=jnp.float32) + bqkv_ref[...]

    # Static d_pad-aligned lane slices (free); cast matmul operands to mm_dtype.
    q = qkv[:, 0 * d_pad:1 * d_pad].astype(mm_dtype)
    k = qkv[:, 1 * d_pad:2 * d_pad].astype(mm_dtype)
    v = qkv[:, 2 * d_pad:3 * d_pad].astype(mm_dtype)

    def stack_heads(t2):
        # (m, d_pad) -> (heads*bt_tile, n, hp), head-major along the new leading axis.
        # Static hp-aligned lane slices + leading-dim reshape/concat only (no transpose).
        parts = [t2[:, h * hp:(h + 1) * hp].reshape(bt_tile, n, hp)
                 for h in range(heads)]
        return jnp.concatenate(parts, axis=0)

    qh = stack_heads(q)                  # (heads*bt_tile, n, hp)
    kh = stack_heads(k)
    vh = stack_heads(v)

    # ---- Scores for ALL (head, batch) pairs in one batched dot_general
    # (contracts last dims -> no materialized k transpose).
    dn_qk = (((2,), (2,)), ((0,), (0,)))   # s[b,i,j] = sum_d q[b,i,d] * k[b,j,d]
    s = jax.lax.dot_general(qh, kh, dn_qk,
                            preferred_element_type=jnp.float32)  # (heads*bt, n, n) f32

    # ---- ONE fused softmax over all heads (f32 math on every chip generation).
    s = s - jnp.max(s, axis=-1, keepdims=True)
    p = jnp.exp(s)
    p = p * pl.reciprocal(jnp.sum(p, axis=-1, keepdims=True), approx=False)

    # ---- PV for all heads in one batched dot_general.
    dn_pv = (((2,), (1,)), ((0,), (0,)))   # o[b,i,d] = sum_j p[b,i,j] * v[b,j,d]
    oh = jax.lax.dot_general(p.astype(mm_dtype), vh, dn_pv,
                             preferred_element_type=jnp.float32)  # (heads*bt, n, hp)

    # ---- Reassemble (m, d_pad) heads-major along lanes (== torch
    # out.transpose(2,3).reshape(..., heads*hd)) by writing each head at its
    # 16-lane offset in a VMEM scratch — no jnp.concatenate temporaries.
    for h in range(heads):
        oh_h = oh[h * bt_tile:(h + 1) * bt_tile].reshape(m, hp)
        oheads_ref[:, h * hp:(h + 1) * hp] = oh_h.astype(mm_dtype)

    # ---- to_out linear (MXU); Dropout(p=0.0) is identity.
    out = jnp.dot(oheads_ref[...], wout_ref[...],
                  preferred_element_type=jnp.float32) + bout_ref[...]
    o_ref[...] = out.reshape(bt_tile, n, -1).astype(o_ref.dtype)


def _prep_params(w_qkv, b_qkv, w_out, b_out, *, heads, scale, param_dtype):
    """Fused / transposed / zero-padded parameters (PyTorch (out, in) convention in)."""
    out3, dim = w_qkv.shape
    d_inner = out3 // 3                  # per-{q,k,v} width (torch reshape(..., 3, heads, -1))
    hd = d_inner // heads                # per-head width in the torch layout
    hp = int(pl.next_power_of_2(hd))     # lane-aligned padded head width (10 -> 16)
    d_pad = heads * hp

    wq, wk, wv = w_qkv[:d_inner], w_qkv[d_inner:2 * d_inner], w_qkv[2 * d_inner:]
    bq, bk, bv = b_qkv[:d_inner], b_qkv[d_inner:2 * d_inner], b_qkv[2 * d_inner:]

    def pad_w(w, s=1.0):                 # (d_inner, dim) -> (dim, d_pad), zero-padded heads
        w = w.reshape(heads, hd, dim)
        w = jnp.pad(w, ((0, 0), (0, hp - hd), (0, 0)))
        return (w.reshape(d_pad, dim) * s).T

    def pad_b(b, s=1.0):                 # (d_inner,) -> (1, d_pad)
        b = b.reshape(heads, hd)
        b = jnp.pad(b, ((0, 0), (0, hp - hd)))
        return b.reshape(1, d_pad) * s

    # Single fused QKV weight/bias; q-scale folded into the q block (no extra VPU mul).
    wqkv = jnp.concatenate([pad_w(wq, scale), pad_w(wk), pad_w(wv)], axis=1)
    bqkv = jnp.concatenate([pad_b(bq, scale), pad_b(bk), pad_b(bv)], axis=1)

    # to_out: pad the input rows hd -> hp per head to match the padded head layout.
    out_dim = w_out.shape[0]
    wo = w_out.T.reshape(heads, hd, out_dim)
    wo = jnp.pad(wo, ((0, 0), (0, hp - hd), (0, 0))).reshape(d_pad, out_dim)

    wqkv = wqkv.astype(param_dtype)      # matmul operands in compute dtype (bf16 default)
    wo = wo.astype(param_dtype)
    bqkv = bqkv.astype(jnp.float32)      # biases added to the f32 accumulator
    bo = b_out.reshape(1, out_dim).astype(jnp.float32)
    return (wqkv, bqkv, wo, bo), hp


def _tensorcores_per_device():
    """Best-effort TensorCores per device: 2 on v7x-style parts, else 1 (v5e/v6e)."""
    try:
        n = int(getattr(jax.devices()[0], "num_cores", 1) or 1)
        return max(1, min(2, n))
    except Exception:
        return 1


def attention_pallas(x, w_qkv, b_qkv, w_out, b_out, *, heads,
                     target_rows=1024, compute_dtype=jnp.bfloat16,
                     num_tensorcores=None):
    """x: (bt, b_sz, n_patches, dim). Weights in PyTorch (out, in) convention."""
    bt, b_sz, n, dim = x.shape
    scale = float((dim // heads) ** -0.5)          # matches module: head_dim = dim // heads
    (wqkv, bqkv, wo, bo), hp = _prep_params(
        w_qkv, b_qkv, w_out, b_out, heads=heads, scale=scale, param_dtype=compute_dtype)
    d_pad = heads * hp
    out_dim = wo.shape[1]

    B = bt * b_sz
    xf = x.reshape(B, n, dim).astype(compute_dtype)   # bf16 x halves input DMA bytes

    if num_tensorcores is None:
        num_tensorcores = _tensorcores_per_device()

    # Batch tile: as few grid steps as possible on single-TC chips (v5e/v6e);
    # only split into >= num_tensorcores "parallel" steps when the device has
    # multiple TensorCores (v7x).  VMEM is not the constraint at these shapes.
    bt_tile = max(1, min(B, max(1, target_rows // max(n, 1))))
    if num_tensorcores >= 2 and B >= num_tensorcores:
        bt_tile = min(bt_tile, pl.cdiv(B, num_tensorcores))
    num_steps = pl.cdiv(B, bt_tile)
    Bp = num_steps * bt_tile
    if Bp != B:
        # Zero-padded tail rows: softmax of all-equal scores is finite; rows discarded below.
        xf = jnp.pad(xf, ((0, Bp - B), (0, 0), (0, 0)))

    kernel = functools.partial(_attention_kernel, heads=heads, hp=hp)
    const = lambda b: (0, 0)             # constant index_map: weights stay VMEM-resident

    out = pl.pallas_call(
        kernel,
        out_shape=jax.ShapeDtypeStruct((Bp, n, out_dim), x.dtype),
        grid=(num_steps,),
        in_specs=[
            pl.BlockSpec((bt_tile, n, dim), lambda b: (b, 0, 0)),
            pl.BlockSpec((dim, 3 * d_pad), const),   # fused QKV weight (dim, 384)
            pl.BlockSpec((1, 3 * d_pad), const),     # fused QKV bias
            pl.BlockSpec((d_pad, out_dim), const),
            pl.BlockSpec((1, out_dim), const),
        ],
        out_specs=pl.BlockSpec((bt_tile, n, out_dim), lambda b: (b, 0, 0)),
        scratch_shapes=[pltpu.VMEM((bt_tile * n, d_pad), compute_dtype)],
        compiler_params=pltpu.CompilerParams(
            dimension_semantics=("parallel",)),
    )(xf, wqkv, bqkv, wo, bo)

    return out[:B].reshape(bt, b_sz, n, out_dim)


def attention_ref(x, w_qkv, b_qkv, w_out, b_out, *, heads):
    """Pure-JAX transcription of the PyTorch forward (for validation)."""
    bt, b_sz, n, dim = x.shape
    scale = (dim // heads) ** -0.5
    qkv = jnp.einsum('...i,oi->...o', x, w_qkv) + b_qkv
    qkv = qkv.reshape(bt, b_sz, n, 3, heads, -1)
    qkv = jnp.swapaxes(qkv, 2, 4)            # (bt, b, heads, 3, n, hd)
    q, k, v = qkv[:, :, :, 0], qkv[:, :, :, 1], qkv[:, :, :, 2]
    q = q * scale
    attn = jnp.einsum('...nd,...md->...nm', q, k)
    attn = jax.nn.softmax(attn, axis=-1)
    out = jnp.einsum('...nm,...md->...nd', attn, v)
    out = jnp.swapaxes(out, 2, 3).reshape(bt, b_sz, n, -1)
    out = jnp.einsum('...i,oi->...o', out, w_out) + b_out
    return out


if __name__ == "__main__":
    # MobileViT-XXS config: dim == 80 branch -> to_qkv: Linear(80, 240),
    # to_out: Linear(80, 80), heads = 8 (default), head_dim = 80 // 8 = 10.
    dim, heads = 80, 8
    bt, b_sz, n_patches = 2, 2, 8

    key = jax.random.PRNGKey(0)
    k_x, k_wq, k_bq, k_wo, k_bo = jax.random.split(key, 5)

    x = jax.random.normal(k_x, (bt, b_sz, n_patches, dim), dtype=jnp.float32)
    # Deterministic synthetic parameters (PyTorch Linear convention: (out, in)).
    w_qkv = 0.05 * jax.random.normal(k_wq, (3 * dim, dim), dtype=jnp.float32)
    b_qkv = 0.05 * jax.random.normal(k_bq, (3 * dim,), dtype=jnp.float32)
    w_out = 0.05 * jax.random.normal(k_wo, (dim, dim), dtype=jnp.float32)
    b_out = 0.05 * jax.random.normal(k_bo, (dim,), dtype=jnp.float32)

    y_ref = attention_ref(x, w_qkv, b_qkv, w_out, b_out, heads=heads)

    # 1) f32 validation mode: tight numerical check of the kernel structure.
    y_f32 = jax.block_until_ready(
        attention_pallas(x, w_qkv, b_qkv, w_out, b_out, heads=heads,
                         compute_dtype=jnp.float32))
    assert y_f32.shape == (bt, b_sz, n_patches, dim), y_f32.shape
    assert jnp.allclose(y_f32, y_ref, atol=1e-4, rtol=1e-4), \
        float(jnp.max(jnp.abs(y_f32 - y_ref)))

    # 2) Default bf16 fast path (MXU-native operands, f32 accumulation + f32 softmax).
    y_bf16 = jax.block_until_ready(
        attention_pallas(x, w_qkv, b_qkv, w_out, b_out, heads=heads))
    assert jnp.allclose(y_bf16, y_ref, atol=2e-2, rtol=2e-2), \
        float(jnp.max(jnp.abs(y_bf16 - y_ref)))

    # 3) Non-divisible batch: multi-step "parallel" grid (v7x-style 2-core split)
    #    with a zero-padded tail tile.
    x2 = jax.random.normal(jax.random.PRNGKey(1), (1, 5, n_patches, dim),
                           dtype=jnp.float32)
    y2 = jax.block_until_ready(
        attention_pallas(x2, w_qkv, b_qkv, w_out, b_out, heads=heads,
                         num_tensorcores=2))
    y2_ref = attention_ref(x2, w_qkv, b_qkv, w_out, b_out, heads=heads)
    assert jnp.allclose(y2, y2_ref, atol=2e-2, rtol=2e-2), \
        float(jnp.max(jnp.abs(y2 - y2_ref)))

    print("KERNEL_OK")
</pallas_src>

<mosaic_0001>
module attributes {stable_mosaic.version = 11 : i64} {
  func.func @_attention_kernel(%arg0: i32, %arg1: memref<4x8x80xf32, #tpu.memory_space<vmem>>, %arg2: memref<80x384xf32, #tpu.memory_space<vmem>>, %arg3: memref<1x384xf32, #tpu.memory_space<vmem>>, %arg4: memref<128x80xf32, #tpu.memory_space<vmem>>, %arg5: memref<1x80xf32, #tpu.memory_space<vmem>>, %arg6: memref<4x8x80xf32, #tpu.memory_space<vmem>>, %arg7: memref<32x128xf32, #tpu.memory_space<vmem>>) attributes {dimension_semantics = [#tpu.dimension_semantics<parallel>], iteration_bounds = array<i64: 1>, scalar_prefetch = 0 : i64, scratch_operands = 1 : i64, tpu.core_type = #tpu.core_type<tc>, window_params = [{transform_indices = @transform_0, window_bounds = array<i64: 4, 8, 80>}, {pipeline_mode = #tpu.pipeline_mode<synchronous>, transform_indices = @transform_1, window_bounds = array<i64: 80, 384>}, {pipeline_mode = #tpu.pipeline_mode<synchronous>, transform_indices = @transform_2, window_bounds = array<i64: 1, 384>}, {pipeline_mode = #tpu.pipeline_mode<synchronous>, transform_indices = @transform_3, window_bounds = array<i64: 128, 80>}, {pipeline_mode = #tpu.pipeline_mode<synchronous>, transform_indices = @transform_4, window_bounds = array<i64: 1, 80>}, {transform_indices = @transform_5, window_bounds = array<i64: 4, 8, 80>}]} {
    %c0 = arith.constant 0 : index
    %c0_0 = arith.constant 0 : index
    %c0_1 = arith.constant 0 : index
    %0 = vector.load %arg1[%c0, %c0_0, %c0_1] : memref<4x8x80xf32, #tpu.memory_space<vmem>>, vector<4x8x80xf32>
    %1 = vector.shape_cast %0 : vector<4x8x80xf32> to vector<32x80xf32>
    %c0_2 = arith.constant 0 : index
    %c0_3 = arith.constant 0 : index
    %2 = vector.load %arg2[%c0_2, %c0_3] : memref<80x384xf32, #tpu.memory_space<vmem>>, vector<80x384xf32>
    %cst = arith.constant dense<0.000000e+00> : vector<32x384xf32>
    %3 = tpu.matmul %1, %2, %cst {dimension_numbers = #tpu.dot_dimension_numbers<[1], [0], [0], [1], [0, 0, 1, 1], [], []>} : vector<32x80xf32>, vector<80x384xf32>, vector<32x384xf32> -> vector<32x384xf32>
    %c0_4 = arith.constant 0 : index
    %c0_5 = arith.constant 0 : index
    %4 = vector.load %arg3[%c0_4, %c0_5] : memref<1x384xf32, #tpu.memory_space<vmem>>, vector<1x384xf32>
    %5 = vector.broadcast %4 : vector<1x384xf32> to vector<32x384xf32>
    %6 = arith.addf %3, %5 : vector<32x384xf32>
    %7 = vector.extract_strided_slice %6 {offsets = [0, 0], sizes = [32, 128], strides = [1, 1]} : vector<32x384xf32> to vector<32x128xf32>
    %8 = vector.extract_strided_slice %6 {offsets = [0, 128], sizes = [32, 128], strides = [1, 1]} : vector<32x384xf32> to vector<32x128xf32>
    %9 = vector.extract_strided_slice %6 {offsets = [0, 256], sizes = [32, 128], strides = [1, 1]} : vector<32x384xf32> to vector<32x128xf32>
    %10 = vector.extract_strided_slice %7 {offsets = [0, 0], sizes = [32, 16], strides = [1, 1]} : vector<32x128xf32> to vector<32x16xf32>
    %11 = vector.shape_cast %10 : vector<32x16xf32> to vector<4x8x16xf32>
    %12 = vector.extract_strided_slice %7 {offsets = [0, 16], sizes = [32, 16], strides = [1, 1]} : vector<32x128xf32> to vector<32x16xf32>
    %13 = vector.shape_cast %12 : vector<32x16xf32> to vector<4x8x16xf32>
    %14 = vector.extract_strided_slice %7 {offsets = [0, 32], sizes = [32, 16], strides = [1, 1]} : vector<32x128xf32> to vector<32x16xf32>
    %15 = vector.shape_cast %14 : vector<32x16xf32> to vector<4x8x16xf32>
    %16 = vector.extract_strided_slice %7 {offsets = [0, 48], sizes = [32, 16], strides = [1, 1]} : vector<32x128xf32> to vector<32x16xf32>
    %17 = vector.shape_cast %16 : vector<32x16xf32> to vector<4x8x16xf32>
    %18 = vector.extract_strided_slice %7 {offsets = [0, 64], sizes = [32, 16], strides = [1, 1]} : vector<32x128xf32> to vector<32x16xf32>
    %19 = vector.shape_cast %18 : vector<32x16xf32> to vector<4x8x16xf32>
    %20 = vector.extract_strided_slice %7 {offsets = [0, 80], sizes = [32, 16], strides = [1, 1]} : vector<32x128xf32> to vector<32x16xf32>
    %21 = vector.shape_cast %20 : vector<32x16xf32> to vector<4x8x16xf32>
    %22 = vector.extract_strided_slice %7 {offsets = [0, 96], sizes = [32, 16], strides = [1, 1]} : vector<32x128xf32> to vector<32x16xf32>
    %23 = vector.shape_cast %22 : vector<32x16xf32> to vector<4x8x16xf32>
    %24 = vector.extract_strided_slice %7 {offsets = [0, 112], sizes = [32, 16], strides = [1, 1]} : vector<32x128xf32> to vector<32x16xf32>
    %25 = vector.shape_cast %24 : vector<32x16xf32> to vector<4x8x16xf32>
    %26 = tpu.concatenate %11, %13, %15, %17, %19, %21, %23, %25 in 0 : vector<4x8x16xf32>, vector<4x8x16xf32>, vector<4x8x16xf32>, vector<4x8x16xf32>, vector<4x8x16xf32>, vector<4x8x16xf32>, vector<4x8x16xf32>, vector<4x8x16xf32> -> vector<32x8x16xf32>
    %27 = vector.extract_strided_slice %8 {offsets = [0, 0], sizes = [32, 16], strides = [1, 1]} : vector<32x128xf32> to vector<32x16xf32>
    %28 = vector.shape_cast %27 : vector<32x16xf32> to vector<4x8x16xf32>
    %29 = vector.extract_strided_slice %8 {offsets = [0, 16], sizes = [32, 16], strides = [1, 1]} : vector<32x128xf32> to vector<32x16xf32>
    %30 = vector.shape_cast %29 : vector<32x16xf32> to vector<4x8x16xf32>
    %31 = vector.extract_strided_slice %8 {offsets = [0, 32], sizes = [32, 16], strides = [1, 1]} : vector<32x128xf32> to vector<32x16xf32>
    %32 = vector.shape_cast %31 : vector<32x16xf32> to vector<4x8x16xf32>
    %33 = vector.extract_strided_slice %8 {offsets = [0, 48], sizes = [32, 16], strides = [1, 1]} : vector<32x128xf32> to vector<32x16xf32>
    %34 = vector.shape_cast %33 : vector<32x16xf32> to vector<4x8x16xf32>
    %35 = vector.extract_strided_slice %8 {offsets = [0, 64], sizes = [32, 16], strides = [1, 1]} : vector<32x128xf32> to vector<32x16xf32>
    %36 = vector.shape_cast %35 : vector<32x16xf32> to vector<4x8x16xf32>
    %37 = vector.extract_strided_slice %8 {offsets = [0, 80], sizes = [32, 16], strides = [1, 1]} : vector<32x128xf32> to vector<32x16xf32>
    %38 = vector.shape_cast %37 : vector<32x16xf32> to vector<4x8x16xf32>
    %39 = vector.extract_strided_slice %8 {offsets = [0, 96], sizes = [32, 16], strides = [1, 1]} : vector<32x128xf32> to vector<32x16xf32>
    %40 = vector.shape_cast %39 : vector<32x16xf32> to vector<4x8x16xf32>
    %41 = vector.extract_strided_slice %8 {offsets = [0, 112], sizes = [32, 16], strides = [1, 1]} : vector<32x128xf32> to vector<32x16xf32>
    %42 = vector.shape_cast %41 : vector<32x16xf32> to vector<4x8x16xf32>
    %43 = tpu.concatenate %28, %30, %32, %34, %36, %38, %40, %42 in 0 : vector<4x8x16xf32>, vector<4x8x16xf32>, vector<4x8x16xf32>, vector<4x8x16xf32>, vector<4x8x16xf32>, vector<4x8x16xf32>, vector<4x8x16xf32>, vector<4x8x16xf32> -> vector<32x8x16xf32>
    %44 = vector.extract_strided_slice %9 {offsets = [0, 0], sizes = [32, 16], strides = [1, 1]} : vector<32x128xf32> to vector<32x16xf32>
    %45 = vector.shape_cast %44 : vector<32x16xf32> to vector<4x8x16xf32>
    %46 = vector.extract_strided_slice %9 {offsets = [0, 16], sizes = [32, 16], strides = [1, 1]} : vector<32x128xf32> to vector<32x16xf32>
    %47 = vector.shape_cast %46 : vector<32x16xf32> to vector<4x8x16xf32>
    %48 = vector.extract_strided_slice %9 {offsets = [0, 32], sizes = [32, 16], strides = [1, 1]} : vector<32x128xf32> to vector<32x16xf32>
    %49 = vector.shape_cast %48 : vector<32x16xf32> to vector<4x8x16xf32>
    %50 = vector.extract_strided_slice %9 {offsets = [0, 48], sizes = [32, 16], strides = [1, 1]} : vector<32x128xf32> to vector<32x16xf32>
    %51 = vector.shape_cast %50 : vector<32x16xf32> to vector<4x8x16xf32>
    %52 = vector.extract_strided_slice %9 {offsets = [0, 64], sizes = [32, 16], strides = [1, 1]} : vector<32x128xf32> to vector<32x16xf32>
    %53 = vector.shape_cast %52 : vector<32x16xf32> to vector<4x8x16xf32>
    %54 = vector.extract_strided_slice %9 {offsets = [0, 80], sizes = [32, 16], strides = [1, 1]} : vector<32x128xf32> to vector<32x16xf32>
    %55 = vector.shape_cast %54 : vector<32x16xf32> to vector<4x8x16xf32>
    %56 = vector.extract_strided_slice %9 {offsets = [0, 96], sizes = [32, 16], strides = [1, 1]} : vector<32x128xf32> to vector<32x16xf32>
    %57 = vector.shape_cast %56 : vector<32x16xf32> to vector<4x8x16xf32>
    %58 = vector.extract_strided_slice %9 {offsets = [0, 112], sizes = [32, 16], strides = [1, 1]} : vector<32x128xf32> to vector<32x16xf32>
    %59 = vector.shape_cast %58 : vector<32x16xf32> to vector<4x8x16xf32>
    %60 = tpu.concatenate %45, %47, %49, %51, %53, %55, %57, %59 in 0 : vector<4x8x16xf32>, vector<4x8x16xf32>, vector<4x8x16xf32>, vector<4x8x16xf32>, vector<4x8x16xf32>, vector<4x8x16xf32>, vector<4x8x16xf32>, vector<4x8x16xf32> -> vector<32x8x16xf32>
    %cst_6 = arith.constant dense<0.000000e+00> : vector<32x8x8xf32>
    %61 = tpu.matmul %26, %43, %cst_6 {dimension_numbers = #tpu.dot_dimension_numbers<[2], [2], [1], [1], [0, 0, 0, 1, 1, 1], [0], [0]>} : vector<32x8x16xf32>, vector<32x8x16xf32>, vector<32x8x8xf32> -> vector<32x8x8xf32>
    %cst_7 = arith.constant dense<0xFF800000> : vector<32x8xf32>
    %62 = vector.multi_reduction <maximumf>, %61, %cst_7 [2] : vector<32x8x8xf32> to vector<32x8xf32>
    %63 = vector.shape_cast %62 : vector<32x8xf32> to vector<32x8x1xf32>
    %64 = vector.broadcast %63 : vector<32x8x1xf32> to vector<32x8x8xf32>
    %65 = arith.subf %61, %64 : vector<32x8x8xf32>
    %66 = math.exp %65 : vector<32x8x8xf32>
    %cst_8 = arith.constant dense<0.000000e+00> : vector<32x8xf32>
    %67 = vector.multi_reduction <add>, %66, %cst_8 [2] : vector<32x8x8xf32> to vector<32x8xf32>
    %68 = vector.shape_cast %67 : vector<32x8xf32> to vector<32x8x1xf32>
    %69 = tpu.reciprocal %68 : vector<32x8x1xf32> -> vector<32x8x1xf32>
    %70 = vector.broadcast %69 : vector<32x8x1xf32> to vector<32x8x8xf32>
    %71 = arith.mulf %66, %70 : vector<32x8x8xf32>
    %cst_9 = arith.constant dense<0.000000e+00> : vector<32x8x16xf32>
    %72 = tpu.matmul %71, %60, %cst_9 {dimension_numbers = #tpu.dot_dimension_numbers<[2], [1], [1], [2], [0, 0, 0, 1, 1, 2], [0], [0]>} : vector<32x8x8xf32>, vector<32x8x16xf32>, vector<32x8x16xf32> -> vector<32x8x16xf32>
    %73 = vector.extract_strided_slice %72 {offsets = [0, 0, 0], sizes = [4, 8, 16], strides = [1, 1, 1]} : vector<32x8x16xf32> to vector<4x8x16xf32>
    %74 = vector.shape_cast %73 : vector<4x8x16xf32> to vector<32x16xf32>
    %c0_10 = arith.constant 0 : index
    %c0_11 = arith.constant 0 : index
    %75 = vector.load %arg7[%c0_10, %c0_11] : memref<32x128xf32, #tpu.memory_space<vmem>>, vector<32x16xf32>
    tpu.vector_store %arg7[%c0_10, %c0_11], %74 {strides = array<i32>} : memref<32x128xf32, #tpu.memory_space<vmem>>, vector<32x16xf32>,
    %76 = vector.extract_strided_slice %72 {offsets = [4, 0, 0], sizes = [4, 8, 16], strides = [1, 1, 1]} : vector<32x8x16xf32> to vector<4x8x16xf32>
    %77 = vector.shape_cast %76 : vector<4x8x16xf32> to vector<32x16xf32>
    %c0_12 = arith.constant 0 : index
    %c16 = arith.constant 16 : index
    %78 = vector.load %arg7[%c0_12, %c16] : memref<32x128xf32, #tpu.memory_space<vmem>>, vector<32x16xf32>
    tpu.vector_store %arg7[%c0_12, %c16], %77 {strides = array<i32>} : memref<32x128xf32, #tpu.memory_space<vmem>>, vector<32x16xf32>,
    %79 = vector.extract_strided_slice %72 {offsets = [8, 0, 0], sizes = [4, 8, 16], strides = [1, 1, 1]} : vector<32x8x16xf32> to vector<4x8x16xf32>
    %80 = vector.shape_cast %79 : vector<4x8x16xf32> to vector<32x16xf32>
    %c0_13 = arith.constant 0 : index
    %c32 = arith.constant 32 : index
    %81 = vector.load %arg7[%c0_13, %c32] : memref<32x128xf32, #tpu.memory_space<vmem>>, vector<32x16xf32>
    tpu.vector_store %arg7[%c0_13, %c32], %80 {strides = array<i32>} : memref<32x128xf32, #tpu.memory_space<vmem>>, vector<32x16xf32>,
    %82 = vector.extract_strided_slice %72 {offsets = [12, 0, 0], sizes = [4, 8, 16], strides = [1, 1, 1]} : vector<32x8x16xf32> to vector<4x8x16xf32>
    %83 = vector.shape_cast %82 : vector<4x8x16xf32> to vector<32x16xf32>
    %c0_14 = arith.constant 0 : index
    %c48 = arith.constant 48 : index
    %84 = vector.load %arg7[%c0_14, %c48] : memref<32x128xf32, #tpu.memory_space<vmem>>, vector<32x16xf32>
    tpu.vector_store %arg7[%c0_14, %c48], %83 {strides = array<i32>} : memref<32x128xf32, #tpu.memory_space<vmem>>, vector<32x16xf32>,
    %85 = vector.extract_strided_slice %72 {offsets = [16, 0, 0], sizes = [4, 8, 16], strides = [1, 1, 1]} : vector<32x8x16xf32> to vector<4x8x16xf32>
    %86 = vector.shape_cast %85 : vector<4x8x16xf32> to vector<32x16xf32>
    %c0_15 = arith.constant 0 : index
    %c64 = arith.constant 64 : index
    %87 = vector.load %arg7[%c0_15, %c64] : memref<32x128xf32, #tpu.memory_space<vmem>>, vector<32x16xf32>
    tpu.vector_store %arg7[%c0_15, %c64], %86 {strides = array<i32>} : memref<32x128xf32, #tpu.memory_space<vmem>>, vector<32x16xf32>,
    %88 = vector.extract_strided_slice %72 {offsets = [20, 0, 0], sizes = [4, 8, 16], strides = [1, 1, 1]} : vector<32x8x16xf32> to vector<4x8x16xf32>
    %89 = vector.shape_cast %88 : vector<4x8x16xf32> to vector<32x16xf32>
    %c0_16 = arith.constant 0 : index
    %c80 = arith.constant 80 : index
    %90 = vector.load %arg7[%c0_16, %c80] : memref<32x128xf32, #tpu.memory_space<vmem>>, vector<32x16xf32>
    tpu.vector_store %arg7[%c0_16, %c80], %89 {strides = array<i32>} : memref<32x128xf32, #tpu.memory_space<vmem>>, vector<32x16xf32>,
    %91 = vector.extract_strided_slice %72 {offsets = [24, 0, 0], sizes = [4, 8, 16], strides = [1, 1, 1]} : vector<32x8x16xf32> to vector<4x8x16xf32>
    %92 = vector.shape_cast %91 : vector<4x8x16xf32> to vector<32x16xf32>
    %c0_17 = arith.constant 0 : index
    %c96 = arith.constant 96 : index
    %93 = vector.load %arg7[%c0_17, %c96] : memref<32x128xf32, #tpu.memory_space<vmem>>, vector<32x16xf32>
    tpu.vector_store %arg7[%c0_17, %c96], %92 {strides = array<i32>} : memref<32x128xf32, #tpu.memory_space<vmem>>, vector<32x16xf32>,
    %94 = vector.extract_strided_slice %72 {offsets = [28, 0, 0], sizes = [4, 8, 16], strides = [1, 1, 1]} : vector<32x8x16xf32> to vector<4x8x16xf32>
    %95 = vector.shape_cast %94 : vector<4x8x16xf32> to vector<32x16xf32>
    %c0_18 = arith.constant 0 : index
    %c112 = arith.constant 112 : index
    %96 = vector.load %arg7[%c0_18, %c112] : memref<32x128xf32, #tpu.memory_space<vmem>>, vector<32x16xf32>
    tpu.vector_store %arg7[%c0_18, %c112], %95 {strides = array<i32>} : memref<32x128xf32, #tpu.memory_space<vmem>>, vector<32x16xf32>,
    %c0_19 = arith.constant 0 : index
    %c0_20 = arith.constant 0 : index
    %97 = vector.load %arg7[%c0_19, %c0_20] : memref<32x128xf32, #tpu.memory_space<vmem>>, vector<32x128xf32>
    %c0_21 = arith.constant 0 : index
    %c0_22 = arith.constant 0 : index
    %98 = vector.load %arg4[%c0_21, %c0_22] : memref<128x80xf32, #tpu.memory_space<vmem>>, vector<128x80xf32>
    %cst_23 = arith.constant dense<0.000000e+00> : vector<32x80xf32>
    %99 = tpu.matmul %97, %98, %cst_23 {dimension_numbers = #tpu.dot_dimension_numbers<[1], [0], [0], [1], [0, 0, 1, 1], [], []>} : vector<32x128xf32>, vector<128x80xf32>, vector<32x80xf32> -> vector<32x80xf32>
    %c0_24 = arith.constant 0 : index
    %c0_25 = arith.constant 0 : index
    %100 = vector.load %arg5[%c0_24, %c0_25] : memref<1x80xf32, #tpu.memory_space<vmem>>, vector<1x80xf32>
    %101 = vector.broadcast %100 : vector<1x80xf32> to vector<32x80xf32>
    %102 = arith.addf %99, %101 : vector<32x80xf32>
    %103 = vector.shape_cast %102 : vector<32x80xf32> to vector<4x8x80xf32>
    %c0_26 = arith.constant 0 : index
    %c0_27 = arith.constant 0 : index
    %c0_28 = arith.constant 0 : index
    %104 = vector.load %arg6[%c0_26, %c0_27, %c0_28] : memref<4x8x80xf32, #tpu.memory_space<vmem>>, vector<4x8x80xf32>
    tpu.vector_store %arg6[%c0_26, %c0_27, %c0_28], %103 {strides = array<i32>} : memref<4x8x80xf32, #tpu.memory_space<vmem>>, vector<4x8x80xf32>,
    return
  }
  func.func @transform_0(%arg0: i32) -> (i32, i32, i32) {
    %c0_i32 = arith.constant 0 : i32
    %c0_i32_0 = arith.constant 0 : i32
    %c0_i32_1 = arith.constant 0 : i32
    return %arg0, %c0_i32, %c0_i32_0 : i32, i32, i32
  }
  func.func @transform_1(%arg0: i32) -> (i32, i32) {
    %c0_i32 = arith.constant 0 : i32
    %c0_i32_0 = arith.constant 0 : i32
    %c0_i32_1 = arith.constant 0 : i32
    return %c0_i32, %c0_i32_0 : i32, i32
  }
  func.func @transform_2(%arg0: i32) -> (i32, i32) {
    %c0_i32 = arith.constant 0 : i32
    %c0_i32_0 = arith.constant 0 : i32
    %c0_i32_1 = arith.constant 0 : i32
    return %c0_i32, %c0_i32_0 : i32, i32
  }
  func.func @transform_3(%arg0: i32) -> (i32, i32) {
    %c0_i32 = arith.constant 0 : i32
    %c0_i32_0 = arith.constant 0 : i32
    %c0_i32_1 = arith.constant 0 : i32
    return %c0_i32, %c0_i32_0 : i32, i32
  }
  func.func @transform_4(%arg0: i32) -> (i32, i32) {
    %c0_i32 = arith.constant 0 : i32
    %c0_i32_0 = arith.constant 0 : i32
    %c0_i32_1 = arith.constant 0 : i32
    return %c0_i32, %c0_i32_0 : i32, i32
  }
  func.func @transform_5(%arg0: i32) -> (i32, i32, i32) {
    %c0_i32 = arith.constant 0 : i32
    %c0_i32_0 = arith.constant 0 : i32
    %c0_i32_1 = arith.constant 0 : i32
    return %arg0, %c0_i32, %c0_i32_0 : i32, i32, i32
  }
}

</mosaic_0001>

<llo_original>
// kernel: tpu_custom_call.1
$region0: #{tpu_custom_call.1}
  #allocation0 [shape = 'u32[]', space=smem, size = 0x4, offset = 0x4, fixed_abs, tag = 'smem constant byte address 0x4 - core index']
  #allocation1 [shape = 'u32[144,128]{1,0:T(1,128)}', space=vmem, size = 0x12000, scoped, tag = 'internal scratch']
  #allocation2 [shape = 'f32[32,128]{1,0:T(8,128)}', space=vmem, size = 0x4000, scoped, tag = 'scratch operand']
  %s0 = inlined_call_operand.vmem [shape: f32[4,8,80], index: 0, kind: input, shape index: {}]
  %s1 = inlined_call_operand.hbm [shape: f32[80,384], index: 1, kind: input, shape index: {}]
  %s2 = inlined_call_operand.vmem [shape: f32[1,384], index: 2, kind: input, shape index: {}]
  %s3 = inlined_call_operand.vmem [shape: f32[128,80], index: 3, kind: input, shape index: {}]
  %s4 = inlined_call_operand.vmem [shape: f32[1,80], index: 4, kind: input, shape index: {}]
  %s5 = inlined_call_operand.hbm [shape: f32[4,8,80], index: 5, kind: output, shape index: {}]
  %s6 = sld [smem:[#allocation0]]
  $region34: #{tpu_custom_call.1} parent=0
    _
  %s8 = ssub.s32 1, %s6
  %s9 = scalar_select 0, %s8, %s6
  $region1: #{tpu_custom_call.1} parent=0
    #allocation3 [shape = 'u8[122880]{0}', space=vmem, size = 0x1e000, scoped, tag = 'input window, operand 1, single buffered']
    #allocation4 [shape = 's32[1]{0}', space=sflag, size = 0x4, scoped, tag = 'scoped memory for tpu_custom_call.1']
    #allocation5 [shape = 's32[1]{0}', space=sflag, size = 0x4, scoped, tag = 'scoped memory for tpu_custom_call.1']
    #allocation6 [shape = 'u8[16384]{0}', space=vmem, size = 0x4000, scoped, tag = 'output window, operand 0, single buffered']
    %10 = vsyncpa [#allocation4], 0
    %11 = vsyncpa [#allocation5], 0
    // Predicated region
    $region2: #{tpu_custom_call.1} parent=1 // pred_check
      _
    $region3: #{tpu_custom_call.1} parent=1 // pred_check_branch
      %13 = sbr.rel (0) target = $region5
    $region4: #{tpu_custom_call.1} parent=1 // pred_region
      _
    $region5: #{tpu_custom_call.1} parent=1 // pred_fallthru
      _
    // Predicated region
    $region6: #{tpu_custom_call.1} parent=1 // pred_check
      _
    $region7: #{tpu_custom_call.1} parent=1 // pred_check_branch
      %15 = sbr.rel (0) target = $region9
    $region8: #{tpu_custom_call.1} parent=1 // pred_region
      %s17 = ssub.s32 3840, 3840
      %18 = vsyncadd [#allocation4], %s17
      %s19 = sshll.u32 [#allocation3], 4
      %s20 = int_to_ptr.vmem [resolvable:$true] %s19
      %25 = dma.hbm_to_vmem [thread:$0]  %s1, 3840, %s20, [#allocation4], 384, 384, 24
    $region9: #{tpu_custom_call.1} parent=1 // pred_fallthru
      _
    // Predicated region
    $region10: #{tpu_custom_call.1} parent=1 // pred_check
      _
    $region11: #{tpu_custom_call.1} parent=1 // pred_check_branch
      %27 = sbr.rel (0) target = $region13
    $region12: #{tpu_custom_call.1} parent=1 // pred_region
      _
    $region13: #{tpu_custom_call.1} parent=1 // pred_fallthru
      _
    // Predicated region
    $region14: #{tpu_custom_call.1} parent=1 // pred_check
      _
    $region15: #{tpu_custom_call.1} parent=1 // pred_check_branch
      %29 = sbr.rel (0) target = $region17
    $region16: #{tpu_custom_call.1} parent=1 // pred_region
      _
    $region17: #{tpu_custom_call.1} parent=1 // pred_fallthru
      _
    // Predicated region
    $region18: #{tpu_custom_call.1} parent=1 // pred_check
      _
    $region19: #{tpu_custom_call.1} parent=1 // pred_check_branch
      %31 = sbr.rel (0) target = $region21
    $region20: #{tpu_custom_call.1} parent=1 // pred_region
      _
    $region21: #{tpu_custom_call.1} parent=1 // pred_fallthru
      _
    // Predicated region
    $region22: #{tpu_custom_call.1} parent=1 // pred_check
      _
    $region23: #{tpu_custom_call.1} parent=1 // pred_check_branch
      %33 = sbr.rel (0) target = $region25
    $region24: #{tpu_custom_call.1} parent=1 // pred_region
      %34 = dma.done [#allocation4], 3840
    $region25: #{tpu_custom_call.1} parent=1 // pred_fallthru
      _
    %v35 = vld [vmem:[%s0] sm:$0xff]
    %v36 = vld [vmem:[%s0 + $0x8] sm:$0xff]
    %v37 = vld [vmem:[%s0 + $0x10] sm:$0xff]
    %v38 = vld [vmem:[%s0 + $0x18] sm:$0xff]
    %v39 = vld [vmem:[#allocation3] sm:$0xff]
    %v40 = vld [vmem:[#allocation3 + $0x8] sm:$0xff]
    %v41 = vld [vmem:[#allocation3 + $0x10] sm:$0xff]
    %v42 = vld [vmem:[#allocation3 + $0x18] sm:$0xff]
    %v43 = vld [vmem:[#allocation3 + $0x20] sm:$0xff]
    %v44 = vld [vmem:[#allocation3 + $0x28] sm:$0xff]
    %v45 = vld [vmem:[#allocation3 + $0x30] sm:$0xff]
    %v46 = vld [vmem:[#allocation3 + $0x38] sm:$0xff]
    %v47 = vld [vmem:[#allocation3 + $0x40] sm:$0xff]
    %v48 = vld [vmem:[#allocation3 + $0x48] sm:$0xff]
    %v49 = vld [vmem:[#allocation3 + $0x50] sm:$0xff]
    %v50 = vld [vmem:[#allocation3 + $0x58] sm:$0xff]
    %v51 = vld [vmem:[#allocation3 + $0x60] sm:$0xff]
    %v52 = vld [vmem:[#allocation3 + $0x68] sm:$0xff]
    %v53 = vld [vmem:[#allocation3 + $0x70] sm:$0xff]
    %v54 = vld [vmem:[#allocation3 + $0x78] sm:$0xff]
    %v55 = vld [vmem:[#allocation3 + $0x80] sm:$0xff]
    %v56 = vld [vmem:[#allocation3 + $0x88] sm:$0xff]
    %v57 = vld [vmem:[#allocation3 + $0x90] sm:$0xff]
    %v58 = vld [vmem:[#allocation3 + $0x98] sm:$0xff]
    %v59 = vld [vmem:[#allocation3 + $0xa0] sm:$0xff]
    %v60 = vld [vmem:[#allocation3 + $0xa8] sm:$0xff]
    %v61 = vld [vmem:[#allocation3 + $0xb0] sm:$0xff]
    %v62 = vld [vmem:[#allocation3 + $0xb8] sm:$0xff]
    %v63 = vld [vmem:[#allocation3 + $0xc0] sm:$0xff]
    %v64 = vld [vmem:[#allocation3 + $0xc8] sm:$0xff]
    %v65 = vld [vmem:[#allocation3 + $0xd0] sm:$0xff]
    %v66 = vld [vmem:[#allocation3 + $0xd8] sm:$0xff]
    %v67 = vld [vmem:[#allocation3 + $0xe0] sm:$0xff]
    %v68 = vld [vmem:[#allocation3 + $0xe8] sm:$0xff]
    %v69 = vld [vmem:[%s2] sm:$0x7]
    %v71 = vlaneseq
    %v72 = vshrl.u32 %v71, 7
    %v73 = vsub.s32 0, %v72
    %v74 = vrot.slane %v69, %v73
    %v75 = vlaneseq
    %v76 = vshrl.u32 %v75, 7
    %v77 = vsub.s32 1, %v76
    %v78 = vrot.slane %v69, %v77
    %v79 = vlaneseq
    %v80 = vshrl.u32 %v79, 7
    %v81 = vsub.s32 2, %v80
    %v82 = vrot.slane %v69, %v81
    %vm86 = vcmask 654336
    %v88 = vsel %vm86, %v35, 0
    %v91 = vsel %vm86, %v36, 0
    %v94 = vsel %vm86, %v37, 0
    %v97 = vsel %vm86, %v38, 0
    %99 = vmatprep.subr.mxu0 %v40
    %100 = vmatpush1.msra.mxu0 %v39
    %101 = vmatprep.subr.mxu0 %v43
    %102 = vmatpush1.msra.mxu0 %v42
    %103 = vmatprep.subr.mxu0 %v46
    %104 = vmatpush1.msra.mxu0 %v45
    %105 = vmatprep.subr.mxu0 %v49
    %106 = vmatpush1.msra.mxu0 %v48
    %107 = vmatprep.subr.mxu0 %v52
    %108 = vmatpush1.msra.mxu0 %v51
    %109 = vmatprep.subr.mxu0 %v55
    %110 = vmatpush1.msra.mxu0 %v54
    %111 = vmatprep.subr.mxu0 %v58
    %112 = vmatpush1.msra.mxu0 %v57
    %113 = vmatprep.subr.mxu0 %v61
    %114 = vmatpush1.msra.mxu0 %v60
    %115 = vmatprep.subr.mxu0 %v64
    %116 = vmatpush1.msra.mxu0 %v63
    %117 = vmatprep.subr.mxu0 %v67
    %118 = vmatpush1.msra.mxu0 %v66
    %119 = vmatprep.subr.mxu0 0.0
    %120 = vmatpush1.msra.mxu0 0.0
    %121 = vmatprep.subr.mxu0 0.0
    %122 = vmatpush1.msra.mxu0 0.0
    %123 = vmatprep.subr.mxu0 0.0
    %124 = vmatpush1.msra.mxu0 0.0
    %125 = vmatprep.subr.mxu0 0.0
    %126 = vmatpush1.msra.mxu0 0.0
    %127 = vmatprep.subr.mxu0 0.0
    %128 = vmatpush1.msra.mxu0 0.0
    %129 = vmatprep.subr.mxu0 0.0
    %130 = vmatpush1.msra.mxu0 0.0
    %131 = vmatprep.subr.mxu0 0.0
    %132 = vmatpush1.msra.mxu0 0.0
    %133 = vmatprep.subr.mxu0 0.0
    %134 = vmatpush1.msra.mxu0 0.0
    %135 = vmatprep.subr.mxu0 0.0
    %136 = vmatpush1.msra.mxu0 0.0
    %137 = vmatprep.subr.mxu0 0.0
    %138 = vmatpush1.msra.mxu0 0.0
    %139 = vmatprep.subr.mxu0 0.0
    %140 = vmatpush1.msra.mxu0 0.0
    %141 = vmatprep.subr.mxu0 0.0
    %142 = vmatpush1.msra.mxu0 0.0
    %143 = vmatprep.subr.mxu0 0.0
    %144 = vmatpush1.msra.mxu0 0.0
    %145 = vmatprep.subr.mxu0 0.0
    %146 = vmatpush1.msra.mxu0 0.0
    %147 = vmatprep.subr.mxu0 0.0
    %148 = vmatpush1.msra.mxu0 0.0
    %149 = vmatprep.subr.mxu0 0.0
    %150 = vmatpush1.msra.mxu0 0.0
    %151 = vmatprep.subr.mxu0 0.0
    %152 = vmatpush1.msra.mxu0 0.0
    %153 = vmatprep.subr.mxu0 0.0
    %154 = vmatpush1.msra.mxu0 0.0
    %155 = vmatprep.subr.mxu0 0.0
    %156 = vmatpush1.msra.mxu0 0.0
    %157 = vmatprep.subr.mxu0 0.0
    %158 = vmatpush1.msra.mxu0 0.0
    %159 = vmatprep.subr.mxu0 0.0
    %160 = vmatpush1.msra.mxu0 0.0
    %161 = vmatprep.subr.mxu0 0.0
    %162 = vmatpush1.msra.mxu0 0.0
    %163 = vmatprep.mubr.f32.mxu0 0.0
    %164 = vmatmul.mubr.f32.gmra.mrb[0].mxu0 %v88
    %v165 = vpop.f32.mrb[0].mxu0
    %v166 = vadd.f32 %v74, %v165
    %v167 = vpop.f32.mrb[0].mxu0
    %v168 = vadd.f32 %v78, %v167
    %169 = vmatprep.mubr.f32.mxu0 0.0
    %170 = vmatmul.mubr.f32.gmra.mrb[0].mxu0 %v91
    %v171 = vpop.f32.mrb[0].mxu0
    %v172 = vadd.f32 %v74, %v171
    %v173 = vpop.f32.mrb[0].mxu0
    %v174 = vadd.f32 %v78, %v173
    %175 = vmatprep.mubr.f32.mxu0 0.0
    %176 = vmatmul.mubr.f32.gmra.mrb[0].mxu0 %v94
    %v177 = vpop.f32.mrb[0].mxu0
    %v178 = vadd.f32 %v74, %v177
    %v179 = vpop.f32.mrb[0].mxu0
    %v180 = vadd.f32 %v78, %v179
    %181 = vmatprep.mubr.f32.mxu0 0.0
    %182 = vmatmul.mubr.f32.gmra.mrb[0].mxu0 %v97
    %v183 = vpop.f32.mrb[0].mxu0
    %v184 = vadd.f32 %v74, %v183
    %v185 = vpop.f32.mrb[0].mxu0
    %v186 = vadd.f32 %v78, %v185
    %187 = vdwg.mxu0
    %188 = vmatprep.subr.mxu0 0.0
    %189 = vmatpush1.msra.mxu0 %v41
    %190 = vmatprep.subr.mxu0 0.0
    %191 = vmatpush1.msra.mxu0 %v44
    %192 = vmatprep.subr.mxu0 0.0
    %193 = vmatpush1.msra.mxu0 %v47
    %194 = vmatprep.subr.mxu0 0.0
    %195 = vmatpush1.msra.mxu0 %v50
    %196 = vmatprep.subr.mxu0 0.0
    %197 = vmatpush1.msra.mxu0 %v53
    %198 = vmatprep.subr.mxu0 0.0
    %199 = vmatpush1.msra.mxu0 %v56
    %200 = vmatprep.subr.mxu0 0.0
    %201 = vmatpush1.msra.mxu0 %v59
    %202 = vmatprep.subr.mxu0 0.0
    %203 = vmatpush1.msra.mxu0 %v62
    %204 = vmatprep.subr.mxu0 0.0
    %205 = vmatpush1.msra.mxu0 %v65
    %206 = vmatprep.subr.mxu0 0.0
    %207 = vmatpush1.msra.mxu0 %v68
    %208 = vmatprep.subr.mxu0 0.0
    %209 = vmatpush1.msra.mxu0 0.0
    %210 = vmatprep.subr.mxu0 0.0
    %211 = vmatpush1.msra.mxu0 0.0
    %212 = vmatprep.subr.mxu0 0.0
    %213 = vmatpush1.msra.mxu0 0.0
    %214 = vmatprep.subr.mxu0 0.0
    %215 = vmatpush1.msra.mxu0 0.0
    %216 = vmatprep.subr.mxu0 0.0
    %217 = vmatpush1.msra.mxu0 0.0
    %218 = vmatprep.subr.mxu0 0.0
    %219 = vmatpush1.msra.mxu0 0.0
    %220 = vmatprep.subr.mxu0 0.0
    %221 = vmatpush1.msra.mxu0 0.0
    %222 = vmatprep.subr.mxu0 0.0
    %223 = vmatpush1.msra.mxu0 0.0
    %224 = vmatprep.subr.mxu0 0.0
    %225 = vmatpush1.msra.mxu0 0.0
    %226 = vmatprep.subr.mxu0 0.0
    %227 = vmatpush1.msra.mxu0 0.0
    %228 = vmatprep.subr.mxu0 0.0
    %229 = vmatpush1.msra.mxu0 0.0
    %230 = vmatprep.subr.mxu0 0.0
    %231 = vmatpush1.msra.mxu0 0.0
    %232 = vmatprep.subr.mxu0 0.0
    %233 = vmatpush1.msra.mxu0 0.0
    %234 = vmatprep.subr.mxu0 0.0
    %235 = vmatpush1.msra.mxu0 0.0
    %236 = vmatprep.subr.mxu0 0.0
    %237 = vmatpush1.msra.mxu0 0.0
    %238 = vmatprep.subr.mxu0 0.0
    %239 = vmatpush1.msra.mxu0 0.0
    %240 = vmatprep.subr.mxu0 0.0
    %241 = vmatpush1.msra.mxu0 0.0
    %242 = vmatprep.subr.mxu0 0.0
    %243 = vmatpush1.msra.mxu0 0.0
    %244 = vmatprep.subr.mxu0 0.0
    %245 = vmatpush1.msra.mxu0 0.0
    %246 = vmatprep.subr.mxu0 0.0
    %247 = vmatpush1.msra.mxu0 0.0
    %248 = vmatprep.subr.mxu0 0.0
    %249 = vmatpush1.msra.mxu0 0.0
    %250 = vmatprep.subr.mxu0 0.0
    %251 = vmatpush1.msra.mxu0 0.0
    %252 = vmatprep.mubr.f32.mxu0 0.0
    %253 = vmatmul.mubr.f32.gmra.mrb[0].mxu0 %v88
    %v254 = vpop.f32.mrb[0].mxu0
    %v255 = vadd.f32 %v82, %v254
    %v256 = vpop.f32.mrb[0].mxu0
    %257 = vmatprep.mubr.f32.mxu0 0.0
    %258 = vmatmul.mubr.f32.gmra.mrb[0].mxu0 %v91
    %v259 = vpop.f32.mrb[0].mxu0
    %v260 = vadd.f32 %v82, %v259
    %v261 = vpop.f32.mrb[0].mxu0
    %262 = vmatprep.mubr.f32.mxu0 0.0
    %263 = vmatmul.mubr.f32.gmra.mrb[0].mxu0 %v94
    %v264 = vpop.f32.mrb[0].mxu0
    %v265 = vadd.f32 %v82, %v264
    %v266 = vpop.f32.mrb[0].mxu0
    %267 = vmatprep.mubr.f32.mxu0 0.0
    %268 = vmatmul.mubr.f32.gmra.mrb[0].mxu0 %v97
    %v269 = vpop.f32.mrb[0].mxu0
    %v270 = vadd.f32 %v82, %v269
    %v271 = vpop.f32.mrb[0].mxu0
    %272 = vdwg.mxu0
    %277 = vrot.lane.b32.xlu0 %v166, 112
    %v278 = vpop.permute.xlu0 %277
    %279 = vrot.lane.b32.xlu0 %v172, 112
    %v280 = vpop.permute.xlu0 %279
    %281 = vrot.lane.b32.xlu0 %v178, 112
    %v282 = vpop.permute.xlu0 %281
    %283 = vrot.lane.b32.xlu0 %v184, 112
    %v284 = vpop.permute.xlu0 %283
    %285 = vrot.lane.b32.xlu0 %v166, 96
    %v286 = vpop.permute.xlu0 %285
    %287 = vrot.lane.b32.xlu0 %v172, 96
    %v288 = vpop.permute.xlu0 %287
    %289 = vrot.lane.b32.xlu0 %v178, 96
    %v290 = vpop.permute.xlu0 %289
    %291 = vrot.lane.b32.xlu0 %v184, 96
    %v292 = vpop.permute.xlu0 %291
    %293 = vrot.lane.b32.xlu0 %v166, 80
    %v294 = vpop.permute.xlu0 %293
    %295 = vrot.lane.b32.xlu0 %v172, 80
    %v296 = vpop.permute.xlu0 %295
    %297 = vrot.lane.b32.xlu0 %v178, 80
    %v298 = vpop.permute.xlu0 %297
    %299 = vrot.lane.b32.xlu0 %v184, 80
    %v300 = vpop.permute.xlu0 %299
    %301 = vrot.lane.b32.xlu0 %v166, 64
    %v302 = vpop.permute.xlu0 %301
    %303 = vrot.lane.b32.xlu0 %v172, 64
    %v304 = vpop.permute.xlu0 %303
    %305 = vrot.lane.b32.xlu0 %v178, 64
    %v306 = vpop.permute.xlu0 %305
    %307 = vrot.lane.b32.xlu0 %v184, 64
    %v308 = vpop.permute.xlu0 %307
    %309 = vrot.lane.b32.xlu0 %v166, 48
    %v310 = vpop.permute.xlu0 %309
    %311 = vrot.lane.b32.xlu0 %v172, 48
    %v312 = vpop.permute.xlu0 %311
    %313 = vrot.lane.b32.xlu0 %v178, 48
    %v314 = vpop.permute.xlu0 %313
    %315 = vrot.lane.b32.xlu0 %v184, 48
    %v316 = vpop.permute.xlu0 %315
    %317 = vrot.lane.b32.xlu0 %v166, 32
    %v318 = vpop.permute.xlu0 %317
    %319 = vrot.lane.b32.xlu0 %v172, 32
    %v320 = vpop.permute.xlu0 %319
    %321 = vrot.lane.b32.xlu0 %v178, 32
    %v322 = vpop.permute.xlu0 %321
    %323 = vrot.lane.b32.xlu0 %v184, 32
    %v324 = vpop.permute.xlu0 %323
    %325 = vrot.lane.b32.xlu0 %v166, 16
    %v326 = vpop.permute.xlu0 %325
    %327 = vrot.lane.b32.xlu0 %v172, 16
    %v328 = vpop.permute.xlu0 %327
    %329 = vrot.lane.b32.xlu0 %v178, 16
    %v330 = vpop.permute.xlu0 %329
    %331 = vrot.lane.b32.xlu0 %v184, 16
    %v332 = vpop.permute.xlu0 %331
    %337 = vrot.lane.b32.xlu0 %v168, 112
    %v338 = vpop.permute.xlu0 %337
    %339 = vrot.lane.b32.xlu0 %v174, 112
    %v340 = vpop.permute.xlu0 %339
    %341 = vrot.lane.b32.xlu0 %v180, 112
    %v342 = vpop.permute.xlu0 %341
    %343 = vrot.lane.b32.xlu0 %v186, 112
    %v344 = vpop.permute.xlu0 %343
    %345 = vrot.lane.b32.xlu0 %v168, 96
    %v346 = vpop.permute.xlu0 %345
    %347 = vrot.lane.b32.xlu0 %v174, 96
    %v348 = vpop.permute.xlu0 %347
    %349 = vrot.lane.b32.xlu0 %v180, 96
    %v350 = vpop.permute.xlu0 %349
    %351 = vrot.lane.b32.xlu0 %v186, 96
    %v352 = vpop.permute.xlu0 %351
    %353 = vrot.lane.b32.xlu0 %v168, 80
    %v354 = vpop.permute.xlu0 %353
    %355 = vrot.lane.b32.xlu0 %v174, 80
    %v356 = vpop.permute.xlu0 %355
    %357 = vrot.lane.b32.xlu0 %v180, 80
    %v358 = vpop.permute.xlu0 %357
    %359 = vrot.lane.b32.xlu0 %v186, 80
    %v360 = vpop.permute.xlu0 %359
    %361 = vrot.lane.b32.xlu0 %v168, 64
    %v362 = vpop.permute.xlu0 %361
    %363 = vrot.lane.b32.xlu0 %v174, 64
    %v364 = vpop.permute.xlu0 %363
    %365 = vrot.lane.b32.xlu0 %v180, 64
    %v366 = vpop.permute.xlu0 %365
    %367 = vrot.lane.b32.xlu0 %v186, 64
    %v368 = vpop.permute.xlu0 %367
    %369 = vrot.lane.b32.xlu0 %v168, 48
    %v370 = vpop.permute.xlu0 %369
    %371 = vrot.lane.b32.xlu0 %v174, 48
    %v372 = vpop.permute.xlu0 %371
    %373 = vrot.lane.b32.xlu0 %v180, 48
    %v374 = vpop.permute.xlu0 %373
    %375 = vrot.lane.b32.xlu0 %v186, 48
    %v376 = vpop.permute.xlu0 %375
    %377 = vrot.lane.b32.xlu0 %v168, 32
    %v378 = vpop.permute.xlu0 %377
    %379 = vrot.lane.b32.xlu0 %v174, 32
    %v380 = vpop.permute.xlu0 %379
    %381 = vrot.lane.b32.xlu0 %v180, 32
    %v382 = vpop.permute.xlu0 %381
    %383 = vrot.lane.b32.xlu0 %v186, 32
    %v384 = vpop.permute.xlu0 %383
    %385 = vrot.lane.b32.xlu0 %v168, 16
    %v386 = vpop.permute.xlu0 %385
    %387 = vrot.lane.b32.xlu0 %v174, 16
    %v388 = vpop.permute.xlu0 %387
    %389 = vrot.lane.b32.xlu0 %v180, 16
    %v390 = vpop.permute.xlu0 %389
    %391 = vrot.lane.b32.xlu0 %v186, 16
    %v392 = vpop.permute.xlu0 %391
    %397 = vrot.lane.b32.xlu0 %v255, 112
    %v398 = vpop.permute.xlu0 %397
    %399 = vrot.lane.b32.xlu0 %v260, 112
    %v400 = vpop.permute.xlu0 %399
    %401 = vrot.lane.b32.xlu0 %v265, 112
    %v402 = vpop.permute.xlu0 %401
    %403 = vrot.lane.b32.xlu0 %v270, 112
    %v404 = vpop.permute.xlu0 %403
    %409 = vrot.lane.b32.xlu0 %v255, 96
    %v410 = vpop.permute.xlu0 %409
    %411 = vrot.lane.b32.xlu0 %v260, 96
    %v412 = vpop.permute.xlu0 %411
    %413 = vrot.lane.b32.xlu0 %v265, 96
    %v414 = vpop.permute.xlu0 %413
    %415 = vrot.lane.b32.xlu0 %v270, 96
    %v416 = vpop.permute.xlu0 %415
    %421 = vrot.lane.b32.xlu0 %v255, 80
    %v422 = vpop.permute.xlu0 %421
    %423 = vrot.lane.b32.xlu0 %v260, 80
    %v424 = vpop.permute.xlu0 %423
    %425 = vrot.lane.b32.xlu0 %v265, 80
    %v426 = vpop.permute.xlu0 %425
    %427 = vrot.lane.b32.xlu0 %v270, 80
    %v428 = vpop.permute.xlu0 %427
    %433 = vrot.lane.b32.xlu0 %v255, 64
    %v434 = vpop.permute.xlu0 %433
    %435 = vrot.lane.b32.xlu0 %v260, 64
    %v436 = vpop.permute.xlu0 %435
    %437 = vrot.lane.b32.xlu0 %v265, 64
    %v438 = vpop.permute.xlu0 %437
    %439 = vrot.lane.b32.xlu0 %v270, 64
    %v440 = vpop.permute.xlu0 %439
    %445 = vrot.lane.b32.xlu0 %v255, 48
    %v446 = vpop.permute.xlu0 %445
    %447 = vrot.lane.b32.xlu0 %v260, 48
    %v448 = vpop.permute.xlu0 %447
    %449 = vrot.lane.b32.xlu0 %v265, 48
    %v450 = vpop.permute.xlu0 %449
    %451 = vrot.lane.b32.xlu0 %v270, 48
    %v452 = vpop.permute.xlu0 %451
    %457 = vrot.lane.b32.xlu0 %v255, 32
    %v458 = vpop.permute.xlu0 %457
    %459 = vrot.lane.b32.xlu0 %v260, 32
    %v460 = vpop.permute.xlu0 %459
    %461 = vrot.lane.b32.xlu0 %v265, 32
    %v462 = vpop.permute.xlu0 %461
    %463 = vrot.lane.b32.xlu0 %v270, 32
    %v464 = vpop.permute.xlu0 %463
    %469 = vrot.lane.b32.xlu0 %v255, 16
    %v470 = vpop.permute.xlu0 %469
    %471 = vrot.lane.b32.xlu0 %v260, 16
    %v472 = vpop.permute.xlu0 %471
    %473 = vrot.lane.b32.xlu0 %v265, 16
    %v474 = vpop.permute.xlu0 %473
    %475 = vrot.lane.b32.xlu0 %v270, 16
    %v476 = vpop.permute.xlu0 %475
    %vm481 = vcmask 130048
    %v482 = vsel %vm481, %v166, 0
    %v484 = vsel %vm481, %v168, 0
    %486 = vmatprep.subr.mxu0 0.0
    %487 = vmatpush1.xpose.msra.mxu0 %v484
    %488 = vmatprep.subr.mxu0 0.0
    %489 = vmatpush1.xpose.msra.mxu0 0.0
    %490 = vmatprep.subr.mxu0 0.0
    %491 = vmatpush1.xpose.msra.mxu0 0.0
    %492 = vmatprep.subr.mxu0 0.0
    %493 = vmatpush1.xpose.msra.mxu0 0.0
    %494 = vmatprep.subr.mxu0 0.0
    %495 = vmatpush1.xpose.msra.mxu0 0.0
    %496 = vmatprep.subr.mxu0 0.0
    %497 = vmatpush1.xpose.msra.mxu0 0.0
    %498 = vmatprep.subr.mxu0 0.0
    %499 = vmatpush1.xpose.msra.mxu0 0.0
    %500 = vmatprep.subr.mxu0 0.0
    %501 = vmatpush1.xpose.msra.mxu0 0.0
    %502 = vmatprep.subr.mxu0 0.0
    %503 = vmatpush1.xpose.msra.mxu0 0.0
    %504 = vmatprep.subr.mxu0 0.0
    %505 = vmatpush1.xpose.msra.mxu0 0.0
    %506 = vmatprep.subr.mxu0 0.0
    %507 = vmatpush1.xpose.msra.mxu0 0.0
    %508 = vmatprep.subr.mxu0 0.0
    %509 = vmatpush1.xpose.msra.mxu0 0.0
    %510 = vmatprep.subr.mxu0 0.0
    %511 = vmatpush1.xpose.msra.mxu0 0.0
    %512 = vmatprep.subr.mxu0 0.0
    %513 = vmatpush1.xpose.msra.mxu0 0.0
    %514 = vmatprep.subr.mxu0 0.0
    %515 = vmatpush1.xpose.msra.mxu0 0.0
    %516 = vmatprep.subr.mxu0 0.0
    %517 = vmatpush1.xpose.msra.mxu0 0.0
    %518 = vmatprep.subr.mxu0 0.0
    %519 = vmatpush1.xpose.msra.mxu0 0.0
    %520 = vmatprep.subr.mxu0 0.0
    %521 = vmatpush1.xpose.msra.mxu0 0.0
    %522 = vmatprep.subr.mxu0 0.0
    %523 = vmatpush1.xpose.msra.mxu0 0.0
    %524 = vmatprep.subr.mxu0 0.0
    %525 = vmatpush1.xpose.msra.mxu0 0.0
    %526 = vmatprep.subr.mxu0 0.0
    %527 = vmatpush1.xpose.msra.mxu0 0.0
    %528 = vmatprep.subr.mxu0 0.0
    %529 = vmatpush1.xpose.msra.mxu0 0.0
    %530 = vmatprep.subr.mxu0 0.0
    %531 = vmatpush1.xpose.msra.mxu0 0.0
    %532 = vmatprep.subr.mxu0 0.0
    %533 = vmatpush1.xpose.msra.mxu0 0.0
    %534 = vmatprep.subr.mxu0 0.0
    %535 = vmatpush1.xpose.msra.mxu0 0.0
    %536 = vmatprep.subr.mxu0 0.0
    %537 = vmatpush1.xpose.msra.mxu0 0.0
    %538 = vmatprep.subr.mxu0 0.0
    %539 = vmatpush1.xpose.msra.mxu0 0.0
    %540 = vmatprep.subr.mxu0 0.0
    %541 = vmatpush1.xpose.msra.mxu0 0.0
    %542 = vmatprep.subr.mxu0 0.0
    %543 = vmatpush1.xpose.msra.mxu0 0.0
    %544 = vmatprep.subr.mxu0 0.0
    %545 = vmatpush1.xpose.msra.mxu0 0.0
    %546 = vmatprep.subr.mxu0 0.0
    %547 = vmatpush1.xpose.msra.mxu0 0.0
    %548 = vmatprep.subr.mxu0 0.0
    %549 = vmatpush1.xpose.msra.mxu0 0.0
    %550 = vmatprep.mubr.f32.mxu0 0.0
    %551 = vmatmul.mubr.f32.gmra.mrb[0].mxu0 %v482
    %v552 = vpop.f32.mrb[0].mxu0
    %v553 = vadd.f32 0.0, %v552
    %v554 = vpop.f32.mrb[0].mxu0
    %555 = vdwg.mxu0
    %v556 = vsel %vm481, %v172, 0
    %v558 = vsel %vm481, %v174, 0
    %560 = vmatprep.subr.mxu0 0.0
    %561 = vmatpush1.xpose.msra.mxu0 %v558
    %562 = vmatprep.subr.mxu0 0.0
    %563 = vmatpush1.xpose.msra.mxu0 0.0
    %564 = vmatprep.subr.mxu0 0.0
    %565 = vmatpush1.xpose.msra.mxu0 0.0
    %566 = vmatprep.subr.mxu0 0.0
    %567 = vmatpush1.xpose.msra.mxu0 0.0
    %568 = vmatprep.subr.mxu0 0.0
    %569 = vmatpush1.xpose.msra.mxu0 0.0
    %570 = vmatprep.subr.mxu0 0.0
    %571 = vmatpush1.xpose.msra.mxu0 0.0
    %572 = vmatprep.subr.mxu0 0.0
    %573 = vmatpush1.xpose.msra.mxu0 0.0
    %574 = vmatprep.subr.mxu0 0.0
    %575 = vmatpush1.xpose.msra.mxu0 0.0
    %576 = vmatprep.subr.mxu0 0.0
    %577 = vmatpush1.xpose.msra.mxu0 0.0
    %578 = vmatprep.subr.mxu0 0.0
    %579 = vmatpush1.xpose.msra.mxu0 0.0
    %580 = vmatprep.subr.mxu0 0.0
    %581 = vmatpush1.xpose.msra.mxu0 0.0
    %582 = vmatprep.subr.mxu0 0.0
    %583 = vmatpush1.xpose.msra.mxu0 0.0
    %584 = vmatprep.subr.mxu0 0.0
    %585 = vmatpush1.xpose.msra.mxu0 0.0
    %586 = vmatprep.subr.mxu0 0.0
    %587 = vmatpush1.xpose.msra.mxu0 0.0
    %588 = vmatprep.subr.mxu0 0.0
    %589 = vmatpush1.xpose.msra.mxu0 0.0
    %590 = vmatprep.subr.mxu0 0.0
    %591 = vmatpush1.xpose.msra.mxu0 0.0
    %592 = vmatprep.subr.mxu0 0.0
    %593 = vmatpush1.xpose.msra.mxu0 0.0
    %594 = vmatprep.subr.mxu0 0.0
    %595 = vmatpush1.xpose.msra.mxu0 0.0
    %596 = vmatprep.subr.mxu0 0.0
    %597 = vmatpush1.xpose.msra.mxu0 0.0
    %598 = vmatprep.subr.mxu0 0.0
    %599 = vmatpush1.xpose.msra.mxu0 0.0
    %600 = vmatprep.subr.mxu0 0.0
    %601 = vmatpush1.xpose.msra.mxu0 0.0
    %602 = vmatprep.subr.mxu0 0.0
    %603 = vmatpush1.xpose.msra.mxu0 0.0
    %604 = vmatprep.subr.mxu0 0.0
    %605 = vmatpush1.xpose.msra.mxu0 0.0
    %606 = vmatprep.subr.mxu0 0.0
    %607 = vmatpush1.xpose.msra.mxu0 0.0
    %608 = vmatprep.subr.mxu0 0.0
    %609 = vmatpush1.xpose.msra.mxu0 0.0
    %610 = vmatprep.subr.mxu0 0.0
    %611 = vmatpush1.xpose.msra.mxu0 0.0
    %612 = vmatprep.subr.mxu0 0.0
    %613 = vmatpush1.xpose.msra.mxu0 0.0
    %614 = vmatprep.subr.mxu0 0.0
    %615 = vmatpush1.xpose.msra.mxu0 0.0
    %616 = vmatprep.subr.mxu0 0.0
    %617 = vmatpush1.xpose.msra.mxu0 0.0
    %618 = vmatprep.subr.mxu0 0.0
    %619 = vmatpush1.xpose.msra.mxu0 0.0
    %620 = vmatprep.subr.mxu0 0.0
    %621 = vmatpush1.xpose.msra.mxu0 0.0
    %622 = vmatprep.subr.mxu0 0.0
    %623 = vmatpush1.xpose.msra.mxu0 0.0
    %624 = vmatprep.mubr.f32.mxu0 0.0
    %625 = vmatmul.mubr.f32.gmra.mrb[0].mxu0 %v556
    %v626 = vpop.f32.mrb[0].mxu0
    %v627 = vadd.f32 0.0, %v626
    %v628 = vpop.f32.mrb[0].mxu0
    %629 = vdwg.mxu0
    %v630 = vsel %vm481, %v178, 0
    %v632 = vsel %vm481, %v180, 0
    %634 = vmatprep.subr.mxu0 0.0
    %635 = vmatpush1.xpose.msra.mxu0 %v632
    %636 = vmatprep.subr.mxu0 0.0
    %637 = vmatpush1.xpose.msra.mxu0 0.0
    %638 = vmatprep.subr.mxu0 0.0
    %639 = vmatpush1.xpose.msra.mxu0 0.0
    %640 = vmatprep.subr.mxu0 0.0
    %641 = vmatpush1.xpose.msra.mxu0 0.0
    %642 = vmatprep.subr.mxu0 0.0
    %643 = vmatpush1.xpose.msra.mxu0 0.0
    %644 = vmatprep.subr.mxu0 0.0
    %645 = vmatpush1.xpose.msra.mxu0 0.0
    %646 = vmatprep.subr.mxu0 0.0
    %647 = vmatpush1.xpose.msra.mxu0 0.0
    %648 = vmatprep.subr.mxu0 0.0
    %649 = vmatpush1.xpose.msra.mxu0 0.0
    %650 = vmatprep.subr.mxu0 0.0
    %651 = vmatpush1.xpose.msra.mxu0 0.0
    %652 = vmatprep.subr.mxu0 0.0
    %653 = vmatpush1.xpose.msra.mxu0 0.0
    %654 = vmatprep.subr.mxu0 0.0
    %655 = vmatpush1.xpose.msra.mxu0 0.0
    %656 = vmatprep.subr.mxu0 0.0
    %657 = vmatpush1.xpose.msra.mxu0 0.0
    %658 = vmatprep.subr.mxu0 0.0
    %659 = vmatpush1.xpose.msra.mxu0 0.0
    %660 = vmatprep.subr.mxu0 0.0
    %661 = vmatpush1.xpose.msra.mxu0 0.0
    %662 = vmatprep.subr.mxu0 0.0
    %663 = vmatpush1.xpose.msra.mxu0 0.0
    %664 = vmatprep.subr.mxu0 0.0
    %665 = vmatpush1.xpose.msra.mxu0 0.0
    %666 = vmatprep.subr.mxu0 0.0
    %667 = vmatpush1.xpose.msra.mxu0 0.0
    %668 = vmatprep.subr.mxu0 0.0
    %669 = vmatpush1.xpose.msra.mxu0 0.0
    %670 = vmatprep.subr.mxu0 0.0
    %671 = vmatpush1.xpose.msra.mxu0 0.0
    %672 = vmatprep.subr.mxu0 0.0
    %673 = vmatpush1.xpose.msra.mxu0 0.0
    %674 = vmatprep.subr.mxu0 0.0
    %675 = vmatpush1.xpose.msra.mxu0 0.0
    %676 = vmatprep.subr.mxu0 0.0
    %677 = vmatpush1.xpose.msra.mxu0 0.0
    %678 = vmatprep.subr.mxu0 0.0
    %679 = vmatpush1.xpose.msra.mxu0 0.0
    %680 = vmatprep.subr.mxu0 0.0
    %681 = vmatpush1.xpose.msra.mxu0 0.0
    %682 = vmatprep.subr.mxu0 0.0
    %683 = vmatpush1.xpose.msra.mxu0 0.0
    %684 = vmatprep.subr.mxu0 0.0
    %685 = vmatpush1.xpose.msra.mxu0 0.0
    %686 = vmatprep.subr.mxu0 0.0
    %687 = vmatpush1.xpose.msra.mxu0 0.0
    %688 = vmatprep.subr.mxu0 0.0
    %689 = vmatpush1.xpose.msra.mxu0 0.0
    %690 = vmatprep.subr.mxu0 0.0
    %691 = vmatpush1.xpose.msra.mxu0 0.0
    %692 = vmatprep.subr.mxu0 0.0
    %693 = vmatpush1.xpose.msra.mxu0 0.0
    %694 = vmatprep.subr.mxu0 0.0
    %695 = vmatpush1.xpose.msra.mxu0 0.0
    %696 = vmatprep.subr.mxu0 0.0
    %697 = vmatpush1.xpose.msra.mxu0 0.0
    %698 = vmatprep.mubr.f32.mxu0 0.0
    %699 = vmatmul.mubr.f32.gmra.mrb[0].mxu0 %v630
    %v700 = vpop.f32.mrb[0].mxu0
    %v701 = vadd.f32 0.0, %v700
    %v702 = vpop.f32.mrb[0].mxu0
    %703 = vdwg.mxu0
    %v704 = vsel %vm481, %v184, 0
    %v706 = vsel %vm481, %v186, 0
    %708 = vmatprep.subr.mxu0 0.0
    %709 = vmatpush1.xpose.msra.mxu0 %v706
    %710 = vmatprep.subr.mxu0 0.0
    %711 = vmatpush1.xpose.msra.mxu0 0.0
    %712 = vmatprep.subr.mxu0 0.0
    %713 = vmatpush1.xpose.msra.mxu0 0.0
    %714 = vmatprep.subr.mxu0 0.0
    %715 = vmatpush1.xpose.msra.mxu0 0.0
    %716 = vmatprep.subr.mxu0 0.0
    %717 = vmatpush1.xpose.msra.mxu0 0.0
    %718 = vmatprep.subr.mxu0 0.0
    %719 = vmatpush1.xpose.msra.mxu0 0.0
    %720 = vmatprep.subr.mxu0 0.0
    %721 = vmatpush1.xpose.msra.mxu0 0.0
    %722 = vmatprep.subr.mxu0 0.0
    %723 = vmatpush1.xpose.msra.mxu0 0.0
    %724 = vmatprep.subr.mxu0 0.0
    %725 = vmatpush1.xpose.msra.mxu0 0.0
    %726 = vmatprep.subr.mxu0 0.0
    %727 = vmatpush1.xpose.msra.mxu0 0.0
    %728 = vmatprep.subr.mxu0 0.0
    %729 = vmatpush1.xpose.msra.mxu0 0.0
    %730 = vmatprep.subr.mxu0 0.0
    %731 = vmatpush1.xpose.msra.mxu0 0.0
    %732 = vmatprep.subr.mxu0 0.0
    %733 = vmatpush1.xpose.msra.mxu0 0.0
    %734 = vmatprep.subr.mxu0 0.0
    %735 = vmatpush1.xpose.msra.mxu0 0.0
    %736 = vmatprep.subr.mxu0 0.0
    %737 = vmatpush1.xpose.msra.mxu0 0.0
    %738 = vmatprep.subr.mxu0 0.0
    %739 = vmatpush1.xpose.msra.mxu0 0.0
    %740 = vmatprep.subr.mxu0 0.0
    %741 = vmatpush1.xpose.msra.mxu0 0.0
    %742 = vmatprep.subr.mxu0 0.0
    %743 = vmatpush1.xpose.msra.mxu0 0.0
    %744 = vmatprep.subr.mxu0 0.0
    %745 = vmatpush1.xpose.msra.mxu0 0.0
    %746 = vmatprep.subr.mxu0 0.0
    %747 = vmatpush1.xpose.msra.mxu0 0.0
    %748 = vmatprep.subr.mxu0 0.0
    %749 = vmatpush1.xpose.msra.mxu0 0.0
    %750 = vmatprep.subr.mxu0 0.0
    %751 = vmatpush1.xpose.msra.mxu0 0.0
    %752 = vmatprep.subr.mxu0 0.0
    %753 = vmatpush1.xpose.msra.mxu0 0.0
    %754 = vmatprep.subr.mxu0 0.0
    %755 = vmatpush1.xpose.msra.mxu0 0.0
    %756 = vmatprep.subr.mxu0 0.0
    %757 = vmatpush1.xpose.msra.mxu0 0.0
    %758 = vmatprep.subr.mxu0 0.0
    %759 = vmatpush1.xpose.msra.mxu0 0.0
    %760 = vmatprep.subr.mxu0 0.0
    %761 = vmatpush1.xpose.msra.mxu0 0.0
    %762 = vmatprep.subr.mxu0 0.0
    %763 = vmatpush1.xpose.msra.mxu0 0.0
    %764 = vmatprep.subr.mxu0 0.0
    %765 = vmatpush1.xpose.msra.mxu0 0.0
    %766 = vmatprep.subr.mxu0 0.0
    %767 = vmatpush1.xpose.msra.mxu0 0.0
    %768 = vmatprep.subr.mxu0 0.0
    %769 = vmatpush1.xpose.msra.mxu0 0.0
    %770 = vmatprep.subr.mxu0 0.0
    %771 = vmatpush1.xpose.msra.mxu0 0.0
    %772 = vmatprep.mubr.f32.mxu0 0.0
    %773 = vmatmul.mubr.f32.gmra.mrb[0].mxu0 %v704
    %v774 = vpop.f32.mrb[0].mxu0
    %v775 = vadd.f32 0.0, %v774
    %v776 = vpop.f32.mrb[0].mxu0
    %777 = vdwg.mxu0
    %v778 = vsel %vm481, %v278, 0
    %v780 = vsel %vm481, %v338, 0
    %782 = vmatprep.subr.mxu0 0.0
    %783 = vmatpush1.xpose.msra.mxu0 %v780
    %784 = vmatprep.subr.mxu0 0.0
    %785 = vmatpush1.xpose.msra.mxu0 0.0
    %786 = vmatprep.subr.mxu0 0.0
    %787 = vmatpush1.xpose.msra.mxu0 0.0
    %788 = vmatprep.subr.mxu0 0.0
    %789 = vmatpush1.xpose.msra.mxu0 0.0
    %790 = vmatprep.subr.mxu0 0.0
    %791 = vmatpush1.xpose.msra.mxu0 0.0
    %792 = vmatprep.subr.mxu0 0.0
    %793 = vmatpush1.xpose.msra.mxu0 0.0
    %794 = vmatprep.subr.mxu0 0.0
    %795 = vmatpush1.xpose.msra.mxu0 0.0
    %796 = vmatprep.subr.mxu0 0.0
    %797 = vmatpush1.xpose.msra.mxu0 0.0
    %798 = vmatprep.subr.mxu0 0.0
    %799 = vmatpush1.xpose.msra.mxu0 0.0
    %800 = vmatprep.subr.mxu0 0.0
    %801 = vmatpush1.xpose.msra.mxu0 0.0
    %802 = vmatprep.subr.mxu0 0.0
    %803 = vmatpush1.xpose.msra.mxu0 0.0
    %804 = vmatprep.subr.mxu0 0.0
    %805 = vmatpush1.xpose.msra.mxu0 0.0
    %806 = vmatprep.subr.mxu0 0.0
    %807 = vmatpush1.xpose.msra.mxu0 0.0
    %808 = vmatprep.subr.mxu0 0.0
    %809 = vmatpush1.xpose.msra.mxu0 0.0
    %810 = vmatprep.subr.mxu0 0.0
    %811 = vmatpush1.xpose.msra.mxu0 0.0
    %812 = vmatprep.subr.mxu0 0.0
    %813 = vmatpush1.xpose.msra.mxu0 0.0
    %814 = vmatprep.subr.mxu0 0.0
    %815 = vmatpush1.xpose.msra.mxu0 0.0
    %816 = vmatprep.subr.mxu0 0.0
    %817 = vmatpush1.xpose.msra.mxu0 0.0
    %818 = vmatprep.subr.mxu0 0.0
    %819 = vmatpush1.xpose.msra.mxu0 0.0
    %820 = vmatprep.subr.mxu0 0.0
    %821 = vmatpush1.xpose.msra.mxu0 0.0
    %822 = vmatprep.subr.mxu0 0.0
    %823 = vmatpush1.xpose.msra.mxu0 0.0
    %824 = vmatprep.subr.mxu0 0.0
    %825 = vmatpush1.xpose.msra.mxu0 0.0
    %826 = vmatprep.subr.mxu0 0.0
    %827 = vmatpush1.xpose.msra.mxu0 0.0
    %828 = vmatprep.subr.mxu0 0.0
    %829 = vmatpush1.xpose.msra.mxu0 0.0
    %830 = vmatprep.subr.mxu0 0.0
    %831 = vmatpush1.xpose.msra.mxu0 0.0
    %832 = vmatprep.subr.mxu0 0.0
    %833 = vmatpush1.xpose.msra.mxu0 0.0
    %834 = vmatprep.subr.mxu0 0.0
    %835 = vmatpush1.xpose.msra.mxu0 0.0
    %836 = vmatprep.subr.mxu0 0.0
    %837 = vmatpush1.xpose.msra.mxu0 0.0
    %838 = vmatprep.subr.mxu0 0.0
    %839 = vmatpush1.xpose.msra.mxu0 0.0
    %840 = vmatprep.subr.mxu0 0.0
    %841 = vmatpush1.xpose.msra.mxu0 0.0
    %842 = vmatprep.subr.mxu0 0.0
    %843 = vmatpush1.xpose.msra.mxu0 0.0
    %844 = vmatprep.subr.mxu0 0.0
    %845 = vmatpush1.xpose.msra.mxu0 0.0
    %846 = vmatprep.mubr.f32.mxu0 0.0
    %847 = vmatmul.mubr.f32.gmra.mrb[0].mxu0 %v778
    %v848 = vpop.f32.mrb[0].mxu0
    %v849 = vadd.f32 0.0, %v848
    %v850 = vpop.f32.mrb[0].mxu0
    %851 = vdwg.mxu0
    %v852 = vsel %vm481, %v280, 0
    %v854 = vsel %vm481, %v340, 0
    %856 = vmatprep.subr.mxu0 0.0
    %857 = vmatpush1.xpose.msra.mxu0 %v854
    %858 = vmatprep.subr.mxu0 0.0
    %859 = vmatpush1.xpose.msra.mxu0 0.0
    %860 = vmatprep.subr.mxu0 0.0
    %861 = vmatpush1.xpose.msra.mxu0 0.0
    %862 = vmatprep.subr.mxu0 0.0
    %863 = vmatpush1.xpose.msra.mxu0 0.0
    %864 = vmatprep.subr.mxu0 0.0
    %865 = vmatpush1.xpose.msra.mxu0 0.0
    %866 = vmatprep.subr.mxu0 0.0
    %867 = vmatpush1.xpose.msra.mxu0 0.0
    %868 = vmatprep.subr.mxu0 0.0
    %869 = vmatpush1.xpose.msra.mxu0 0.0
    %870 = vmatprep.subr.mxu0 0.0
    %871 = vmatpush1.xpose.msra.mxu0 0.0
    %872 = vmatprep.subr.mxu0 0.0
    %873 = vmatpush1.xpose.msra.mxu0 0.0
    %874 = vmatprep.subr.mxu0 0.0
    %875 = vmatpush1.xpose.msra.mxu0 0.0
    %876 = vmatprep.subr.mxu0 0.0
    %877 = vmatpush1.xpose.msra.mxu0 0.0
    %878 = vmatprep.subr.mxu0 0.0
    %879 = vmatpush1.xpose.msra.mxu0 0.0
    %880 = vmatprep.subr.mxu0 0.0
    %881 = vmatpush1.xpose.msra.mxu0 0.0
    %882 = vmatprep.subr.mxu0 0.0
    %883 = vmatpush1.xpose.msra.mxu0 0.0
    %884 = vmatprep.subr.mxu0 0.0
    %885 = vmatpush1.xpose.msra.mxu0 0.0
    %886 = vmatprep.subr.mxu0 0.0
    %887 = vmatpush1.xpose.msra.mxu0 0.0
    %888 = vmatprep.subr.mxu0 0.0
    %889 = vmatpush1.xpose.msra.mxu0 0.0
    %890 = vmatprep.subr.mxu0 0.0
    %891 = vmatpush1.xpose.msra.mxu0 0.0
    %892 = vmatprep.subr.mxu0 0.0
    %893 = vmatpush1.xpose.msra.mxu0 0.0
    %894 = vmatprep.subr.mxu0 0.0
    %895 = vmatpush1.xpose.msra.mxu0 0.0
    %896 = vmatprep.subr.mxu0 0.0
    %897 = vmatpush1.xpose.msra.mxu0 0.0
    %898 = vmatprep.subr.mxu0 0.0
    %899 = vmatpush1.xpose.msra.mxu0 0.0
    %900 = vmatprep.subr.mxu0 0.0
    %901 = vmatpush1.xpose.msra.mxu0 0.0
    %902 = vmatprep.subr.mxu0 0.0
    %903 = vmatpush1.xpose.msra.mxu0 0.0
    %904 = vmatprep.subr.mxu0 0.0
    %905 = vmatpush1.xpose.msra.mxu0 0.0
    %906 = vmatprep.subr.mxu0 0.0
    %907 = vmatpush1.xpose.msra.mxu0 0.0
    %908 = vmatprep.subr.mxu0 0.0
    %909 = vmatpush1.xpose.msra.mxu0 0.0
    %910 = vmatprep.subr.mxu0 0.0
    %911 = vmatpush1.xpose.msra.mxu0 0.0
    %912 = vmatprep.subr.mxu0 0.0
    %913 = vmatpush1.xpose.msra.mxu0 0.0
    %914 = vmatprep.subr.mxu0 0.0
    %915 = vmatpush1.xpose.msra.mxu0 0.0
    %916 = vmatprep.subr.mxu0 0.0
    %917 = vmatpush1.xpose.msra.mxu0 0.0
    %918 = vmatprep.subr.mxu0 0.0
    %919 = vmatpush1.xpose.msra.mxu0 0.0
    %920 = vmatprep.mubr.f32.mxu0 0.0
    %921 = vmatmul.mubr.f32.gmra.mrb[0].mxu0 %v852
    %v922 = vpop.f32.mrb[0].mxu0
    %v923 = vadd.f32 0.0, %v922
    %v924 = vpop.f32.mrb[0].mxu0
    %925 = vdwg.mxu0
    %v926 = vsel %vm481, %v282, 0
    %v928 = vsel %vm481, %v342, 0
    %930 = vmatprep.subr.mxu0 0.0
    %931 = vmatpush1.xpose.msra.mxu0 %v928
    %932 = vmatprep.subr.mxu0 0.0
    %933 = vmatpush1.xpose.msra.mxu0 0.0
    %934 = vmatprep.subr.mxu0 0.0
    %935 = vmatpush1.xpose.msra.mxu0 0.0
    %936 = vmatprep.subr.mxu0 0.0
    %937 = vmatpush1.xpose.msra.mxu0 0.0
    %938 = vmatprep.subr.mxu0 0.0
    %939 = vmatpush1.xpose.msra.mxu0 0.0
    %940 = vmatprep.subr.mxu0 0.0
    %941 = vmatpush1.xpose.msra.mxu0 0.0
    %942 = vmatprep.subr.mxu0 0.0
    %943 = vmatpush1.xpose.msra.mxu0 0.0
    %944 = vmatprep.subr.mxu0 0.0
    %945 = vmatpush1.xpose.msra.mxu0 0.0
    %946 = vmatprep.subr.mxu0 0.0
    %947 = vmatpush1.xpose.msra.mxu0 0.0
    %948 = vmatprep.subr.mxu0 0.0
    %949 = vmatpush1.xpose.msra.mxu0 0.0
    %950 = vmatprep.subr.mxu0 0.0
    %951 = vmatpush1.xpose.msra.mxu0 0.0
    %952 = vmatprep.subr.mxu0 0.0
    %953 = vmatpush1.xpose.msra.mxu0 0.0
    %954 = vmatprep.subr.mxu0 0.0
    %955 = vmatpush1.xpose.msra.mxu0 0.0
    %956 = vmatprep.subr.mxu0 0.0
    %957 = vmatpush1.xpose.msra.mxu0 0.0
    %958 = vmatprep.subr.mxu0 0.0
    %959 = vmatpush1.xpose.msra.mxu0 0.0
    %960 = vmatprep.subr.mxu0 0.0
    %961 = vmatpush1.xpose.msra.mxu0 0.0
    %962 = vmatprep.subr.mxu0 0.0
    %963 = vmatpush1.xpose.msra.mxu0 0.0
    %964 = vmatprep.subr.mxu0 0.0
    %965 = vmatpush1.xpose.msra.mxu0 0.0
    %966 = vmatprep.subr.mxu0 0.0
    %967 = vmatpush1.xpose.msra.mxu0 0.0
    %968 = vmatprep.subr.mxu0 0.0
    %969 = vmatpush1.xpose.msra.mxu0 0.0
    %970 = vmatprep.subr.mxu0 0.0
    %971 = vmatpush1.xpose.msra.mxu0 0.0
    %972 = vmatprep.subr.mxu0 0.0
    %973 = vmatpush1.xpose.msra.mxu0 0.0
    %974 = vmatprep.subr.mxu0 0.0
    %975 = vmatpush1.xpose.msra.mxu0 0.0
    %976 = vmatprep.subr.mxu0 0.0
    %977 = vmatpush1.xpose.msra.mxu0 0.0
    %978 = vmatprep.subr.mxu0 0.0
    %979 = vmatpush1.xpose.msra.mxu0 0.0
    %980 = vmatprep.subr.mxu0 0.0
    %981 = vmatpush1.xpose.msra.mxu0 0.0
    %982 = vmatprep.subr.mxu0 0.0
    %983 = vmatpush1.xpose.msra.mxu0 0.0
    %984 = vmatprep.subr.mxu0 0.0
    %985 = vmatpush1.xpose.msra.mxu0 0.0
    %986 = vmatprep.subr.mxu0 0.0
    %987 = vmatpush1.xpose.msra.mxu0 0.0
    %988 = vmatprep.subr.mxu0 0.0
    %989 = vmatpush1.xpose.msra.mxu0 0.0
    %990 = vmatprep.subr.mxu0 0.0
    %991 = vmatpush1.xpose.msra.mxu0 0.0
    %992 = vmatprep.subr.mxu0 0.0
    %993 = vmatpush1.xpose.msra.mxu0 0.0
    %994 = vmatprep.mubr.f32.mxu0 0.0
    %995 = vmatmul.mubr.f32.gmra.mrb[0].mxu0 %v926
    %v996 = vpop.f32.mrb[0].mxu0
    %v997 = vadd.f32 0.0, %v996
    %v998 = vpop.f32.mrb[0].mxu0
    %999 = vdwg.mxu0
    %v1000 = vsel %vm481, %v284, 0
    %v1002 = vsel %vm481, %v344, 0
    %1004 = vmatprep.subr.mxu0 0.0
    %1005 = vmatpush1.xpose.msra.mxu0 %v1002
    %1006 = vmatprep.subr.mxu0 0.0
    %1007 = vmatpush1.xpose.msra.mxu0 0.0
    %1008 = vmatprep.subr.mxu0 0.0
    %1009 = vmatpush1.xpose.msra.mxu0 0.0
    %1010 = vmatprep.subr.mxu0 0.0
    %1011 = vmatpush1.xpose.msra.mxu0 0.0
    %1012 = vmatprep.subr.mxu0 0.0
    %1013 = vmatpush1.xpose.msra.mxu0 0.0
    %1014 = vmatprep.subr.mxu0 0.0
    %1015 = vmatpush1.xpose.msra.mxu0 0.0
    %1016 = vmatprep.subr.mxu0 0.0
    %1017 = vmatpush1.xpose.msra.mxu0 0.0
    %1018 = vmatprep.subr.mxu0 0.0
    %1019 = vmatpush1.xpose.msra.mxu0 0.0
    %1020 = vmatprep.subr.mxu0 0.0
    %1021 = vmatpush1.xpose.msra.mxu0 0.0
    %1022 = vmatprep.subr.mxu0 0.0
    %1023 = vmatpush1.xpose.msra.mxu0 0.0
    %1024 = vmatprep.subr.mxu0 0.0
    %1025 = vmatpush1.xpose.msra.mxu0 0.0
    %1026 = vmatprep.subr.mxu0 0.0
    %1027 = vmatpush1.xpose.msra.mxu0 0.0
    %1028 = vmatprep.subr.mxu0 0.0
    %1029 = vmatpush1.xpose.msra.mxu0 0.0
    %1030 = vmatprep.subr.mxu0 0.0
    %1031 = vmatpush1.xpose.msra.mxu0 0.0
    %1032 = vmatprep.subr.mxu0 0.0
    %1033 = vmatpush1.xpose.msra.mxu0 0.0
    %1034 = vmatprep.subr.mxu0 0.0
    %1035 = vmatpush1.xpose.msra.mxu0 0.0
    %1036 = vmatprep.subr.mxu0 0.0
    %1037 = vmatpush1.xpose.msra.mxu0 0.0
    %1038 = vmatprep.subr.mxu0 0.0
    %1039 = vmatpush1.xpose.msra.mxu0 0.0
    %1040 = vmatprep.subr.mxu0 0.0
    %1041 = vmatpush1.xpose.msra.mxu0 0.0
    %1042 = vmatprep.subr.mxu0 0.0
    %1043 = vmatpush1.xpose.msra.mxu0 0.0
    %1044 = vmatprep.subr.mxu0 0.0
    %1045 = vmatpush1.xpose.msra.mxu0 0.0
    %1046 = vmatprep.subr.mxu0 0.0
    %1047 = vmatpush1.xpose.msra.mxu0 0.0
    %1048 = vmatprep.subr.mxu0 0.0
    %1049 = vmatpush1.xpose.msra.mxu0 0.0
    %1050 = vmatprep.subr.mxu0 0.0
    %1051 = vmatpush1.xpose.msra.mxu0 0.0
    %1052 = vmatprep.subr.mxu0 0.0
    %1053 = vmatpush1.xpose.msra.mxu0 0.0
    %1054 = vmatprep.subr.mxu0 0.0
    %1055 = vmatpush1.xpose.msra.mxu0 0.0
    %1056 = vmatprep.subr.mxu0 0.0
    %1057 = vmatpush1.xpose.msra.mxu0 0.0
    %1058 = vmatprep.subr.mxu0 0.0
    %1059 = vmatpush1.xpose.msra.mxu0 0.0
    %1060 = vmatprep.subr.mxu0 0.0
    %1061 = vmatpush1.xpose.msra.mxu0 0.0
    %1062 = vmatprep.subr.mxu0 0.0
    %1063 = vmatpush1.xpose.msra.mxu0 0.0
    %1064 = vmatprep.subr.mxu0 0.0
    %1065 = vmatpush1.xpose.msra.mxu0 0.0
    %1066 = vmatprep.subr.mxu0 0.0
    %1067 = vmatpush1.xpose.msra.mxu0 0.0
    %1068 = vmatprep.mubr.f32.mxu0 0.0
    %1069 = vmatmul.mubr.f32.gmra.mrb[0].mxu0 %v1000
    %v1070 = vpop.f32.mrb[0].mxu0
    %v1071 = vadd.f32 0.0, %v1070
    %v1072 = vpop.f32.mrb[0].mxu0
    %1073 = vdwg.mxu0
    %v1074 = vsel %vm481, %v286, 0
    %v1076 = vsel %vm481, %v346, 0
    %1078 = vmatprep.subr.mxu0 0.0
    %1079 = vmatpush1.xpose.msra.mxu0 %v1076
    %1080 = vmatprep.subr.mxu0 0.0
    %1081 = vmatpush1.xpose.msra.mxu0 0.0
    %1082 = vmatprep.subr.mxu0 0.0
    %1083 = vmatpush1.xpose.msra.mxu0 0.0
    %1084 = vmatprep.subr.mxu0 0.0
    %1085 = vmatpush1.xpose.msra.mxu0 0.0
    %1086 = vmatprep.subr.mxu0 0.0
    %1087 = vmatpush1.xpose.msra.mxu0 0.0
    %1088 = vmatprep.subr.mxu0 0.0
    %1089 = vmatpush1.xpose.msra.mxu0 0.0
    %1090 = vmatprep.subr.mxu0 0.0
    %1091 = vmatpush1.xpose.msra.mxu0 0.0
    %1092 = vmatprep.subr.mxu0 0.0
    %1093 = vmatpush1.xpose.msra.mxu0 0.0
    %1094 = vmatprep.subr.mxu0 0.0
    %1095 = vmatpush1.xpose.msra.mxu0 0.0
    %1096 = vmatprep.subr.mxu0 0.0
    %1097 = vmatpush1.xpose.msra.mxu0 0.0
    %1098 = vmatprep.subr.mxu0 0.0
    %1099 = vmatpush1.xpose.msra.mxu0 0.0
    %1100 = vmatprep.subr.mxu0 0.0
    %1101 = vmatpush1.xpose.msra.mxu0 0.0
    %1102 = vmatprep.subr.mxu0 0.0
    %1103 = vmatpush1.xpose.msra.mxu0 0.0
    %1104 = vmatprep.subr.mxu0 0.0
    %1105 = vmatpush1.xpose.msra.mxu0 0.0
    %1106 = vmatprep.subr.mxu0 0.0
    %1107 = vmatpush1.xpose.msra.mxu0 0.0
    %1108 = vmatprep.subr.mxu0 0.0
    %1109 = vmatpush1.xpose.msra.mxu0 0.0
    %1110 = vmatprep.subr.mxu0 0.0
    %1111 = vmatpush1.xpose.msra.mxu0 0.0
    %1112 = vmatprep.subr.mxu0 0.0
    %1113 = vmatpush1.xpose.msra.mxu0 0.0
    %1114 = vmatprep.subr.mxu0 0.0
    %1115 = vmatpush1.xpose.msra.mxu0 0.0
    %1116 = vmatprep.subr.mxu0 0.0
    %1117 = vmatpush1.xpose.msra.mxu0 0.0
    %1118 = vmatprep.subr.mxu0 0.0
    %1119 = vmatpush1.xpose.msra.mxu0 0.0
    %1120 = vmatprep.subr.mxu0 0.0
    %1121 = vmatpush1.xpose.msra.mxu0 0.0
    %1122 = vmatprep.subr.mxu0 0.0
    %1123 = vmatpush1.xpose.msra.mxu0 0.0
    %1124 = vmatprep.subr.mxu0 0.0
    %1125 = vmatpush1.xpose.msra.mxu0 0.0
    %1126 = vmatprep.subr.mxu0 0.0
    %1127 = vmatpush1.xpose.msra.mxu0 0.0
    %1128 = vmatprep.subr.mxu0 0.0
    %1129 = vmatpush1.xpose.msra.mxu0 0.0
    %1130 = vmatprep.subr.mxu0 0.0
    %1131 = vmatpush1.xpose.msra.mxu0 0.0
    %1132 = vmatprep.subr.mxu0 0.0
    %1133 = vmatpush1.xpose.msra.mxu0 0.0
    %1134 = vmatprep.subr.mxu0 0.0
    %1135 = vmatpush1.xpose.msra.mxu0 0.0
    %1136 = vmatprep.subr.mxu0 0.0
    %1137 = vmatpush1.xpose.msra.mxu0 0.0
    %1138 = vmatprep.subr.mxu0 0.0
    %1139 = vmatpush1.xpose.msra.mxu0 0.0
    %1140 = vmatprep.subr.mxu0 0.0
    %1141 = vmatpush1.xpose.msra.mxu0 0.0
    %1142 = vmatprep.mubr.f32.mxu0 0.0
    %1143 = vmatmul.mubr.f32.gmra.mrb[0].mxu0 %v1074
    %v1144 = vpop.f32.mrb[0].mxu0
    %v1145 = vadd.f32 0.0, %v1144
    %v1146 = vpop.f32.mrb[0].mxu0
    %1147 = vdwg.mxu0
    %v1148 = vsel %vm481, %v288, 0
    %v1150 = vsel %vm481, %v348, 0
    %1152 = vmatprep.subr.mxu0 0.0
    %1153 = vmatpush1.xpose.msra.mxu0 %v1150
    %1154 = vmatprep.subr.mxu0 0.0
    %1155 = vmatpush1.xpose.msra.mxu0 0.0
    %1156 = vmatprep.subr.mxu0 0.0
    %1157 = vmatpush1.xpose.msra.mxu0 0.0
    %1158 = vmatprep.subr.mxu0 0.0
    %1159 = vmatpush1.xpose.msra.mxu0 0.0
    %1160 = vmatprep.subr.mxu0 0.0
    %1161 = vmatpush1.xpose.msra.mxu0 0.0
    %1162 = vmatprep.subr.mxu0 0.0
    %1163 = vmatpush1.xpose.msra.mxu0 0.0
    %1164 = vmatprep.subr.mxu0 0.0
    %1165 = vmatpush1.xpose.msra.mxu0 0.0
    %1166 = vmatprep.subr.mxu0 0.0
    %1167 = vmatpush1.xpose.msra.mxu0 0.0
    %1168 = vmatprep.subr.mxu0 0.0
    %1169 = vmatpush1.xpose.msra.mxu0 0.0
    %1170 = vmatprep.subr.mxu0 0.0
    %1171 = vmatpush1.xpose.msra.mxu0 0.0
    %1172 = vmatprep.subr.mxu0 0.0
    %1173 = vmatpush1.xpose.msra.mxu0 0.0
    %1174 = vmatprep.subr.mxu0 0.0
    %1175 = vmatpush1.xpose.msra.mxu0 0.0
    %1176 = vmatprep.subr.mxu0 0.0
    %1177 = vmatpush1.xpose.msra.mxu0 0.0
    %1178 = vmatprep.subr.mxu0 0.0
    %1179 = vmatpush1.xpose.msra.mxu0 0.0
    %1180 = vmatprep.subr.mxu0 0.0
    %1181 = vmatpush1.xpose.msra.mxu0 0.0
    %1182 = vmatprep.subr.mxu0 0.0
    %1183 = vmatpush1.xpose.msra.mxu0 0.0
    %1184 = vmatprep.subr.mxu0 0.0
    %1185 = vmatpush1.xpose.msra.mxu0 0.0
    %1186 = vmatprep.subr.mxu0 0.0
    %1187 = vmatpush1.xpose.msra.mxu0 0.0
    %1188 = vmatprep.subr.mxu0 0.0
    %1189 = vmatpush1.xpose.msra.mxu0 0.0
    %1190 = vmatprep.subr.mxu0 0.0
    %1191 = vmatpush1.xpose.msra.mxu0 0.0
    %1192 = vmatprep.subr.mxu0 0.0
    %1193 = vmatpush1.xpose.msra.mxu0 0.0
    %1194 = vmatprep.subr.mxu0 0.0
    %1195 = vmatpush1.xpose.msra.mxu0 0.0
    %1196 = vmatprep.subr.mxu0 0.0
    %1197 = vmatpush1.xpose.msra.mxu0 0.0
    %1198 = vmatprep.subr.mxu0 0.0
    %1199 = vmatpush1.xpose.msra.mxu0 0.0
    %1200 = vmatprep.subr.mxu0 0.0
    %1201 = vmatpush1.xpose.msra.mxu0 0.0
    %1202 = vmatprep.subr.mxu0 0.0
    %1203 = vmatpush1.xpose.msra.mxu0 0.0
    %1204 = vmatprep.subr.mxu0 0.0
    %1205 = vmatpush1.xpose.msra.mxu0 0.0
    %1206 = vmatprep.subr.mxu0 0.0
    %1207 = vmatpush1.xpose.msra.mxu0 0.0
    %1208 = vmatprep.subr.mxu0 0.0
    %1209 = vmatpush1.xpose.msra.mxu0 0.0
    %1210 = vmatprep.subr.mxu0 0.0
    %1211 = vmatpush1.xpose.msra.mxu0 0.0
    %1212 = vmatprep.subr.mxu0 0.0
    %1213 = vmatpush1.xpose.msra.mxu0 0.0
    %1214 = vmatprep.subr.mxu0 0.0
    %1215 = vmatpush1.xpose.msra.mxu0 0.0
    %1216 = vmatprep.mubr.f32.mxu0 0.0
    %1217 = vmatmul.mubr.f32.gmra.mrb[0].mxu0 %v1148
    %v1218 = vpop.f32.mrb[0].mxu0
    %v1219 = vadd.f32 0.0, %v1218
    %v1220 = vpop.f32.mrb[0].mxu0
    %1221 = vdwg.mxu0
    %v1222 = vsel %vm481, %v290, 0
    %v1224 = vsel %vm481, %v350, 0
    %1226 = vmatprep.subr.mxu0 0.0
    %1227 = vmatpush1.xpose.msra.mxu0 %v1224
    %1228 = vmatprep.subr.mxu0 0.0
    %1229 = vmatpush1.xpose.msra.mxu0 0.0
    %1230 = vmatprep.subr.mxu0 0.0
    %1231 = vmatpush1.xpose.msra.mxu0 0.0
    %1232 = vmatprep.subr.mxu0 0.0
    %1233 = vmatpush1.xpose.msra.mxu0 0.0
    %1234 = vmatprep.subr.mxu0 0.0
    %1235 = vmatpush1.xpose.msra.mxu0 0.0
    %1236 = vmatprep.subr.mxu0 0.0
    %1237 = vmatpush1.xpose.msra.mxu0 0.0
    %1238 = vmatprep.subr.mxu0 0.0
    %1239 = vmatpush1.xpose.msra.mxu0 0.0
    %1240 = vmatprep.subr.mxu0 0.0
    %1241 = vmatpush1.xpose.msra.mxu0 0.0
    %1242 = vmatprep.subr.mxu0 0.0
    %1243 = vmatpush1.xpose.msra.mxu0 0.0
    %1244 = vmatprep.subr.mxu0 0.0
    %1245 = vmatpush1.xpose.msra.mxu0 0.0
    %1246 = vmatprep.subr.mxu0 0.0
    %1247 = vmatpush1.xpose.msra.mxu0 0.0
    %1248 = vmatprep.subr.mxu0 0.0
    %1249 = vmatpush1.xpose.msra.mxu0 0.0
    %1250 = vmatprep.subr.mxu0 0.0
    %1251 = vmatpush1.xpose.msra.mxu0 0.0
    %1252 = vmatprep.subr.mxu0 0.0
    %1253 = vmatpush1.xpose.msra.mxu0 0.0
    %1254 = vmatprep.subr.mxu0 0.0
    %1255 = vmatpush1.xpose.msra.mxu0 0.0
    %1256 = vmatprep.subr.mxu0 0.0
    %1257 = vmatpush1.xpose.msra.mxu0 0.0
    %1258 = vmatprep.subr.mxu0 0.0
    %1259 = vmatpush1.xpose.msra.mxu0 0.0
    %1260 = vmatprep.subr.mxu0 0.0
    %1261 = vmatpush1.xpose.msra.mxu0 0.0
    %1262 = vmatprep.subr.mxu0 0.0
    %1263 = vmatpush1.xpose.msra.mxu0 0.0
    %1264 = vmatprep.subr.mxu0 0.0
    %1265 = vmatpush1.xpose.msra.mxu0 0.0
    %1266 = vmatprep.subr.mxu0 0.0
    %1267 = vmatpush1.xpose.msra.mxu0 0.0
    %1268 = vmatprep.subr.mxu0 0.0
    %1269 = vmatpush1.xpose.msra.mxu0 0.0
    %1270 = vmatprep.subr.mxu0 0.0
    %1271 = vmatpush1.xpose.msra.mxu0 0.0
    %1272 = vmatprep.subr.mxu0 0.0
    %1273 = vmatpush1.xpose.msra.mxu0 0.0
    %1274 = vmatprep.subr.mxu0 0.0
    %1275 = vmatpush1.xpose.msra.mxu0 0.0
    %1276 = vmatprep.subr.mxu0 0.0
    %1277 = vmatpush1.xpose.msra.mxu0 0.0
    %1278 = vmatprep.subr.mxu0 0.0
    %1279 = vmatpush1.xpose.msra.mxu0 0.0
    %1280 = vmatprep.subr.mxu0 0.0
    %1281 = vmatpush1.xpose.msra.mxu0 0.0
    %1282 = vmatprep.subr.mxu0 0.0
    %1283 = vmatpush1.xpose.msra.mxu0 0.0
    %1284 = vmatprep.subr.mxu0 0.0
    %1285 = vmatpush1.xpose.msra.mxu0 0.0
    %1286 = vmatprep.subr.mxu0 0.0
    %1287 = vmatpush1.xpose.msra.mxu0 0.0
    %1288 = vmatprep.subr.mxu0 0.0
    %1289 = vmatpush1.xpose.msra.mxu0 0.0
    %1290 = vmatprep.mubr.f32.mxu0 0.0
    %1291 = vmatmul.mubr.f32.gmra.mrb[0].mxu0 %v1222
    %v1292 = vpop.f32.mrb[0].mxu0
    %v1293 = vadd.f32 0.0, %v1292
    %v1294 = vpop.f32.mrb[0].mxu0
    %1295 = vdwg.mxu0
    %v1296 = vsel %vm481, %v292, 0
    %v1298 = vsel %vm481, %v352, 0
    %1300 = vmatprep.subr.mxu0 0.0
    %1301 = vmatpush1.xpose.msra.mxu0 %v1298
    %1302 = vmatprep.subr.mxu0 0.0
    %1303 = vmatpush1.xpose.msra.mxu0 0.0
    %1304 = vmatprep.subr.mxu0 0.0
    %1305 = vmatpush1.xpose.msra.mxu0 0.0
    %1306 = vmatprep.subr.mxu0 0.0
    %1307 = vmatpush1.xpose.msra.mxu0 0.0
    %1308 = vmatprep.subr.mxu0 0.0
    %1309 = vmatpush1.xpose.msra.mxu0 0.0
    %1310 = vmatprep.subr.mxu0 0.0
    %1311 = vmatpush1.xpose.msra.mxu0 0.0
    %1312 = vmatprep.subr.mxu0 0.0
    %1313 = vmatpush1.xpose.msra.mxu0 0.0
    %1314 = vmatprep.subr.mxu0 0.0
    %1315 = vmatpush1.xpose.msra.mxu0 0.0
    %1316 = vmatprep.subr.mxu0 0.0
    %1317 = vmatpush1.xpose.msra.mxu0 0.0
    %1318 = vmatprep.subr.mxu0 0.0
    %1319 = vmatpush1.xpose.msra.mxu0 0.0
    %1320 = vmatprep.subr.mxu0 0.0
    %1321 = vmatpush1.xpose.msra.mxu0 0.0
    %1322 = vmatprep.subr.mxu0 0.0
    %1323 = vmatpush1.xpose.msra.mxu0 0.0
    %1324 = vmatprep.subr.mxu0 0.0
    %1325 = vmatpush1.xpose.msra.mxu0 0.0
    %1326 = vmatprep.subr.mxu0 0.0
    %1327 = vmatpush1.xpose.msra.mxu0 0.0
    %1328 = vmatprep.subr.mxu0 0.0
    %1329 = vmatpush1.xpose.msra.mxu0 0.0
    %1330 = vmatprep.subr.mxu0 0.0
    %1331 = vmatpush1.xpose.msra.mxu0 0.0
    %1332 = vmatprep.subr.mxu0 0.0
    %1333 = vmatpush1.xpose.msra.mxu0 0.0
    %1334 = vmatprep.subr.mxu0 0.0
    %1335 = vmatpush1.xpose.msra.mxu0 0.0
    %1336 = vmatprep.subr.mxu0 0.0
    %1337 = vmatpush1.xpose.msra.mxu0 0.0
    %1338 = vmatprep.subr.mxu0 0.0
    %1339 = vmatpush1.xpose.msra.mxu0 0.0
    %1340 = vmatprep.subr.mxu0 0.0
    %1341 = vmatpush1.xpose.msra.mxu0 0.0
    %1342 = vmatprep.subr.mxu0 0.0
    %1343 = vmatpush1.xpose.msra.mxu0 0.0
    %1344 = vmatprep.subr.mxu0 0.0
    %1345 = vmatpush1.xpose.msra.mxu0 0.0
    %1346 = vmatprep.subr.mxu0 0.0
    %1347 = vmatpush1.xpose.msra.mxu0 0.0
    %1348 = vmatprep.subr.mxu0 0.0
    %1349 = vmatpush1.xpose.msra.mxu0 0.0
    %1350 = vmatprep.subr.mxu0 0.0
    %1351 = vmatpush1.xpose.msra.mxu0 0.0
    %1352 = vmatprep.subr.mxu0 0.0
    %1353 = vmatpush1.xpose.msra.mxu0 0.0
    %1354 = vmatprep.subr.mxu0 0.0
    %1355 = vmatpush1.xpose.msra.mxu0 0.0
    %1356 = vmatprep.subr.mxu0 0.0
    %1357 = vmatpush1.xpose.msra.mxu0 0.0
    %1358 = vmatprep.subr.mxu0 0.0
    %1359 = vmatpush1.xpose.msra.mxu0 0.0
    %1360 = vmatprep.subr.mxu0 0.0
    %1361 = vmatpush1.xpose.msra.mxu0 0.0
    %1362 = vmatprep.subr.mxu0 0.0
    %1363 = vmatpush1.xpose.msra.mxu0 0.0
    %1364 = vmatprep.mubr.f32.mxu0 0.0
    %1365 = vmatmul.mubr.f32.gmra.mrb[0].mxu0 %v1296
    %v1366 = vpop.f32.mrb[0].mxu0
    %v1367 = vadd.f32 0.0, %v1366
    %v1368 = vpop.f32.mrb[0].mxu0
    %1369 = vdwg.mxu0
    %v1370 = vsel %vm481, %v294, 0
    %v1372 = vsel %vm481, %v354, 0
    %1374 = vmatprep.subr.mxu0 0.0
    %1375 = vmatpush1.xpose.msra.mxu0 %v1372
    %1376 = vmatprep.subr.mxu0 0.0
    %1377 = vmatpush1.xpose.msra.mxu0 0.0
    %1378 = vmatprep.subr.mxu0 0.0
    %1379 = vmatpush1.xpose.msra.mxu0 0.0
    %1380 = vmatprep.subr.mxu0 0.0
    %1381 = vmatpush1.xpose.msra.mxu0 0.0
    %1382 = vmatprep.subr.mxu0 0.0
    %1383 = vmatpush1.xpose.msra.mxu0 0.0
    %1384 = vmatprep.subr.mxu0 0.0
    %1385 = vmatpush1.xpose.msra.mxu0 0.0
    %1386 = vmatprep.subr.mxu0 0.0
    %1387 = vmatpush1.xpose.msra.mxu0 0.0
    %1388 = vmatprep.subr.mxu0 0.0
    %1389 = vmatpush1.xpose.msra.mxu0 0.0
    %1390 = vmatprep.subr.mxu0 0.0
    %1391 = vmatpush1.xpose.msra.mxu0 0.0
    %1392 = vmatprep.subr.mxu0 0.0
    %1393 = vmatpush1.xpose.msra.mxu0 0.0
    %1394 = vmatprep.subr.mxu0 0.0
    %1395 = vmatpush1.xpose.msra.mxu0 0.0
    %1396 = vmatprep.subr.mxu0 0.0
    %1397 = vmatpush1.xpose.msra.mxu0 0.0
    %1398 = vmatprep.subr.mxu0 0.0
    %1399 = vmatpush1.xpose.msra.mxu0 0.0
    %1400 = vmatprep.subr.mxu0 0.0
    %1401 = vmatpush1.xpose.msra.mxu0 0.0
    %1402 = vmatprep.subr.mxu0 0.0
    %1403 = vmatpush1.xpose.msra.mxu0 0.0
    %1404 = vmatprep.subr.mxu0 0.0
    %1405 = vmatpush1.xpose.msra.mxu0 0.0
    %1406 = vmatprep.subr.mxu0 0.0
    %1407 = vmatpush1.xpose.msra.mxu0 0.0
    %1408 = vmatprep.subr.mxu0 0.0
    %1409 = vmatpush1.xpose.msra.mxu0 0.0
    %1410 = vmatprep.subr.mxu0 0.0
    %1411 = vmatpush1.xpose.msra.mxu0 0.0
    %1412 = vmatprep.subr.mxu0 0.0
    %1413 = vmatpush1.xpose.msra.mxu0 0.0
    %1414 = vmatprep.subr.mxu0 0.0
    %1415 = vmatpush1.xpose.msra.mxu0 0.0
    %1416 = vmatprep.subr.mxu0 0.0
    %1417 = vmatpush1.xpose.msra.mxu0 0.0
    %1418 = vmatprep.subr.mxu0 0.0
    %1419 = vmatpush1.xpose.msra.mxu0 0.0
    %1420 = vmatprep.subr.mxu0 0.0
    %1421 = vmatpush1.xpose.msra.mxu0 0.0
    %1422 = vmatprep.subr.mxu0 0.0
    %1423 = vmatpush1.xpose.msra.mxu0 0.0
    %1424 = vmatprep.subr.mxu0 0.0
    %1425 = vmatpush1.xpose.msra.mxu0 0.0
    %1426 = vmatprep.subr.mxu0 0.0
    %1427 = vmatpush1.xpose.msra.mxu0 0.0
    %1428 = vmatprep.subr.mxu0 0.0
    %1429 = vmatpush1.xpose.msra.mxu0 0.0
    %1430 = vmatprep.subr.mxu0 0.0
    %1431 = vmatpush1.xpose.msra.mxu0 0.0
    %1432 = vmatprep.subr.mxu0 0.0
    %1433 = vmatpush1.xpose.msra.mxu0 0.0
    %1434 = vmatprep.subr.mxu0 0.0
    %1435 = vmatpush1.xpose.msra.mxu0 0.0
    %1436 = vmatprep.subr.mxu0 0.0
    %1437 = vmatpush1.xpose.msra.mxu0 0.0
    %1438 = vmatprep.mubr.f32.mxu0 0.0
    %1439 = vmatmul.mubr.f32.gmra.mrb[0].mxu0 %v1370
    %v1440 = vpop.f32.mrb[0].mxu0
    %v1441 = vadd.f32 0.0, %v1440
    %v1442 = vpop.f32.mrb[0].mxu0
    %1443 = vdwg.mxu0
    %v1444 = vsel %vm481, %v296, 0
    %v1446 = vsel %vm481, %v356, 0
    %1448 = vmatprep.subr.mxu0 0.0
    %1449 = vmatpush1.xpose.msra.mxu0 %v1446
    %1450 = vmatprep.subr.mxu0 0.0
    %1451 = vmatpush1.xpose.msra.mxu0 0.0
    %1452 = vmatprep.subr.mxu0 0.0
    %1453 = vmatpush1.xpose.msra.mxu0 0.0
    %1454 = vmatprep.subr.mxu0 0.0
    %1455 = vmatpush1.xpose.msra.mxu0 0.0
    %1456 = vmatprep.subr.mxu0 0.0
    %1457 = vmatpush1.xpose.msra.mxu0 0.0
    %1458 = vmatprep.subr.mxu0 0.0
    %1459 = vmatpush1.xpose.msra.mxu0 0.0
    %1460 = vmatprep.subr.mxu0 0.0
    %1461 = vmatpush1.xpose.msra.mxu0 0.0
    %1462 = vmatprep.subr.mxu0 0.0
    %1463 = vmatpush1.xpose.msra.mxu0 0.0
    %1464 = vmatprep.subr.mxu0 0.0
    %1465 = vmatpush1.xpose.msra.mxu0 0.0
    %1466 = vmatprep.subr.mxu0 0.0
    %1467 = vmatpush1.xpose.msra.mxu0 0.0
    %1468 = vmatprep.subr.mxu0 0.0
    %1469 = vmatpush1.xpose.msra.mxu0 0.0
    %1470 = vmatprep.subr.mxu0 0.0
    %1471 = vmatpush1.xpose.msra.mxu0 0.0
    %1472 = vmatprep.subr.mxu0 0.0
    %1473 = vmatpush1.xpose.msra.mxu0 0.0
    %1474 = vmatprep.subr.mxu0 0.0
    %1475 = vmatpush1.xpose.msra.mxu0 0.0
    %1476 = vmatprep.subr.mxu0 0.0
    %1477 = vmatpush1.xpose.msra.mxu0 0.0
    %1478 = vmatprep.subr.mxu0 0.0
    %1479 = vmatpush1.xpose.msra.mxu0 0.0
    %1480 = vmatprep.subr.mxu0 0.0
    %1481 = vmatpush1.xpose.msra.mxu0 0.0
    %1482 = vmatprep.subr.mxu0 0.0
    %1483 = vmatpush1.xpose.msra.mxu0 0.0
    %1484 = vmatprep.subr.mxu0 0.0
    %1485 = vmatpush1.xpose.msra.mxu0 0.0
    %1486 = vmatprep.subr.mxu0 0.0
    %1487 = vmatpush1.xpose.msra.mxu0 0.0
    %1488 = vmatprep.subr.mxu0 0.0
    %1489 = vmatpush1.xpose.msra.mxu0 0.0
    %1490 = vmatprep.subr.mxu0 0.0
    %1491 = vmatpush1.xpose.msra.mxu0 0.0
    %1492 = vmatprep.subr.mxu0 0.0
    %1493 = vmatpush1.xpose.msra.mxu0 0.0
    %1494 = vmatprep.subr.mxu0 0.0
    %1495 = vmatpush1.xpose.msra.mxu0 0.0
    %1496 = vmatprep.subr.mxu0 0.0
    %1497 = vmatpush1.xpose.msra.mxu0 0.0
    %1498 = vmatprep.subr.mxu0 0.0
    %1499 = vmatpush1.xpose.msra.mxu0 0.0
    %1500 = vmatprep.subr.mxu0 0.0
    %1501 = vmatpush1.xpose.msra.mxu0 0.0
    %1502 = vmatprep.subr.mxu0 0.0
    %1503 = vmatpush1.xpose.msra.mxu0 0.0
    %1504 = vmatprep.subr.mxu0 0.0
    %1505 = vmatpush1.xpose.msra.mxu0 0.0
    %1506 = vmatprep.subr.mxu0 0.0
    %1507 = vmatpush1.xpose.msra.mxu0 0.0
    %1508 = vmatprep.subr.mxu0 0.0
    %1509 = vmatpush1.xpose.msra.mxu0 0.0
    %1510 = vmatprep.subr.mxu0 0.0
    %1511 = vmatpush1.xpose.msra.mxu0 0.0
    %1512 = vmatprep.mubr.f32.mxu0 0.0
    %1513 = vmatmul.mubr.f32.gmra.mrb[0].mxu0 %v1444
    %v1514 = vpop.f32.mrb[0].mxu0
    %v1515 = vadd.f32 0.0, %v1514
    %v1516 = vpop.f32.mrb[0].mxu0
    %1517 = vdwg.mxu0
    %v1518 = vsel %vm481, %v298, 0
    %v1520 = vsel %vm481, %v358, 0
    %1522 = vmatprep.subr.mxu0 0.0
    %1523 = vmatpush1.xpose.msra.mxu0 %v1520
    %1524 = vmatprep.subr.mxu0 0.0
    %1525 = vmatpush1.xpose.msra.mxu0 0.0
    %1526 = vmatprep.subr.mxu0 0.0
    %1527 = vmatpush1.xpose.msra.mxu0 0.0
    %1528 = vmatprep.subr.mxu0 0.0
    %1529 = vmatpush1.xpose.msra.mxu0 0.0
    %1530 = vmatprep.subr.mxu0 0.0
    %1531 = vmatpush1.xpose.msra.mxu0 0.0
    %1532 = vmatprep.subr.mxu0 0.0
    %1533 = vmatpush1.xpose.msra.mxu0 0.0
    %1534 = vmatprep.subr.mxu0 0.0
    %1535 = vmatpush1.xpose.msra.mxu0 0.0
    %1536 = vmatprep.subr.mxu0 0.0
    %1537 = vmatpush1.xpose.msra.mxu0 0.0
    %1538 = vmatprep.subr.mxu0 0.0
    %1539 = vmatpush1.xpose.msra.mxu0 0.0
    %1540 = vmatprep.subr.mxu0 0.0
    %1541 = vmatpush1.xpose.msra.mxu0 0.0
    %1542 = vmatprep.subr.mxu0 0.0
    %1543 = vmatpush1.xpose.msra.mxu0 0.0
    %1544 = vmatprep.subr.mxu0 0.0
    %1545 = vmatpush1.xpose.msra.mxu0 0.0
    %1546 = vmatprep.subr.mxu0 0.0
    %1547 = vmatpush1.xpose.msra.mxu0 0.0
    %1548 = vmatprep.subr.mxu0 0.0
    %1549 = vmatpush1.xpose.msra.mxu0 0.0
    %1550 = vmatprep.subr.mxu0 0.0
    %1551 = vmatpush1.xpose.msra.mxu0 0.0
    %1552 = vmatprep.subr.mxu0 0.0
    %1553 = vmatpush1.xpose.msra.mxu0 0.0
    %1554 = vmatprep.subr.mxu0 0.0
    %1555 = vmatpush1.xpose.msra.mxu0 0.0
    %1556 = vmatprep.subr.mxu0 0.0
    %1557 = vmatpush1.xpose.msra.mxu0 0.0
    %1558 = vmatprep.subr.mxu0 0.0
    %1559 = vmatpush1.xpose.msra.mxu0 0.0
    %1560 = vmatprep.subr.mxu0 0.0
    %1561 = vmatpush1.xpose.msra.mxu0 0.0
    %1562 = vmatprep.subr.mxu0 0.0
    %1563 = vmatpush1.xpose.msra.mxu0 0.0
    %1564 = vmatprep.subr.mxu0 0.0
    %1565 = vmatpush1.xpose.msra.mxu0 0.0
    %1566 = vmatprep.subr.mxu0 0.0
    %1567 = vmatpush1.xpose.msra.mxu0 0.0
    %1568 = vmatprep.subr.mxu0 0.0
    %1569 = vmatpush1.xpose.msra.mxu0 0.0
    %1570 = vmatprep.subr.mxu0 0.0
    %1571 = vmatpush1.xpose.msra.mxu0 0.0
    %1572 = vmatprep.subr.mxu0 0.0
    %1573 = vmatpush1.xpose.msra.mxu0 0.0
    %1574 = vmatprep.subr.mxu0 0.0
    %1575 = vmatpush1.xpose.msra.mxu0 0.0
    %1576 = vmatprep.subr.mxu0 0.0
    %1577 = vmatpush1.xpose.msra.mxu0 0.0
    %1578 = vmatprep.subr.mxu0 0.0
    %1579 = vmatpush1.xpose.msra.mxu0 0.0
    %1580 = vmatprep.subr.mxu0 0.0
    %1581 = vmatpush1.xpose.msra.mxu0 0.0
    %1582 = vmatprep.subr.mxu0 0.0
    %1583 = vmatpush1.xpose.msra.mxu0 0.0
    %1584 = vmatprep.subr.mxu0 0.0
    %1585 = vmatpush1.xpose.msra.mxu0 0.0
    %1586 = vmatprep.mubr.f32.mxu0 0.0
    %1587 = vmatmul.mubr.f32.gmra.mrb[0].mxu0 %v1518
    %v1588 = vpop.f32.mrb[0].mxu0
    %v1589 = vadd.f32 0.0, %v1588
    %v1590 = vpop.f32.mrb[0].mxu0
    %1591 = vdwg.mxu0
    %v1592 = vsel %vm481, %v300, 0
    %v1594 = vsel %vm481, %v360, 0
    %1596 = vmatprep.subr.mxu0 0.0
    %1597 = vmatpush1.xpose.msra.mxu0 %v1594
    %1598 = vmatprep.subr.mxu0 0.0
    %1599 = vmatpush1.xpose.msra.mxu0 0.0
    %1600 = vmatprep.subr.mxu0 0.0
    %1601 = vmatpush1.xpose.msra.mxu0 0.0
    %1602 = vmatprep.subr.mxu0 0.0
    %1603 = vmatpush1.xpose.msra.mxu0 0.0
    %1604 = vmatprep.subr.mxu0 0.0
    %1605 = vmatpush1.xpose.msra.mxu0 0.0
    %1606 = vmatprep.subr.mxu0 0.0
    %1607 = vmatpush1.xpose.msra.mxu0 0.0
    %1608 = vmatprep.subr.mxu0 0.0
    %1609 = vmatpush1.xpose.msra.mxu0 0.0
    %1610 = vmatprep.subr.mxu0 0.0
    %1611 = vmatpush1.xpose.msra.mxu0 0.0
    %1612 = vmatprep.subr.mxu0 0.0
    %1613 = vmatpush1.xpose.msra.mxu0 0.0
    %1614 = vmatprep.subr.mxu0 0.0
    %1615 = vmatpush1.xpose.msra.mxu0 0.0
    %1616 = vmatprep.subr.mxu0 0.0
    %1617 = vmatpush1.xpose.msra.mxu0 0.0
    %1618 = vmatprep.subr.mxu0 0.0
    %1619 = vmatpush1.xpose.msra.mxu0 0.0
    %1620 = vmatprep.subr.mxu0 0.0
    %1621 = vmatpush1.xpose.msra.mxu0 0.0
    %1622 = vmatprep.subr.mxu0 0.0
    %1623 = vmatpush1.xpose.msra.mxu0 0.0
    %1624 = vmatprep.subr.mxu0 0.0
    %1625 = vmatpush1.xpose.msra.mxu0 0.0
    %1626 = vmatprep.subr.mxu0 0.0
    %1627 = vmatpush1.xpose.msra.mxu0 0.0
    %1628 = vmatprep.subr.mxu0 0.0
    %1629 = vmatpush1.xpose.msra.mxu0 0.0
    %1630 = vmatprep.subr.mxu0 0.0
    %1631 = vmatpush1.xpose.msra.mxu0 0.0
    %1632 = vmatprep.subr.mxu0 0.0
    %1633 = vmatpush1.xpose.msra.mxu0 0.0
    %1634 = vmatprep.subr.mxu0 0.0
    %1635 = vmatpush1.xpose.msra.mxu0 0.0
    %1636 = vmatprep.subr.mxu0 0.0
    %1637 = vmatpush1.xpose.msra.mxu0 0.0
    %1638 = vmatprep.subr.mxu0 0.0
    %1639 = vmatpush1.xpose.msra.mxu0 0.0
    %1640 = vmatprep.subr.mxu0 0.0
    %1641 = vmatpush1.xpose.msra.mxu0 0.0
    %1642 = vmatprep.subr.mxu0 0.0
    %1643 = vmatpush1.xpose.msra.mxu0 0.0
    %1644 = vmatprep.subr.mxu0 0.0
    %1645 = vmatpush1.xpose.msra.mxu0 0.0
    %1646 = vmatprep.subr.mxu0 0.0
    %1647 = vmatpush1.xpose.msra.mxu0 0.0
    %1648 = vmatprep.subr.mxu0 0.0
    %1649 = vmatpush1.xpose.msra.mxu0 0.0
    %1650 = vmatprep.subr.mxu0 0.0
    %1651 = vmatpush1.xpose.msra.mxu0 0.0
    %1652 = vmatprep.subr.mxu0 0.0
    %1653 = vmatpush1.xpose.msra.mxu0 0.0
    %1654 = vmatprep.subr.mxu0 0.0
    %1655 = vmatpush1.xpose.msra.mxu0 0.0
    %1656 = vmatprep.subr.mxu0 0.0
    %1657 = vmatpush1.xpose.msra.mxu0 0.0
    %1658 = vmatprep.subr.mxu0 0.0
    %1659 = vmatpush1.xpose.msra.mxu0 0.0
    %1660 = vmatprep.mubr.f32.mxu0 0.0
    %1661 = vmatmul.mubr.f32.gmra.mrb[0].mxu0 %v1592
    %v1662 = vpop.f32.mrb[0].mxu0
    %v1663 = vadd.f32 0.0, %v1662
    %v1664 = vpop.f32.mrb[0].mxu0
    %1665 = vdwg.mxu0
    %v1666 = vsel %vm481, %v302, 0
    %v1668 = vsel %vm481, %v362, 0
    %1670 = vmatprep.subr.mxu0 0.0
    %1671 = vmatpush1.xpose.msra.mxu0 %v1668
    %1672 = vmatprep.subr.mxu0 0.0
    %1673 = vmatpush1.xpose.msra.mxu0 0.0
    %1674 = vmatprep.subr.mxu0 0.0
    %1675 = vmatpush1.xpose.msra.mxu0 0.0
    %1676 = vmatprep.subr.mxu0 0.0
    %1677 = vmatpush1.xpose.msra.mxu0 0.0
    %1678 = vmatprep.subr.mxu0 0.0
    %1679 = vmatpush1.xpose.msra.mxu0 0.0
    %1680 = vmatprep.subr.mxu0 0.0
    %1681 = vmatpush1.xpose.msra.mxu0 0.0
    %1682 = vmatprep.subr.mxu0 0.0
    %1683 = vmatpush1.xpose.msra.mxu0 0.0
    %1684 = vmatprep.subr.mxu0 0.0
    %1685 = vmatpush1.xpose.msra.mxu0 0.0
    %1686 = vmatprep.subr.mxu0 0.0
    %1687 = vmatpush1.xpose.msra.mxu0 0.0
    %1688 = vmatprep.subr.mxu0 0.0
    %1689 = vmatpush1.xpose.msra.mxu0 0.0
    %1690 = vmatprep.subr.mxu0 0.0
    %1691 = vmatpush1.xpose.msra.mxu0 0.0
    %1692 = vmatprep.subr.mxu0 0.0
    %1693 = vmatpush1.xpose.msra.mxu0 0.0
    %1694 = vmatprep.subr.mxu0 0.0
    %1695 = vmatpush1.xpose.msra.mxu0 0.0
    %1696 = vmatprep.subr.mxu0 0.0
    %1697 = vmatpush1.xpose.msra.mxu0 0.0
    %1698 = vmatprep.subr.mxu0 0.0
    %1699 = vmatpush1.xpose.msra.mxu0 0.0
    %1700 = vmatprep.subr.mxu0 0.0
    %1701 = vmatpush1.xpose.msra.mxu0 0.0
    %1702 = vmatprep.subr.mxu0 0.0
    %1703 = vmatpush1.xpose.msra.mxu0 0.0
    %1704 = vmatprep.subr.mxu0 0.0
    %1705 = vmatpush1.xpose.msra.mxu0 0.0
    %1706 = vmatprep.subr.mxu0 0.0
    %1707 = vmatpush1.xpose.msra.mxu0 0.0
    %1708 = vmatprep.subr.mxu0 0.0
    %1709 = vmatpush1.xpose.msra.mxu0 0.0
    %1710 = vmatprep.subr.mxu0 0.0
    %1711 = vmatpush1.xpose.msra.mxu0 0.0
    %1712 = vmatprep.subr.mxu0 0.0
    %1713 = vmatpush1.xpose.msra.mxu0 0.0
    %1714 = vmatprep.subr.mxu0 0.0
    %1715 = vmatpush1.xpose.msra.mxu0 0.0
    %1716 = vmatprep.subr.mxu0 0.0
    %1717 = vmatpush1.xpose.msra.mxu0 0.0
    %1718 = vmatprep.subr.mxu0 0.0
    %1719 = vmatpush1.xpose.msra.mxu0 0.0
    %1720 = vmatprep.subr.mxu0 0.0
    %1721 = vmatpush1.xpose.msra.mxu0 0.0
    %1722 = vmatprep.subr.mxu0 0.0
    %1723 = vmatpush1.xpose.msra.mxu0 0.0
    %1724 = vmatprep.subr.mxu0 0.0
    %1725 = vmatpush1.xpose.msra.mxu0 0.0
    %1726 = vmatprep.subr.mxu0 0.0
    %1727 = vmatpush1.xpose.msra.mxu0 0.0
    %1728 = vmatprep.subr.mxu0 0.0
    %1729 = vmatpush1.xpose.msra.mxu0 0.0
    %1730 = vmatprep.subr.mxu0 0.0
    %1731 = vmatpush1.xpose.msra.mxu0 0.0
    %1732 = vmatprep.subr.mxu0 0.0
    %1733 = vmatpush1.xpose.msra.mxu0 0.0
    %1734 = vmatprep.mubr.f32.mxu0 0.0
    %1735 = vmatmul.mubr.f32.gmra.mrb[0].mxu0 %v1666
    %v1736 = vpop.f32.mrb[0].mxu0
    %v1737 = vadd.f32 0.0, %v1736
    %v1738 = vpop.f32.mrb[0].mxu0
    %1739 = vdwg.mxu0
    %v1740 = vsel %vm481, %v304, 0
    %v1742 = vsel %vm481, %v364, 0
    %1744 = vmatprep.subr.mxu0 0.0
    %1745 = vmatpush1.xpose.msra.mxu0 %v1742
    %1746 = vmatprep.subr.mxu0 0.0
    %1747 = vmatpush1.xpose.msra.mxu0 0.0
    %1748 = vmatprep.subr.mxu0 0.0
    %1749 = vmatpush1.xpose.msra.mxu0 0.0
    %1750 = vmatprep.subr.mxu0 0.0
    %1751 = vmatpush1.xpose.msra.mxu0 0.0
    %1752 = vmatprep.subr.mxu0 0.0
    %1753 = vmatpush1.xpose.msra.mxu0 0.0
    %1754 = vmatprep.subr.mxu0 0.0
    %1755 = vmatpush1.xpose.msra.mxu0 0.0
    %1756 = vmatprep.subr.mxu0 0.0
    %1757 = vmatpush1.xpose.msra.mxu0 0.0
    %1758 = vmatprep.subr.mxu0 0.0
    %1759 = vmatpush1.xpose.msra.mxu0 0.0
    %1760 = vmatprep.subr.mxu0 0.0
    %1761 = vmatpush1.xpose.msra.mxu0 0.0
    %1762 = vmatprep.subr.mxu0 0.0
    %1763 = vmatpush1.xpose.msra.mxu0 0.0
    %1764 = vmatprep.subr.mxu0 0.0
    %1765 = vmatpush1.xpose.msra.mxu0 0.0
    %1766 = vmatprep.subr.mxu0 0.0
    %1767 = vmatpush1.xpose.msra.mxu0 0.0
    %1768 = vmatprep.subr.mxu0 0.0
    %1769 = vmatpush1.xpose.msra.mxu0 0.0
    %1770 = vmatprep.subr.mxu0 0.0
    %1771 = vmatpush1.xpose.msra.mxu0 0.0
    %1772 = vmatprep.subr.mxu0 0.0
    %1773 = vmatpush1.xpose.msra.mxu0 0.0
    %1774 = vmatprep.subr.mxu0 0.0
    %1775 = vmatpush1.xpose.msra.mxu0 0.0
    %1776 = vmatprep.subr.mxu0 0.0
    %1777 = vmatpush1.xpose.msra.mxu0 0.0
    %1778 = vmatprep.subr.mxu0 0.0
    %1779 = vmatpush1.xpose.msra.mxu0 0.0
    %1780 = vmatprep.subr.mxu0 0.0
    %1781 = vmatpush1.xpose.msra.mxu0 0.0
    %1782 = vmatprep.subr.mxu0 0.0
    %1783 = vmatpush1.xpose.msra.mxu0 0.0
    %1784 = vmatprep.subr.mxu0 0.0
    %1785 = vmatpush1.xpose.msra.mxu0 0.0
    %1786 = vmatprep.subr.mxu0 0.0
    %1787 = vmatpush1.xpose.msra.mxu0 0.0
    %1788 = vmatprep.subr.mxu0 0.0
    %1789 = vmatpush1.xpose.msra.mxu0 0.0
    %1790 = vmatprep.subr.mxu0 0.0
    %1791 = vmatpush1.xpose.msra.mxu0 0.0
    %1792 = vmatprep.subr.mxu0 0.0
    %1793 = vmatpush1.xpose.msra.mxu0 0.0
    %1794 = vmatprep.subr.mxu0 0.0
    %1795 = vmatpush1.xpose.msra.mxu0 0.0
    %1796 = vmatprep.subr.mxu0 0.0
    %1797 = vmatpush1.xpose.msra.mxu0 0.0
    %1798 = vmatprep.subr.mxu0 0.0
    %1799 = vmatpush1.xpose.msra.mxu0 0.0
    %1800 = vmatprep.subr.mxu0 0.0
    %1801 = vmatpush1.xpose.msra.mxu0 0.0
    %1802 = vmatprep.subr.mxu0 0.0
    %1803 = vmatpush1.xpose.msra.mxu0 0.0
    %1804 = vmatprep.subr.mxu0 0.0
    %1805 = vmatpush1.xpose.msra.mxu0 0.0
    %1806 = vmatprep.subr.mxu0 0.0
    %1807 = vmatpush1.xpose.msra.mxu0 0.0
    %1808 = vmatprep.mubr.f32.mxu0 0.0
    %1809 = vmatmul.mubr.f32.gmra.mrb[0].mxu0 %v1740
    %v1810 = vpop.f32.mrb[0].mxu0
    %v1811 = vadd.f32 0.0, %v1810
    %v1812 = vpop.f32.mrb[0].mxu0
    %1813 = vdwg.mxu0
    %v1814 = vsel %vm481, %v306, 0
    %v1816 = vsel %vm481, %v366, 0
    %1818 = vmatprep.subr.mxu0 0.0
    %1819 = vmatpush1.xpose.msra.mxu0 %v1816
    %1820 = vmatprep.subr.mxu0 0.0
    %1821 = vmatpush1.xpose.msra.mxu0 0.0
    %1822 = vmatprep.subr.mxu0 0.0
    %1823 = vmatpush1.xpose.msra.mxu0 0.0
    %1824 = vmatprep.subr.mxu0 0.0
    %1825 = vmatpush1.xpose.msra.mxu0 0.0
    %1826 = vmatprep.subr.mxu0 0.0
    %1827 = vmatpush1.xpose.msra.mxu0 0.0
    %1828 = vmatprep.subr.mxu0 0.0
    %1829 = vmatpush1.xpose.msra.mxu0 0.0
    %1830 = vmatprep.subr.mxu0 0.0
    %1831 = vmatpush1.xpose.msra.mxu0 0.0
    %1832 = vmatprep.subr.mxu0 0.0
    %1833 = vmatpush1.xpose.msra.mxu0 0.0
    %1834 = vmatprep.subr.mxu0 0.0
    %1835 = vmatpush1.xpose.msra.mxu0 0.0
    %1836 = vmatprep.subr.mxu0 0.0
    %1837 = vmatpush1.xpose.msra.mxu0 0.0
    %1838 = vmatprep.subr.mxu0 0.0
    %1839 = vmatpush1.xpose.msra.mxu0 0.0
    %1840 = vmatprep.subr.mxu0 0.0
    %1841 = vmatpush1.xpose.msra.mxu0 0.0
    %1842 = vmatprep.subr.mxu0 0.0
    %1843 = vmatpush1.xpose.msra.mxu0 0.0
    %1844 = vmatprep.subr.mxu0 0.0
    %1845 = vmatpush1.xpose.msra.mxu0 0.0
    %1846 = vmatprep.subr.mxu0 0.0
    %1847 = vmatpush1.xpose.msra.mxu0 0.0
    %1848 = vmatprep.subr.mxu0 0.0
    %1849 = vmatpush1.xpose.msra.mxu0 0.0
    %1850 = vmatprep.subr.mxu0 0.0
    %1851 = vmatpush1.xpose.msra.mxu0 0.0
    %1852 = vmatprep.subr.mxu0 0.0
    %1853 = vmatpush1.xpose.msra.mxu0 0.0
    %1854 = vmatprep.subr.mxu0 0.0
    %1855 = vmatpush1.xpose.msra.mxu0 0.0
    %1856 = vmatprep.subr.mxu0 0.0
    %1857 = vmatpush1.xpose.msra.mxu0 0.0
    %1858 = vmatprep.subr.mxu0 0.0
    %1859 = vmatpush1.xpose.msra.mxu0 0.0
    %1860 = vmatprep.subr.mxu0 0.0
    %1861 = vmatpush1.xpose.msra.mxu0 0.0
    %1862 = vmatprep.subr.mxu0 0.0
    %1863 = vmatpush1.xpose.msra.mxu0 0.0
    %1864 = vmatprep.subr.mxu0 0.0
    %1865 = vmatpush1.xpose.msra.mxu0 0.0
    %1866 = vmatprep.subr.mxu0 0.0
    %1867 = vmatpush1.xpose.msra.mxu0 0.0
    %1868 = vmatprep.subr.mxu0 0.0
    %1869 = vmatpush1.xpose.msra.mxu0 0.0
    %1870 = vmatprep.subr.mxu0 0.0
    %1871 = vmatpush1.xpose.msra.mxu0 0.0
    %1872 = vmatprep.subr.mxu0 0.0
    %1873 = vmatpush1.xpose.msra.mxu0 0.0
    %1874 = vmatprep.subr.mxu0 0.0
    %1875 = vmatpush1.xpose.msra.mxu0 0.0
    %1876 = vmatprep.subr.mxu0 0.0
    %1877 = vmatpush1.xpose.msra.mxu0 0.0
    %1878 = vmatprep.subr.mxu0 0.0
    %1879 = vmatpush1.xpose.msra.mxu0 0.0
    %1880 = vmatprep.subr.mxu0 0.0
    %1881 = vmatpush1.xpose.msra.mxu0 0.0
    %1882 = vmatprep.mubr.f32.mxu0 0.0
    %1883 = vmatmul.mubr.f32.gmra.mrb[0].mxu0 %v1814
    %v1884 = vpop.f32.mrb[0].mxu0
    %v1885 = vadd.f32 0.0, %v1884
    %v1886 = vpop.f32.mrb[0].mxu0
    %1887 = vdwg.mxu0
    %v1888 = vsel %vm481, %v308, 0
    %v1890 = vsel %vm481, %v368, 0
    %1892 = vmatprep.subr.mxu0 0.0
    %1893 = vmatpush1.xpose.msra.mxu0 %v1890
    %1894 = vmatprep.subr.mxu0 0.0
    %1895 = vmatpush1.xpose.msra.mxu0 0.0
    %1896 = vmatprep.subr.mxu0 0.0
    %1897 = vmatpush1.xpose.msra.mxu0 0.0
    %1898 = vmatprep.subr.mxu0 0.0
    %1899 = vmatpush1.xpose.msra.mxu0 0.0
    %1900 = vmatprep.subr.mxu0 0.0
    %1901 = vmatpush1.xpose.msra.mxu0 0.0
    %1902 = vmatprep.subr.mxu0 0.0
    %1903 = vmatpush1.xpose.msra.mxu0 0.0
    %1904 = vmatprep.subr.mxu0 0.0
    %1905 = vmatpush1.xpose.msra.mxu0 0.0
    %1906 = vmatprep.subr.mxu0 0.0
    %1907 = vmatpush1.xpose.msra.mxu0 0.0
    %1908 = vmatprep.subr.mxu0 0.0
    %1909 = vmatpush1.xpose.msra.mxu0 0.0
    %1910 = vmatprep.subr.mxu0 0.0
    %1911 = vmatpush1.xpose.msra.mxu0 0.0
    %1912 = vmatprep.subr.mxu0 0.0
    %1913 = vmatpush1.xpose.msra.mxu0 0.0
    %1914 = vmatprep.subr.mxu0 0.0
    %1915 = vmatpush1.xpose.msra.mxu0 0.0
    %1916 = vmatprep.subr.mxu0 0.0
    %1917 = vmatpush1.xpose.msra.mxu0 0.0
    %1918 = vmatprep.subr.mxu0 0.0
    %1919 = vmatpush1.xpose.msra.mxu0 0.0
    %1920 = vmatprep.subr.mxu0 0.0
    %1921 = vmatpush1.xpose.msra.mxu0 0.0
    %1922 = vmatprep.subr.mxu0 0.0
    %1923 = vmatpush1.xpose.msra.mxu0 0.0
    %1924 = vmatprep.subr.mxu0 0.0
    %1925 = vmatpush1.xpose.msra.mxu0 0.0
    %1926 = vmatprep.subr.mxu0 0.0
    %1927 = vmatpush1.xpose.msra.mxu0 0.0
    %1928 = vmatprep.subr.mxu0 0.0
    %1929 = vmatpush1.xpose.msra.mxu0 0.0
    %1930 = vmatprep.subr.mxu0 0.0
    %1931 = vmatpush1.xpose.msra.mxu0 0.0
    %1932 = vmatprep.subr.mxu0 0.0
    %1933 = vmatpush1.xpose.msra.mxu0 0.0
    %1934 = vmatprep.subr.mxu0 0.0
    %1935 = vmatpush1.xpose.msra.mxu0 0.0
    %1936 = vmatprep.subr.mxu0 0.0
    %1937 = vmatpush1.xpose.msra.mxu0 0.0
    %1938 = vmatprep.subr.mxu0 0.0
    %1939 = vmatpush1.xpose.msra.mxu0 0.0
    %1940 = vmatprep.subr.mxu0 0.0
    %1941 = vmatpush1.xpose.msra.mxu0 0.0
    %1942 = vmatprep.subr.mxu0 0.0
    %1943 = vmatpush1.xpose.msra.mxu0 0.0
    %1944 = vmatprep.subr.mxu0 0.0
    %1945 = vmatpush1.xpose.msra.mxu0 0.0
    %1946 = vmatprep.subr.mxu0 0.0
    %1947 = vmatpush1.xpose.msra.mxu0 0.0
    %1948 = vmatprep.subr.mxu0 0.0
    %1949 = vmatpush1.xpose.msra.mxu0 0.0
    %1950 = vmatprep.subr.mxu0 0.0
    %1951 = vmatpush1.xpose.msra.mxu0 0.0
    %1952 = vmatprep.subr.mxu0 0.0
    %1953 = vmatpush1.xpose.msra.mxu0 0.0
    %1954 = vmatprep.subr.mxu0 0.0
    %1955 = vmatpush1.xpose.msra.mxu0 0.0
    %1956 = vmatprep.mubr.f32.mxu0 0.0
    %1957 = vmatmul.mubr.f32.gmra.mrb[0].mxu0 %v1888
    %v1958 = vpop.f32.mrb[0].mxu0
    %v1959 = vadd.f32 0.0, %v1958
    %v1960 = vpop.f32.mrb[0].mxu0
    %1961 = vdwg.mxu0
    %v1962 = vsel %vm481, %v310, 0
    %v1964 = vsel %vm481, %v370, 0
    %1966 = vmatprep.subr.mxu0 0.0
    %1967 = vmatpush1.xpose.msra.mxu0 %v1964
    %1968 = vmatprep.subr.mxu0 0.0
    %1969 = vmatpush1.xpose.msra.mxu0 0.0
    %1970 = vmatprep.subr.mxu0 0.0
    %1971 = vmatpush1.xpose.msra.mxu0 0.0
    %1972 = vmatprep.subr.mxu0 0.0
    %1973 = vmatpush1.xpose.msra.mxu0 0.0
    %1974 = vmatprep.subr.mxu0 0.0
    %1975 = vmatpush1.xpose.msra.mxu0 0.0
    %1976 = vmatprep.subr.mxu0 0.0
    %1977 = vmatpush1.xpose.msra.mxu0 0.0
    %1978 = vmatprep.subr.mxu0 0.0
    %1979 = vmatpush1.xpose.msra.mxu0 0.0
    %1980 = vmatprep.subr.mxu0 0.0
    %1981 = vmatpush1.xpose.msra.mxu0 0.0
    %1982 = vmatprep.subr.mxu0 0.0
    %1983 = vmatpush1.xpose.msra.mxu0 0.0
    %1984 = vmatprep.subr.mxu0 0.0
    %1985 = vmatpush1.xpose.msra.mxu0 0.0
    %1986 = vmatprep.subr.mxu0 0.0
    %1987 = vmatpush1.xpose.msra.mxu0 0.0
    %1988 = vmatprep.subr.mxu0 0.0
    %1989 = vmatpush1.xpose.msra.mxu0 0.0
    %1990 = vmatprep.subr.mxu0 0.0
    %1991 = vmatpush1.xpose.msra.mxu0 0.0
    %1992 = vmatprep.subr.mxu0 0.0
    %1993 = vmatpush1.xpose.msra.mxu0 0.0
    %1994 = vmatprep.subr.mxu0 0.0
    %1995 = vmatpush1.xpose.msra.mxu0 0.0
    %1996 = vmatprep.subr.mxu0 0.0
    %1997 = vmatpush1.xpose.msra.mxu0 0.0
    %1998 = vmatprep.subr.mxu0 0.0
    %1999 = vmatpush1.xpose.msra.mxu0 0.0
    %2000 = vmatprep.subr.mxu0 0.0
    %2001 = vmatpush1.xpose.msra.mxu0 0.0
    %2002 = vmatprep.subr.mxu0 0.0
    %2003 = vmatpush1.xpose.msra.mxu0 0.0
    %2004 = vmatprep.subr.mxu0 0.0
    %2005 = vmatpush1.xpose.msra.mxu0 0.0
    %2006 = vmatprep.subr.mxu0 0.0
    %2007 = vmatpush1.xpose.msra.mxu0 0.0
    %2008 = vmatprep.subr.mxu0 0.0
    %2009 = vmatpush1.xpose.msra.mxu0 0.0
    %2010 = vmatprep.subr.mxu0 0.0
    %2011 = vmatpush1.xpose.msra.mxu0 0.0
    %2012 = vmatprep.subr.mxu0 0.0
    %2013 = vmatpush1.xpose.msra.mxu0 0.0
    %2014 = vmatprep.subr.mxu0 0.0
    %2015 = vmatpush1.xpose.msra.mxu0 0.0
    %2016 = vmatprep.subr.mxu0 0.0
    %2017 = vmatpush1.xpose.msra.mxu0 0.0
    %2018 = vmatprep.subr.mxu0 0.0
    %2019 = vmatpush1.xpose.msra.mxu0 0.0
    %2020 = vmatprep.subr.mxu0 0.0
    %2021 = vmatpush1.xpose.msra.mxu0 0.0
    %2022 = vmatprep.subr.mxu0 0.0
    %2023 = vmatpush1.xpose.msra.mxu0 0.0
    %2024 = vmatprep.subr.mxu0 0.0
    %2025 = vmatpush1.xpose.msra.mxu0 0.0
    %2026 = vmatprep.subr.mxu0 0.0
    %2027 = vmatpush1.xpose.msra.mxu0 0.0
    %2028 = vmatprep.subr.mxu0 0.0
    %2029 = vmatpush1.xpose.msra.mxu0 0.0
    %2030 = vmatprep.mubr.f32.mxu0 0.0
    %2031 = vmatmul.mubr.f32.gmra.mrb[0].mxu0 %v1962
    %v2032 = vpop.f32.mrb[0].mxu0
    %v2033 = vadd.f32 0.0, %v2032
    %v2034 = vpop.f32.mrb[0].mxu0
    %2035 = vdwg.mxu0
    %v2036 = vsel %vm481, %v312, 0
    %v2038 = vsel %vm481, %v372, 0
    %2040 = vmatprep.subr.mxu0 0.0
    %2041 = vmatpush1.xpose.msra.mxu0 %v2038
    %2042 = vmatprep.subr.mxu0 0.0
    %2043 = vmatpush1.xpose.msra.mxu0 0.0
    %2044 = vmatprep.subr.mxu0 0.0
    %2045 = vmatpush1.xpose.msra.mxu0 0.0
    %2046 = vmatprep.subr.mxu0 0.0
    %2047 = vmatpush1.xpose.msra.mxu0 0.0
    %2048 = vmatprep.subr.mxu0 0.0
    %2049 = vmatpush1.xpose.msra.mxu0 0.0
    %2050 = vmatprep.subr.mxu0 0.0
    %2051 = vmatpush1.xpose.msra.mxu0 0.0
    %2052 = vmatprep.subr.mxu0 0.0
    %2053 = vmatpush1.xpose.msra.mxu0 0.0
    %2054 = vmatprep.subr.mxu0 0.0
    %2055 = vmatpush1.xpose.msra.mxu0 0.0
    %2056 = vmatprep.subr.mxu0 0.0
    %2057 = vmatpush1.xpose.msra.mxu0 0.0
    %2058 = vmatprep.subr.mxu0 0.0
    %2059 = vmatpush1.xpose.msra.mxu0 0.0
    %2060 = vmatprep.subr.mxu0 0.0
    %2061 = vmatpush1.xpose.msra.mxu0 0.0
    %2062 = vmatprep.subr.mxu0 0.0
    %2063 = vmatpush1.xpose.msra.mxu0 0.0
    %2064 = vmatprep.subr.mxu0 0.0
    %2065 = vmatpush1.xpose.msra.mxu0 0.0
    %2066 = vmatprep.subr.mxu0 0.0
    %2067 = vmatpush1.xpose.msra.mxu0 0.0
    %2068 = vmatprep.subr.mxu0 0.0
    %2069 = vmatpush1.xpose.msra.mxu0 0.0
    %2070 = vmatprep.subr.mxu0 0.0
    %2071 = vmatpush1.xpose.msra.mxu0 0.0
    %2072 = vmatprep.subr.mxu0 0.0
    %2073 = vmatpush1.xpose.msra.mxu0 0.0
    %2074 = vmatprep.subr.mxu0 0.0
    %2075 = vmatpush1.xpose.msra.mxu0 0.0
    %2076 = vmatprep.subr.mxu0 0.0
    %2077 = vmatpush1.xpose.msra.mxu0 0.0
    %2078 = vmatprep.subr.mxu0 0.0
    %2079 = vmatpush1.xpose.msra.mxu0 0.0
    %2080 = vmatprep.subr.mxu0 0.0
    %2081 = vmatpush1.xpose.msra.mxu0 0.0
    %2082 = vmatprep.subr.mxu0 0.0
    %2083 = vmatpush1.xpose.msra.mxu0 0.0
    %2084 = vmatprep.subr.mxu0 0.0
    %2085 = vmatpush1.xpose.msra.mxu0 0.0
    %2086 = vmatprep.subr.mxu0 0.0
    %2087 = vmatpush1.xpose.msra.mxu0 0.0
    %2088 = vmatprep.subr.mxu0 0.0
    %2089 = vmatpush1.xpose.msra.mxu0 0.0
    %2090 = vmatprep.subr.mxu0 0.0
    %2091 = vmatpush1.xpose.msra.mxu0 0.0
    %2092 = vmatprep.subr.mxu0 0.0
    %2093 = vmatpush1.xpose.msra.mxu0 0.0
    %2094 = vmatprep.subr.mxu0 0.0
    %2095 = vmatpush1.xpose.msra.mxu0 0.0
    %2096 = vmatprep.subr.mxu0 0.0
    %2097 = vmatpush1.xpose.msra.mxu0 0.0
    %2098 = vmatprep.subr.mxu0 0.0
    %2099 = vmatpush1.xpose.msra.mxu0 0.0
    %2100 = vmatprep.subr.mxu0 0.0
    %2101 = vmatpush1.xpose.msra.mxu0 0.0
    %2102 = vmatprep.subr.mxu0 0.0
    %2103 = vmatpush1.xpose.msra.mxu0 0.0
    %2104 = vmatprep.mubr.f32.mxu0 0.0
    %2105 = vmatmul.mubr.f32.gmra.mrb[0].mxu0 %v2036
    %v2106 = vpop.f32.mrb[0].mxu0
    %v2107 = vadd.f32 0.0, %v2106
    %v2108 = vpop.f32.mrb[0].mxu0
    %2109 = vdwg.mxu0
    %v2110 = vsel %vm481, %v314, 0
    %v2112 = vsel %vm481, %v374, 0
    %2114 = vmatprep.subr.mxu0 0.0
    %2115 = vmatpush1.xpose.msra.mxu0 %v2112
    %2116 = vmatprep.subr.mxu0 0.0
    %2117 = vmatpush1.xpose.msra.mxu0 0.0
    %2118 = vmatprep.subr.mxu0 0.0
    %2119 = vmatpush1.xpose.msra.mxu0 0.0
    %2120 = vmatprep.subr.mxu0 0.0
    %2121 = vmatpush1.xpose.msra.mxu0 0.0
    %2122 = vmatprep.subr.mxu0 0.0
    %2123 = vmatpush1.xpose.msra.mxu0 0.0
    %2124 = vmatprep.subr.mxu0 0.0
    %2125 = vmatpush1.xpose.msra.mxu0 0.0
    %2126 = vmatprep.subr.mxu0 0.0
    %2127 = vmatpush1.xpose.msra.mxu0 0.0
    %2128 = vmatprep.subr.mxu0 0.0
    %2129 = vmatpush1.xpose.msra.mxu0 0.0
    %2130 = vmatprep.subr.mxu0 0.0
    %2131 = vmatpush1.xpose.msra.mxu0 0.0
    %2132 = vmatprep.subr.mxu0 0.0
    %2133 = vmatpush1.xpose.msra.mxu0 0.0
    %2134 = vmatprep.subr.mxu0 0.0
    %2135 = vmatpush1.xpose.msra.mxu0 0.0
    %2136 = vmatprep.subr.mxu0 0.0
    %2137 = vmatpush1.xpose.msra.mxu0 0.0
    %2138 = vmatprep.subr.mxu0 0.0
    %2139 = vmatpush1.xpose.msra.mxu0 0.0
    %2140 = vmatprep.subr.mxu0 0.0
    %2141 = vmatpush1.xpose.msra.mxu0 0.0
    %2142 = vmatprep.subr.mxu0 0.0
    %2143 = vmatpush1.xpose.msra.mxu0 0.0
    %2144 = vmatprep.subr.mxu0 0.0
    %2145 = vmatpush1.xpose.msra.mxu0 0.0
    %2146 = vmatprep.subr.mxu0 0.0
    %2147 = vmatpush1.xpose.msra.mxu0 0.0
    %2148 = vmatprep.subr.mxu0 0.0
    %2149 = vmatpush1.xpose.msra.mxu0 0.0
    %2150 = vmatprep.subr.mxu0 0.0
    %2151 = vmatpush1.xpose.msra.mxu0 0.0
    %2152 = vmatprep.subr.mxu0 0.0
    %2153 = vmatpush1.xpose.msra.mxu0 0.0
    %2154 = vmatprep.subr.mxu0 0.0
    %2155 = vmatpush1.xpose.msra.mxu0 0.0
    %2156 = vmatprep.subr.mxu0 0.0
    %2157 = vmatpush1.xpose.msra.mxu0 0.0
    %2158 = vmatprep.subr.mxu0 0.0
    %2159 = vmatpush1.xpose.msra.mxu0 0.0
    %2160 = vmatprep.subr.mxu0 0.0
    %2161 = vmatpush1.xpose.msra.mxu0 0.0
    %2162 = vmatprep.subr.mxu0 0.0
    %2163 = vmatpush1.xpose.msra.mxu0 0.0
    %2164 = vmatprep.subr.mxu0 0.0
    %2165 = vmatpush1.xpose.msra.mxu0 0.0
    %2166 = vmatprep.subr.mxu0 0.0
    %2167 = vmatpush1.xpose.msra.mxu0 0.0
    %2168 = vmatprep.subr.mxu0 0.0
    %2169 = vmatpush1.xpose.msra.mxu0 0.0
    %2170 = vmatprep.subr.mxu0 0.0
    %2171 = vmatpush1.xpose.msra.mxu0 0.0
    %2172 = vmatprep.subr.mxu0 0.0
    %2173 = vmatpush1.xpose.msra.mxu0 0.0
    %2174 = vmatprep.subr.mxu0 0.0
    %2175 = vmatpush1.xpose.msra.mxu0 0.0
    %2176 = vmatprep.subr.mxu0 0.0
    %2177 = vmatpush1.xpose.msra.mxu0 0.0
    %2178 = vmatprep.mubr.f32.mxu0 0.0
    %2179 = vmatmul.mubr.f32.gmra.mrb[0].mxu0 %v2110
    %v2180 = vpop.f32.mrb[0].mxu0
    %v2181 = vadd.f32 0.0, %v2180
    %v2182 = vpop.f32.mrb[0].mxu0
    %2183 = vdwg.mxu0
    %v2184 = vsel %vm481, %v316, 0
    %v2186 = vsel %vm481, %v376, 0
    %2188 = vmatprep.subr.mxu0 0.0
    %2189 = vmatpush1.xpose.msra.mxu0 %v2186
    %2190 = vmatprep.subr.mxu0 0.0
    %2191 = vmatpush1.xpose.msra.mxu0 0.0
    %2192 = vmatprep.subr.mxu0 0.0
    %2193 = vmatpush1.xpose.msra.mxu0 0.0
    %2194 = vmatprep.subr.mxu0 0.0
    %2195 = vmatpush1.xpose.msra.mxu0 0.0
    %2196 = vmatprep.subr.mxu0 0.0
    %2197 = vmatpush1.xpose.msra.mxu0 0.0
    %2198 = vmatprep.subr.mxu0 0.0
    %2199 = vmatpush1.xpose.msra.mxu0 0.0
    %2200 = vmatprep.subr.mxu0 0.0
    %2201 = vmatpush1.xpose.msra.mxu0 0.0
    %2202 = vmatprep.subr.mxu0 0.0
    %2203 = vmatpush1.xpose.msra.mxu0 0.0
    %2204 = vmatprep.subr.mxu0 0.0
    %2205 = vmatpush1.xpose.msra.mxu0 0.0
    %2206 = vmatprep.subr.mxu0 0.0
    %2207 = vmatpush1.xpose.msra.mxu0 0.0
    %2208 = vmatprep.subr.mxu0 0.0
    %2209 = vmatpush1.xpose.msra.mxu0 0.0
    %2210 = vmatprep.subr.mxu0 0.0
    %2211 = vmatpush1.xpose.msra.mxu0 0.0
    %2212 = vmatprep.subr.mxu0 0.0
    %2213 = vmatpush1.xpose.msra.mxu0 0.0
    %2214 = vmatprep.subr.mxu0 0.0
    %2215 = vmatpush1.xpose.msra.mxu0 0.0
    %2216 = vmatprep.subr.mxu0 0.0
    %2217 = vmatpush1.xpose.msra.mxu0 0.0
    %2218 = vmatprep.subr.mxu0 0.0
    %2219 = vmatpush1.xpose.msra.mxu0 0.0
    %2220 = vmatprep.subr.mxu0 0.0
    %2221 = vmatpush1.xpose.msra.mxu0 0.0
    %2222 = vmatprep.subr.mxu0 0.0
    %2223 = vmatpush1.xpose.msra.mxu0 0.0
    %2224 = vmatprep.subr.mxu0 0.0
    %2225 = vmatpush1.xpose.msra.mxu0 0.0
    %2226 = vmatprep.subr.mxu0 0.0
    %2227 = vmatpush1.xpose.msra.mxu0 0.0
    %2228 = vmatprep.subr.mxu0 0.0
    %2229 = vmatpush1.xpose.msra.mxu0 0.0
    %2230 = vmatprep.subr.mxu0 0.0
    %2231 = vmatpush1.xpose.msra.mxu0 0.0
    %2232 = vmatprep.subr.mxu0 0.0
    %2233 = vmatpush1.xpose.msra.mxu0 0.0
    %2234 = vmatprep.subr.mxu0 0.0
    %2235 = vmatpush1.xpose.msra.mxu0 0.0
    %2236 = vmatprep.subr.mxu0 0.0
    %2237 = vmatpush1.xpose.msra.mxu0 0.0
    %2238 = vmatprep.subr.mxu0 0.0
    %2239 = vmatpush1.xpose.msra.mxu0 0.0
    %2240 = vmatprep.subr.mxu0 0.0
    %2241 = vmatpush1.xpose.msra.mxu0 0.0
    %2242 = vmatprep.subr.mxu0 0.0
    %2243 = vmatpush1.xpose.msra.mxu0 0.0
    %2244 = vmatprep.subr.mxu0 0.0
    %2245 = vmatpush1.xpose.msra.mxu0 0.0
    %2246 = vmatprep.subr.mxu0 0.0
    %2247 = vmatpush1.xpose.msra.mxu0 0.0
    %2248 = vmatprep.subr.mxu0 0.0
    %2249 = vmatpush1.xpose.msra.mxu0 0.0
    %2250 = vmatprep.subr.mxu0 0.0
    %2251 = vmatpush1.xpose.msra.mxu0 0.0
    %2252 = vmatprep.mubr.f32.mxu0 0.0
    %2253 = vmatmul.mubr.f32.gmra.mrb[0].mxu0 %v2184
    %v2254 = vpop.f32.mrb[0].mxu0
    %v2255 = vadd.f32 0.0, %v2254
    %v2256 = vpop.f32.mrb[0].mxu0
    %2257 = vdwg.mxu0
    %v2258 = vsel %vm481, %v318, 0
    %v2260 = vsel %vm481, %v378, 0
    %2262 = vmatprep.subr.mxu0 0.0
    %2263 = vmatpush1.xpose.msra.mxu0 %v2260
    %2264 = vmatprep.subr.mxu0 0.0
    %2265 = vmatpush1.xpose.msra.mxu0 0.0
    %2266 = vmatprep.subr.mxu0 0.0
    %2267 = vmatpush1.xpose.msra.mxu0 0.0
    %2268 = vmatprep.subr.mxu0 0.0
    %2269 = vmatpush1.xpose.msra.mxu0 0.0
    %2270 = vmatprep.subr.mxu0 0.0
    %2271 = vmatpush1.xpose.msra.mxu0 0.0
    %2272 = vmatprep.subr.mxu0 0.0
    %2273 = vmatpush1.xpose.msra.mxu0 0.0
    %2274 = vmatprep.subr.mxu0 0.0
    %2275 = vmatpush1.xpose.msra.mxu0 0.0
    %2276 = vmatprep.subr.mxu0 0.0
    %2277 = vmatpush1.xpose.msra.mxu0 0.0
    %2278 = vmatprep.subr.mxu0 0.0
    %2279 = vmatpush1.xpose.msra.mxu0 0.0
    %2280 = vmatprep.subr.mxu0 0.0
    %2281 = vmatpush1.xpose.msra.mxu0 0.0
    %2282 = vmatprep.subr.mxu0 0.0
    %2283 = vmatpush1.xpose.msra.mxu0 0.0
    %2284 = vmatprep.subr.mxu0 0.0
    %2285 = vmatpush1.xpose.msra.mxu0 0.0
    %2286 = vmatprep.subr.mxu0 0.0
    %2287 = vmatpush1.xpose.msra.mxu0 0.0
    %2288 = vmatprep.subr.mxu0 0.0
    %2289 = vmatpush1.xpose.msra.mxu0 0.0
    %2290 = vmatprep.subr.mxu0 0.0
    %2291 = vmatpush1.xpose.msra.mxu0 0.0
    %2292 = vmatprep.subr.mxu0 0.0
    %2293 = vmatpush1.xpose.msra.mxu0 0.0
    %2294 = vmatprep.subr.mxu0 0.0
    %2295 = vmatpush1.xpose.msra.mxu0 0.0
    %2296 = vmatprep.subr.mxu0 0.0
    %2297 = vmatpush1.xpose.msra.mxu0 0.0
    %2298 = vmatprep.subr.mxu0 0.0
    %2299 = vmatpush1.xpose.msra.mxu0 0.0
    %2300 = vmatprep.subr.mxu0 0.0
    %2301 = vmatpush1.xpose.msra.mxu0 0.0
    %2302 = vmatprep.subr.mxu0 0.0
    %2303 = vmatpush1.xpose.msra.mxu0 0.0
    %2304 = vmatprep.subr.mxu0 0.0
    %2305 = vmatpush1.xpose.msra.mxu0 0.0
    %2306 = vmatprep.subr.mxu0 0.0
    %2307 = vmatpush1.xpose.msra.mxu0 0.0
    %2308 = vmatprep.subr.mxu0 0.0
    %2309 = vmatpush1.xpose.msra.mxu0 0.0
    %2310 = vmatprep.subr.mxu0 0.0
    %2311 = vmatpush1.xpose.msra.mxu0 0.0
    %2312 = vmatprep.subr.mxu0 0.0
    %2313 = vmatpush1.xpose.msra.mxu0 0.0
    %2314 = vmatprep.subr.mxu0 0.0
    %2315 = vmatpush1.xpose.msra.mxu0 0.0
    %2316 = vmatprep.subr.mxu0 0.0
    %2317 = vmatpush1.xpose.msra.mxu0 0.0
    %2318 = vmatprep.subr.mxu0 0.0
    %2319 = vmatpush1.xpose.msra.mxu0 0.0
    %2320 = vmatprep.subr.mxu0 0.0
    %2321 = vmatpush1.xpose.msra.mxu0 0.0
    %2322 = vmatprep.subr.mxu0 0.0
    %2323 = vmatpush1.xpose.msra.mxu0 0.0
    %2324 = vmatprep.subr.mxu0 0.0
    %2325 = vmatpush1.xpose.msra.mxu0 0.0
    %2326 = vmatprep.mubr.f32.mxu0 0.0
    %2327 = vmatmul.mubr.f32.gmra.mrb[0].mxu0 %v2258
    %v2328 = vpop.f32.mrb[0].mxu0
    %v2329 = vadd.f32 0.0, %v2328
    %v2330 = vpop.f32.mrb[0].mxu0
    %2331 = vdwg.mxu0
    %v2332 = vsel %vm481, %v320, 0
    %v2334 = vsel %vm481, %v380, 0
    %2336 = vmatprep.subr.mxu0 0.0
    %2337 = vmatpush1.xpose.msra.mxu0 %v2334
    %2338 = vmatprep.subr.mxu0 0.0
    %2339 = vmatpush1.xpose.msra.mxu0 0.0
    %2340 = vmatprep.subr.mxu0 0.0
    %2341 = vmatpush1.xpose.msra.mxu0 0.0
    %2342 = vmatprep.subr.mxu0 0.0
    %2343 = vmatpush1.xpose.msra.mxu0 0.0
    %2344 = vmatprep.subr.mxu0 0.0
    %2345 = vmatpush1.xpose.msra.mxu0 0.0
    %2346 = vmatprep.subr.mxu0 0.0
    %2347 = vmatpush1.xpose.msra.mxu0 0.0
    %2348 = vmatprep.subr.mxu0 0.0
    %2349 = vmatpush1.xpose.msra.mxu0 0.0
    %2350 = vmatprep.subr.mxu0 0.0
    %2351 = vmatpush1.xpose.msra.mxu0 0.0
    %2352 = vmatprep.subr.mxu0 0.0
    %2353 = vmatpush1.xpose.msra.mxu0 0.0
    %2354 = vmatprep.subr.mxu0 0.0
    %2355 = vmatpush1.xpose.msra.mxu0 0.0
    %2356 = vmatprep.subr.mxu0 0.0
    %2357 = vmatpush1.xpose.msra.mxu0 0.0
    %2358 = vmatprep.subr.mxu0 0.0
    %2359 = vmatpush1.xpose.msra.mxu0 0.0
    %2360 = vmatprep.subr.mxu0 0.0
    %2361 = vmatpush1.xpose.msra.mxu0 0.0
    %2362 = vmatprep.subr.mxu0 0.0
    %2363 = vmatpush1.xpose.msra.mxu0 0.0
    %2364 = vmatprep.subr.mxu0 0.0
    %2365 = vmatpush1.xpose.msra.mxu0 0.0
    %2366 = vmatprep.subr.mxu0 0.0
    %2367 = vmatpush1.xpose.msra.mxu0 0.0
    %2368 = vmatprep.subr.mxu0 0.0
    %2369 = vmatpush1.xpose.msra.mxu0 0.0
    %2370 = vmatprep.subr.mxu0 0.0
    %2371 = vmatpush1.xpose.msra.mxu0 0.0
    %2372 = vmatprep.subr.mxu0 0.0
    %2373 = vmatpush1.xpose.msra.mxu0 0.0
    %2374 = vmatprep.subr.mxu0 0.0
    %2375 = vmatpush1.xpose.msra.mxu0 0.0
    %2376 = vmatprep.subr.mxu0 0.0
    %2377 = vmatpush1.xpose.msra.mxu0 0.0
    %2378 = vmatprep.subr.mxu0 0.0
    %2379 = vmatpush1.xpose.msra.mxu0 0.0
    %2380 = vmatprep.subr.mxu0 0.0
    %2381 = vmatpush1.xpose.msra.mxu0 0.0
    %2382 = vmatprep.subr.mxu0 0.0
    %2383 = vmatpush1.xpose.msra.mxu0 0.0
    %2384 = vmatprep.subr.mxu0 0.0
    %2385 = vmatpush1.xpose.msra.mxu0 0.0
    %2386 = vmatprep.subr.mxu0 0.0
    %2387 = vmatpush1.xpose.msra.mxu0 0.0
    %2388 = vmatprep.subr.mxu0 0.0
    %2389 = vmatpush1.xpose.msra.mxu0 0.0
    %2390 = vmatprep.subr.mxu0 0.0
    %2391 = vmatpush1.xpose.msra.mxu0 0.0
    %2392 = vmatprep.subr.mxu0 0.0
    %2393 = vmatpush1.xpose.msra.mxu0 0.0
    %2394 = vmatprep.subr.mxu0 0.0
    %2395 = vmatpush1.xpose.msra.mxu0 0.0
    %2396 = vmatprep.subr.mxu0 0.0
    %2397 = vmatpush1.xpose.msra.mxu0 0.0
    %2398 = vmatprep.subr.mxu0 0.0
    %2399 = vmatpush1.xpose.msra.mxu0 0.0
    %2400 = vmatprep.mubr.f32.mxu0 0.0
    %2401 = vmatmul.mubr.f32.gmra.mrb[0].mxu0 %v2332
    %v2402 = vpop.f32.mrb[0].mxu0
    %v2403 = vadd.f32 0.0, %v2402
    %v2404 = vpop.f32.mrb[0].mxu0
    %2405 = vdwg.mxu0
    %v2406 = vsel %vm481, %v322, 0
    %v2408 = vsel %vm481, %v382, 0
    %2410 = vmatprep.subr.mxu0 0.0
    %2411 = vmatpush1.xpose.msra.mxu0 %v2408
    %2412 = vmatprep.subr.mxu0 0.0
    %2413 = vmatpush1.xpose.msra.mxu0 0.0
    %2414 = vmatprep.subr.mxu0 0.0
    %2415 = vmatpush1.xpose.msra.mxu0 0.0
    %2416 = vmatprep.subr.mxu0 0.0
    %2417 = vmatpush1.xpose.msra.mxu0 0.0
    %2418 = vmatprep.subr.mxu0 0.0
    %2419 = vmatpush1.xpose.msra.mxu0 0.0
    %2420 = vmatprep.subr.mxu0 0.0
    %2421 = vmatpush1.xpose.msra.mxu0 0.0
    %2422 = vmatprep.subr.mxu0 0.0
    %2423 = vmatpush1.xpose.msra.mxu0 0.0
    %2424 = vmatprep.subr.mxu0 0.0
    %2425 = vmatpush1.xpose.msra.mxu0 0.0
    %2426 = vmatprep.subr.mxu0 0.0
    %2427 = vmatpush1.xpose.msra.mxu0 0.0
    %2428 = vmatprep.subr.mxu0 0.0
    %2429 = vmatpush1.xpose.msra.mxu0 0.0
    %2430 = vmatprep.subr.mxu0 0.0
    %2431 = vmatpush1.xpose.msra.mxu0 0.0
    %2432 = vmatprep.subr.mxu0 0.0
    %2433 = vmatpush1.xpose.msra.mxu0 0.0
    %2434 = vmatprep.subr.mxu0 0.0
    %2435 = vmatpush1.xpose.msra.mxu0 0.0
    %2436 = vmatprep.subr.mxu0 0.0
    %2437 = vmatpush1.xpose.msra.mxu0 0.0
    %2438 = vmatprep.subr.mxu0 0.0
    %2439 = vmatpush1.xpose.msra.mxu0 0.0
    %2440 = vmatprep.subr.mxu0 0.0
    %2441 = vmatpush1.xpose.msra.mxu0 0.0
    %2442 = vmatprep.subr.mxu0 0.0
    %2443 = vmatpush1.xpose.msra.mxu0 0.0
    %2444 = vmatprep.subr.mxu0 0.0
    %2445 = vmatpush1.xpose.msra.mxu0 0.0
    %2446 = vmatprep.subr.mxu0 0.0
    %2447 = vmatpush1.xpose.msra.mxu0 0.0
    %2448 = vmatprep.subr.mxu0 0.0
    %2449 = vmatpush1.xpose.msra.mxu0 0.0
    %2450 = vmatprep.subr.mxu0 0.0
    %2451 = vmatpush1.xpose.msra.mxu0 0.0
    %2452 = vmatprep.subr.mxu0 0.0
    %2453 = vmatpush1.xpose.msra.mxu0 0.0
    %2454 = vmatprep.subr.mxu0 0.0
    %2455 = vmatpush1.xpose.msra.mxu0 0.0
    %2456 = vmatprep.subr.mxu0 0.0
    %2457 = vmatpush1.xpose.msra.mxu0 0.0
    %2458 = vmatprep.subr.mxu0 0.0
    %2459 = vmatpush1.xpose.msra.mxu0 0.0
    %2460 = vmatprep.subr.mxu0 0.0
    %2461 = vmatpush1.xpose.msra.mxu0 0.0
    %2462 = vmatprep.subr.mxu0 0.0
    %2463 = vmatpush1.xpose.msra.mxu0 0.0
    %2464 = vmatprep.subr.mxu0 0.0
    %2465 = vmatpush1.xpose.msra.mxu0 0.0
    %2466 = vmatprep.subr.mxu0 0.0
    %2467 = vmatpush1.xpose.msra.mxu0 0.0
    %2468 = vmatprep.subr.mxu0 0.0
    %2469 = vmatpush1.xpose.msra.mxu0 0.0
    %2470 = vmatprep.subr.mxu0 0.0
    %2471 = vmatpush1.xpose.msra.mxu0 0.0
    %2472 = vmatprep.subr.mxu0 0.0
    %2473 = vmatpush1.xpose.msra.mxu0 0.0
    %2474 = vmatprep.mubr.f32.mxu0 0.0
    %2475 = vmatmul.mubr.f32.gmra.mrb[0].mxu0 %v2406
    %v2476 = vpop.f32.mrb[0].mxu0
    %v2477 = vadd.f32 0.0, %v2476
    %v2478 = vpop.f32.mrb[0].mxu0
    %2479 = vdwg.mxu0
    %v2480 = vsel %vm481, %v324, 0
    %v2482 = vsel %vm481, %v384, 0
    %2484 = vmatprep.subr.mxu0 0.0
    %2485 = vmatpush1.xpose.msra.mxu0 %v2482
    %2486 = vmatprep.subr.mxu0 0.0
    %2487 = vmatpush1.xpose.msra.mxu0 0.0
    %2488 = vmatprep.subr.mxu0 0.0
    %2489 = vmatpush1.xpose.msra.mxu0 0.0
    %2490 = vmatprep.subr.mxu0 0.0
    %2491 = vmatpush1.xpose.msra.mxu0 0.0
    %2492 = vmatprep.subr.mxu0 0.0
    %2493 = vmatpush1.xpose.msra.mxu0 0.0
    %2494 = vmatprep.subr.mxu0 0.0
    %2495 = vmatpush1.xpose.msra.mxu0 0.0
    %2496 = vmatprep.subr.mxu0 0.0
    %2497 = vmatpush1.xpose.msra.mxu0 0.0
    %2498 = vmatprep.subr.mxu0 0.0
    %2499 = vmatpush1.xpose.msra.mxu0 0.0
    %2500 = vmatprep.subr.mxu0 0.0
    %2501 = vmatpush1.xpose.msra.mxu0 0.0
    %2502 = vmatprep.subr.mxu0 0.0
    %2503 = vmatpush1.xpose.msra.mxu0 0.0
    %2504 = vmatprep.subr.mxu0 0.0
    %2505 = vmatpush1.xpose.msra.mxu0 0.0
    %2506 = vmatprep.subr.mxu0 0.0
    %2507 = vmatpush1.xpose.msra.mxu0 0.0
    %2508 = vmatprep.subr.mxu0 0.0
    %2509 = vmatpush1.xpose.msra.mxu0 0.0
    %2510 = vmatprep.subr.mxu0 0.0
    %2511 = vmatpush1.xpose.msra.mxu0 0.0
    %2512 = vmatprep.subr.mxu0 0.0
    %2513 = vmatpush1.xpose.msra.mxu0 0.0
    %2514 = vmatprep.subr.mxu0 0.0
    %2515 = vmatpush1.xpose.msra.mxu0 0.0
    %2516 = vmatprep.subr.mxu0 0.0
    %2517 = vmatpush1.xpose.msra.mxu0 0.0
    %2518 = vmatprep.subr.mxu0 0.0
    %2519 = vmatpush1.xpose.msra.mxu0 0.0
    %2520 = vmatprep.subr.mxu0 0.0
    %2521 = vmatpush1.xpose.msra.mxu0 0.0
    %2522 = vmatprep.subr.mxu0 0.0
    %2523 = vmatpush1.xpose.msra.mxu0 0.0
    %2524 = vmatprep.subr.mxu0 0.0
    %2525 = vmatpush1.xpose.msra.mxu0 0.0
    %2526 = vmatprep.subr.mxu0 0.0
    %2527 = vmatpush1.xpose.msra.mxu0 0.0
    %2528 = vmatprep.subr.mxu0 0.0
    %2529 = vmatpush1.xpose.msra.mxu0 0.0
    %2530 = vmatprep.subr.mxu0 0.0
    %2531 = vmatpush1.xpose.msra.mxu0 0.0
    %2532 = vmatprep.subr.mxu0 0.0
    %2533 = vmatpush1.xpose.msra.mxu0 0.0
    %2534 = vmatprep.subr.mxu0 0.0
    %2535 = vmatpush1.xpose.msra.mxu0 0.0
    %2536 = vmatprep.subr.mxu0 0.0
    %2537 = vmatpush1.xpose.msra.mxu0 0.0
    %2538 = vmatprep.subr.mxu0 0.0
    %2539 = vmatpush1.xpose.msra.mxu0 0.0
    %2540 = vmatprep.subr.mxu0 0.0
    %2541 = vmatpush1.xpose.msra.mxu0 0.0
    %2542 = vmatprep.subr.mxu0 0.0
    %2543 = vmatpush1.xpose.msra.mxu0 0.0
    %2544 = vmatprep.subr.mxu0 0.0
    %2545 = vmatpush1.xpose.msra.mxu0 0.0
    %2546 = vmatprep.subr.mxu0 0.0
    %2547 = vmatpush1.xpose.msra.mxu0 0.0
    %2548 = vmatprep.mubr.f32.mxu0 0.0
    %2549 = vmatmul.mubr.f32.gmra.mrb[0].mxu0 %v2480
    %v2550 = vpop.f32.mrb[0].mxu0
    %v2551 = vadd.f32 0.0, %v2550
    %v2552 = vpop.f32.mrb[0].mxu0
    %2553 = vdwg.mxu0
    %v2554 = vsel %vm481, %v326, 0
    %v2556 = vsel %vm481, %v386, 0
    %2558 = vmatprep.subr.mxu0 0.0
    %2559 = vmatpush1.xpose.msra.mxu0 %v2556
    %2560 = vmatprep.subr.mxu0 0.0
    %2561 = vmatpush1.xpose.msra.mxu0 0.0
    %2562 = vmatprep.subr.mxu0 0.0
    %2563 = vmatpush1.xpose.msra.mxu0 0.0
    %2564 = vmatprep.subr.mxu0 0.0
    %2565 = vmatpush1.xpose.msra.mxu0 0.0
    %2566 = vmatprep.subr.mxu0 0.0
    %2567 = vmatpush1.xpose.msra.mxu0 0.0
    %2568 = vmatprep.subr.mxu0 0.0
    %2569 = vmatpush1.xpose.msra.mxu0 0.0
    %2570 = vmatprep.subr.mxu0 0.0
    %2571 = vmatpush1.xpose.msra.mxu0 0.0
    %2572 = vmatprep.subr.mxu0 0.0
    %2573 = vmatpush1.xpose.msra.mxu0 0.0
    %2574 = vmatprep.subr.mxu0 0.0
    %2575 = vmatpush1.xpose.msra.mxu0 0.0
    %2576 = vmatprep.subr.mxu0 0.0
    %2577 = vmatpush1.xpose.msra.mxu0 0.0
    %2578 = vmatprep.subr.mxu0 0.0
    %2579 = vmatpush1.xpose.msra.mxu0 0.0
    %2580 = vmatprep.subr.mxu0 0.0
    %2581 = vmatpush1.xpose.msra.mxu0 0.0
    %2582 = vmatprep.subr.mxu0 0.0
    %2583 = vmatpush1.xpose.msra.mxu0 0.0
    %2584 = vmatprep.subr.mxu0 0.0
    %2585 = vmatpush1.xpose.msra.mxu0 0.0
    %2586 = vmatprep.subr.mxu0 0.0
    %2587 = vmatpush1.xpose.msra.mxu0 0.0
    %2588 = vmatprep.subr.mxu0 0.0
    %2589 = vmatpush1.xpose.msra.mxu0 0.0
    %2590 = vmatprep.subr.mxu0 0.0
    %2591 = vmatpush1.xpose.msra.mxu0 0.0
    %2592 = vmatprep.subr.mxu0 0.0
    %2593 = vmatpush1.xpose.msra.mxu0 0.0
    %2594 = vmatprep.subr.mxu0 0.0
    %2595 = vmatpush1.xpose.msra.mxu0 0.0
    %2596 = vmatprep.subr.mxu0 0.0
    %2597 = vmatpush1.xpose.msra.mxu0 0.0
    %2598 = vmatprep.subr.mxu0 0.0
    %2599 = vmatpush1.xpose.msra.mxu0 0.0
    %2600 = vmatprep.subr.mxu0 0.0
    %2601 = vmatpush1.xpose.msra.mxu0 0.0
    %2602 = vmatprep.subr.mxu0 0.0
    %2603 = vmatpush1.xpose.msra.mxu0 0.0
    %2604 = vmatprep.subr.mxu0 0.0
    %2605 = vmatpush1.xpose.msra.mxu0 0.0
    %2606 = vmatprep.subr.mxu0 0.0
    %2607 = vmatpush1.xpose.msra.mxu0 0.0
    %2608 = vmatprep.subr.mxu0 0.0
    %2609 = vmatpush1.xpose.msra.mxu0 0.0
    %2610 = vmatprep.subr.mxu0 0.0
    %2611 = vmatpush1.xpose.msra.mxu0 0.0
    %2612 = vmatprep.subr.mxu0 0.0
    %2613 = vmatpush1.xpose.msra.mxu0 0.0
    %2614 = vmatprep.subr.mxu0 0.0
    %2615 = vmatpush1.xpose.msra.mxu0 0.0
    %2616 = vmatprep.subr.mxu0 0.0
    %2617 = vmatpush1.xpose.msra.mxu0 0.0
    %2618 = vmatprep.subr.mxu0 0.0
    %2619 = vmatpush1.xpose.msra.mxu0 0.0
    %2620 = vmatprep.subr.mxu0 0.0
    %2621 = vmatpush1.xpose.msra.mxu0 0.0
    %2622 = vmatprep.mubr.f32.mxu0 0.0
    %2623 = vmatmul.mubr.f32.gmra.mrb[0].mxu0 %v2554
    %v2624 = vpop.f32.mrb[0].mxu0
    %v2625 = vadd.f32 0.0, %v2624
    %v2626 = vpop.f32.mrb[0].mxu0
    %2627 = vdwg.mxu0
    %v2628 = vsel %vm481, %v328, 0
    %v2630 = vsel %vm481, %v388, 0
    %2632 = vmatprep.subr.mxu0 0.0
    %2633 = vmatpush1.xpose.msra.mxu0 %v2630
    %2634 = vmatprep.subr.mxu0 0.0
    %2635 = vmatpush1.xpose.msra.mxu0 0.0
    %2636 = vmatprep.subr.mxu0 0.0
    %2637 = vmatpush1.xpose.msra.mxu0 0.0
    %2638 = vmatprep.subr.mxu0 0.0
    %2639 = vmatpush1.xpose.msra.mxu0 0.0
    %2640 = vmatprep.subr.mxu0 0.0
    %2641 = vmatpush1.xpose.msra.mxu0 0.0
    %2642 = vmatprep.subr.mxu0 0.0
    %2643 = vmatpush1.xpose.msra.mxu0 0.0
    %2644 = vmatprep.subr.mxu0 0.0
    %2645 = vmatpush1.xpose.msra.mxu0 0.0
    %2646 = vmatprep.subr.mxu0 0.0
    %2647 = vmatpush1.xpose.msra.mxu0 0.0
    %2648 = vmatprep.subr.mxu0 0.0
    %2649 = vmatpush1.xpose.msra.mxu0 0.0
    %2650 = vmatprep.subr.mxu0 0.0
    %2651 = vmatpush1.xpose.msra.mxu0 0.0
    %2652 = vmatprep.subr.mxu0 0.0
    %2653 = vmatpush1.xpose.msra.mxu0 0.0
    %2654 = vmatprep.subr.mxu0 0.0
    %2655 = vmatpush1.xpose.msra.mxu0 0.0
    %2656 = vmatprep.subr.mxu0 0.0
    %2657 = vmatpush1.xpose.msra.mxu0 0.0
    %2658 = vmatprep.subr.mxu0 0.0
    %2659 = vmatpush1.xpose.msra.mxu0 0.0
    %2660 = vmatprep.subr.mxu0 0.0
    %2661 = vmatpush1.xpose.msra.mxu0 0.0
    %2662 = vmatprep.subr.mxu0 0.0
    %2663 = vmatpush1.xpose.msra.mxu0 0.0
    %2664 = vmatprep.subr.mxu0 0.0
    %2665 = vmatpush1.xpose.msra.mxu0 0.0
    %2666 = vmatprep.subr.mxu0 0.0
    %2667 = vmatpush1.xpose.msra.mxu0 0.0
    %2668 = vmatprep.subr.mxu0 0.0
    %2669 = vmatpush1.xpose.msra.mxu0 0.0
    %2670 = vmatprep.subr.mxu0 0.0
    %2671 = vmatpush1.xpose.msra.mxu0 0.0
    %2672 = vmatprep.subr.mxu0 0.0
    %2673 = vmatpush1.xpose.msra.mxu0 0.0
    %2674 = vmatprep.subr.mxu0 0.0
    %2675 = vmatpush1.xpose.msra.mxu0 0.0
    %2676 = vmatprep.subr.mxu0 0.0
    %2677 = vmatpush1.xpose.msra.mxu0 0.0
    %2678 = vmatprep.subr.mxu0 0.0
    %2679 = vmatpush1.xpose.msra.mxu0 0.0
    %2680 = vmatprep.subr.mxu0 0.0
    %2681 = vmatpush1.xpose.msra.mxu0 0.0
    %2682 = vmatprep.subr.mxu0 0.0
    %2683 = vmatpush1.xpose.msra.mxu0 0.0
    %2684 = vmatprep.subr.mxu0 0.0
    %2685 = vmatpush1.xpose.msra.mxu0 0.0
    %2686 = vmatprep.subr.mxu0 0.0
    %2687 = vmatpush1.xpose.msra.mxu0 0.0
    %2688 = vmatprep.subr.mxu0 0.0
    %2689 = vmatpush1.xpose.msra.mxu0 0.0
    %2690 = vmatprep.subr.mxu0 0.0
    %2691 = vmatpush1.xpose.msra.mxu0 0.0
    %2692 = vmatprep.subr.mxu0 0.0
    %2693 = vmatpush1.xpose.msra.mxu0 0.0
    %2694 = vmatprep.subr.mxu0 0.0
    %2695 = vmatpush1.xpose.msra.mxu0 0.0
    %2696 = vmatprep.mubr.f32.mxu0 0.0
    %2697 = vmatmul.mubr.f32.gmra.mrb[0].mxu0 %v2628
    %v2698 = vpop.f32.mrb[0].mxu0
    %v2699 = vadd.f32 0.0, %v2698
    %v2700 = vpop.f32.mrb[0].mxu0
    %2701 = vdwg.mxu0
    %v2702 = vsel %vm481, %v330, 0
    %v2704 = vsel %vm481, %v390, 0
    %2706 = vmatprep.subr.mxu0 0.0
    %2707 = vmatpush1.xpose.msra.mxu0 %v2704
    %2708 = vmatprep.subr.mxu0 0.0
    %2709 = vmatpush1.xpose.msra.mxu0 0.0
    %2710 = vmatprep.subr.mxu0 0.0
    %2711 = vmatpush1.xpose.msra.mxu0 0.0
    %2712 = vmatprep.subr.mxu0 0.0
    %2713 = vmatpush1.xpose.msra.mxu0 0.0
    %2714 = vmatprep.subr.mxu0 0.0
    %2715 = vmatpush1.xpose.msra.mxu0 0.0
    %2716 = vmatprep.subr.mxu0 0.0
    %2717 = vmatpush1.xpose.msra.mxu0 0.0
    %2718 = vmatprep.subr.mxu0 0.0
    %2719 = vmatpush1.xpose.msra.mxu0 0.0
    %2720 = vmatprep.subr.mxu0 0.0
    %2721 = vmatpush1.xpose.msra.mxu0 0.0
    %2722 = vmatprep.subr.mxu0 0.0
    %2723 = vmatpush1.xpose.msra.mxu0 0.0
    %2724 = vmatprep.subr.mxu0 0.0
    %2725 = vmatpush1.xpose.msra.mxu0 0.0
    %2726 = vmatprep.subr.mxu0 0.0
    %2727 = vmatpush1.xpose.msra.mxu0 0.0
    %2728 = vmatprep.subr.mxu0 0.0
    %2729 = vmatpush1.xpose.msra.mxu0 0.0
    %2730 = vmatprep.subr.mxu0 0.0
    %2731 = vmatpush1.xpose.msra.mxu0 0.0
    %2732 = vmatprep.subr.mxu0 0.0
    %2733 = vmatpush1.xpose.msra.mxu0 0.0
    %2734 = vmatprep.subr.mxu0 0.0
    %2735 = vmatpush1.xpose.msra.mxu0 0.0
    %2736 = vmatprep.subr.mxu0 0.0
    %2737 = vmatpush1.xpose.msra.mxu0 0.0
    %2738 = vmatprep.subr.mxu0 0.0
    %2739 = vmatpush1.xpose.msra.mxu0 0.0
    %2740 = vmatprep.subr.mxu0 0.0
    %2741 = vmatpush1.xpose.msra.mxu0 0.0
    %2742 = vmatprep.subr.mxu0 0.0
    %2743 = vmatpush1.xpose.msra.mxu0 0.0
    %2744 = vmatprep.subr.mxu0 0.0
    %2745 = vmatpush1.xpose.msra.mxu0 0.0
    %2746 = vmatprep.subr.mxu0 0.0
    %2747 = vmatpush1.xpose.msra.mxu0 0.0
    %2748 = vmatprep.subr.mxu0 0.0
    %2749 = vmatpush1.xpose.msra.mxu0 0.0
    %2750 = vmatprep.subr.mxu0 0.0
    %2751 = vmatpush1.xpose.msra.mxu0 0.0
    %2752 = vmatprep.subr.mxu0 0.0
    %2753 = vmatpush1.xpose.msra.mxu0 0.0
    %2754 = vmatprep.subr.mxu0 0.0
    %2755 = vmatpush1.xpose.msra.mxu0 0.0
    %2756 = vmatprep.subr.mxu0 0.0
    %2757 = vmatpush1.xpose.msra.mxu0 0.0
    %2758 = vmatprep.subr.mxu0 0.0
    %2759 = vmatpush1.xpose.msra.mxu0 0.0
    %2760 = vmatprep.subr.mxu0 0.0
    %2761 = vmatpush1.xpose.msra.mxu0 0.0
    %2762 = vmatprep.subr.mxu0 0.0
    %2763 = vmatpush1.xpose.msra.mxu0 0.0
    %2764 = vmatprep.subr.mxu0 0.0
    %2765 = vmatpush1.xpose.msra.mxu0 0.0
    %2766 = vmatprep.subr.mxu0 0.0
    %2767 = vmatpush1.xpose.msra.mxu0 0.0
    %2768 = vmatprep.subr.mxu0 0.0
    %2769 = vmatpush1.xpose.msra.mxu0 0.0
    %2770 = vmatprep.mubr.f32.mxu0 0.0
    %2771 = vmatmul.mubr.f32.gmra.mrb[0].mxu0 %v2702
    %v2772 = vpop.f32.mrb[0].mxu0
    %v2773 = vadd.f32 0.0, %v2772
    %v2774 = vpop.f32.mrb[0].mxu0
    %2775 = vdwg.mxu0
    %v2776 = vsel %vm481, %v332, 0
    %v2778 = vsel %vm481, %v392, 0
    %2780 = vmatprep.subr.mxu0 0.0
    %2781 = vmatpush1.xpose.msra.mxu0 %v2778
    %2782 = vmatprep.subr.mxu0 0.0
    %2783 = vmatpush1.xpose.msra.mxu0 0.0
    %2784 = vmatprep.subr.mxu0 0.0
    %2785 = vmatpush1.xpose.msra.mxu0 0.0
    %2786 = vmatprep.subr.mxu0 0.0
    %2787 = vmatpush1.xpose.msra.mxu0 0.0
    %2788 = vmatprep.subr.mxu0 0.0
    %2789 = vmatpush1.xpose.msra.mxu0 0.0
    %2790 = vmatprep.subr.mxu0 0.0
    %2791 = vmatpush1.xpose.msra.mxu0 0.0
    %2792 = vmatprep.subr.mxu0 0.0
    %2793 = vmatpush1.xpose.msra.mxu0 0.0
    %2794 = vmatprep.subr.mxu0 0.0
    %2795 = vmatpush1.xpose.msra.mxu0 0.0
    %2796 = vmatprep.subr.mxu0 0.0
    %2797 = vmatpush1.xpose.msra.mxu0 0.0
    %2798 = vmatprep.subr.mxu0 0.0
    %2799 = vmatpush1.xpose.msra.mxu0 0.0
    %2800 = vmatprep.subr.mxu0 0.0
    %2801 = vmatpush1.xpose.msra.mxu0 0.0
    %2802 = vmatprep.subr.mxu0 0.0
    %2803 = vmatpush1.xpose.msra.mxu0 0.0
    %2804 = vmatprep.subr.mxu0 0.0
    %2805 = vmatpush1.xpose.msra.mxu0 0.0
    %2806 = vmatprep.subr.mxu0 0.0
    %2807 = vmatpush1.xpose.msra.mxu0 0.0
    %2808 = vmatprep.subr.mxu0 0.0
    %2809 = vmatpush1.xpose.msra.mxu0 0.0
    %2810 = vmatprep.subr.mxu0 0.0
    %2811 = vmatpush1.xpose.msra.mxu0 0.0
    %2812 = vmatprep.subr.mxu0 0.0
    %2813 = vmatpush1.xpose.msra.mxu0 0.0
    %2814 = vmatprep.subr.mxu0 0.0
    %2815 = vmatpush1.xpose.msra.mxu0 0.0
    %2816 = vmatprep.subr.mxu0 0.0
    %2817 = vmatpush1.xpose.msra.mxu0 0.0
    %2818 = vmatprep.subr.mxu0 0.0
    %2819 = vmatpush1.xpose.msra.mxu0 0.0
    %2820 = vmatprep.subr.mxu0 0.0
    %2821 = vmatpush1.xpose.msra.mxu0 0.0
    %2822 = vmatprep.subr.mxu0 0.0
    %2823 = vmatpush1.xpose.msra.mxu0 0.0
    %2824 = vmatprep.subr.mxu0 0.0
    %2825 = vmatpush1.xpose.msra.mxu0 0.0
    %2826 = vmatprep.subr.mxu0 0.0
    %2827 = vmatpush1.xpose.msra.mxu0 0.0
    %2828 = vmatprep.subr.mxu0 0.0
    %2829 = vmatpush1.xpose.msra.mxu0 0.0
    %2830 = vmatprep.subr.mxu0 0.0
    %2831 = vmatpush1.xpose.msra.mxu0 0.0
    %2832 = vmatprep.subr.mxu0 0.0
    %2833 = vmatpush1.xpose.msra.mxu0 0.0
    %2834 = vmatprep.subr.mxu0 0.0
    %2835 = vmatpush1.xpose.msra.mxu0 0.0
    %2836 = vmatprep.subr.mxu0 0.0
    %2837 = vmatpush1.xpose.msra.mxu0 0.0
    %2838 = vmatprep.subr.mxu0 0.0
    %2839 = vmatpush1.xpose.msra.mxu0 0.0
    %2840 = vmatprep.subr.mxu0 0.0
    %2841 = vmatpush1.xpose.msra.mxu0 0.0
    %2842 = vmatprep.subr.mxu0 0.0
    %2843 = vmatpush1.xpose.msra.mxu0 0.0
    %2844 = vmatprep.mubr.f32.mxu0 0.0
    %2845 = vmatmul.mubr.f32.gmra.mrb[0].mxu0 %v2776
    %v2846 = vpop.f32.mrb[0].mxu0
    %v2847 = vadd.f32 0.0, %v2846
    %v2848 = vpop.f32.mrb[0].mxu0
    %2849 = vdwg.mxu0
    %vm2850 = vcmask 64512
    %v2851 = vsel %vm2850, %v553, -inf
    %2852 = vmax.xlane.f32.xlu0 %v2851
    %v2853 = vpop.xlane.xlu0 %2852
    %v2854 = vsel %vm2850, %v627, -inf
    %2855 = vmax.xlane.f32.xlu0 %v2854
    %v2856 = vpop.xlane.xlu0 %2855
    %v2857 = vsel %vm2850, %v701, -inf
    %2858 = vmax.xlane.f32.xlu0 %v2857
    %v2859 = vpop.xlane.xlu0 %2858
    %v2860 = vsel %vm2850, %v775, -inf
    %2861 = vmax.xlane.f32.xlu0 %v2860
    %v2862 = vpop.xlane.xlu0 %2861
    %v2863 = vsel %vm2850, %v849, -inf
    %2864 = vmax.xlane.f32.xlu0 %v2863
    %v2865 = vpop.xlane.xlu0 %2864
    %v2866 = vsel %vm2850, %v923, -inf
    %2867 = vmax.xlane.f32.xlu0 %v2866
    %v2868 = vpop.xlane.xlu0 %2867
    %v2869 = vsel %vm2850, %v997, -inf
    %2870 = vmax.xlane.f32.xlu0 %v2869
    %v2871 = vpop.xlane.xlu0 %2870
    %v2872 = vsel %vm2850, %v1071, -inf
    %2873 = vmax.xlane.f32.xlu0 %v2872
    %v2874 = vpop.xlane.xlu0 %2873
    %v2875 = vsel %vm2850, %v1145, -inf
    %2876 = vmax.xlane.f32.xlu0 %v2875
    %v2877 = vpop.xlane.xlu0 %2876
    %v2878 = vsel %vm2850, %v1219, -inf
    %2879 = vmax.xlane.f32.xlu0 %v2878
    %v2880 = vpop.xlane.xlu0 %2879
    %v2881 = vsel %vm2850, %v1293, -inf
    %2882 = vmax.xlane.f32.xlu0 %v2881
    %v2883 = vpop.xlane.xlu0 %2882
    %v2884 = vsel %vm2850, %v1367, -inf
    %2885 = vmax.xlane.f32.xlu0 %v2884
    %v2886 = vpop.xlane.xlu0 %2885
    %v2887 = vsel %vm2850, %v1441, -inf
    %2888 = vmax.xlane.f32.xlu0 %v2887
    %v2889 = vpop.xlane.xlu0 %2888
    %v2890 = vsel %vm2850, %v1515, -inf
    %2891 = vmax.xlane.f32.xlu0 %v2890
    %v2892 = vpop.xlane.xlu0 %2891
    %v2893 = vsel %vm2850, %v1589, -inf
    %2894 = vmax.xlane.f32.xlu0 %v2893
    %v2895 = vpop.xlane.xlu0 %2894
    %v2896 = vsel %vm2850, %v1663, -inf
    %2897 = vmax.xlane.f32.xlu0 %v2896
    %v2898 = vpop.xlane.xlu0 %2897
    %v2899 = vsel %vm2850, %v1737, -inf
    %2900 = vmax.xlane.f32.xlu0 %v2899
    %v2901 = vpop.xlane.xlu0 %2900
    %v2902 = vsel %vm2850, %v1811, -inf
    %2903 = vmax.xlane.f32.xlu0 %v2902
    %v2904 = vpop.xlane.xlu0 %2903
    %v2905 = vsel %vm2850, %v1885, -inf
    %2906 = vmax.xlane.f32.xlu0 %v2905
    %v2907 = vpop.xlane.xlu0 %2906
    %v2908 = vsel %vm2850, %v1959, -inf
    %2909 = vmax.xlane.f32.xlu0 %v2908
    %v2910 = vpop.xlane.xlu0 %2909
    %v2911 = vsel %vm2850, %v2033, -inf
    %2912 = vmax.xlane.f32.xlu0 %v2911
    %v2913 = vpop.xlane.xlu0 %2912
    %v2914 = vsel %vm2850, %v2107, -inf
    %2915 = vmax.xlane.f32.xlu0 %v2914
    %v2916 = vpop.xlane.xlu0 %2915
    %v2917 = vsel %vm2850, %v2181, -inf
    %2918 = vmax.xlane.f32.xlu0 %v2917
    %v2919 = vpop.xlane.xlu0 %2918
    %v2920 = vsel %vm2850, %v2255, -inf
    %2921 = vmax.xlane.f32.xlu0 %v2920
    %v2922 = vpop.xlane.xlu0 %2921
    %v2923 = vsel %vm2850, %v2329, -inf
    %2924 = vmax.xlane.f32.xlu0 %v2923
    %v2925 = vpop.xlane.xlu0 %2924
    %v2926 = vsel %vm2850, %v2403, -inf
    %2927 = vmax.xlane.f32.xlu0 %v2926
    %v2928 = vpop.xlane.xlu0 %2927
    %v2929 = vsel %vm2850, %v2477, -inf
    %2930 = vmax.xlane.f32.xlu0 %v2929
    %v2931 = vpop.xlane.xlu0 %2930
    %v2932 = vsel %vm2850, %v2551, -inf
    %2933 = vmax.xlane.f32.xlu0 %v2932
    %v2934 = vpop.xlane.xlu0 %2933
    %v2935 = vsel %vm2850, %v2625, -inf
    %2936 = vmax.xlane.f32.xlu0 %v2935
    %v2937 = vpop.xlane.xlu0 %2936
    %v2938 = vsel %vm2850, %v2699, -inf
    %2939 = vmax.xlane.f32.xlu0 %v2938
    %v2940 = vpop.xlane.xlu0 %2939
    %v2941 = vsel %vm2850, %v2773, -inf
    %2942 = vmax.xlane.f32.xlu0 %v2941
    %v2943 = vpop.xlane.xlu0 %2942
    %v2944 = vsel %vm2850, %v2847, -inf
    %2945 = vmax.xlane.f32.xlu0 %v2944
    %v2946 = vpop.xlane.xlu0 %2945
    %v2947 = vsub.f32 %v553, %v2853
    %v2948 = vsub.f32 %v627, %v2856
    %v2949 = vsub.f32 %v701, %v2859
    %v2950 = vsub.f32 %v775, %v2862
    %v2951 = vsub.f32 %v849, %v2865
    %v2952 = vsub.f32 %v923, %v2868
    %v2953 = vsub.f32 %v997, %v2871
    %v2954 = vsub.f32 %v1071, %v2874
    %v2955 = vsub.f32 %v1145, %v2877
    %v2956 = vsub.f32 %v1219, %v2880
    %v2957 = vsub.f32 %v1293, %v2883
    %v2958 = vsub.f32 %v1367, %v2886
    %v2959 = vsub.f32 %v1441, %v2889
    %v2960 = vsub.f32 %v1515, %v2892
    %v2961 = vsub.f32 %v1589, %v2895
    %v2962 = vsub.f32 %v1663, %v2898
    %v2963 = vsub.f32 %v1737, %v2901
    %v2964 = vsub.f32 %v1811, %v2904
    %v2965 = vsub.f32 %v1885, %v2907
    %v2966 = vsub.f32 %v1959, %v2910
    %v2967 = vsub.f32 %v2033, %v2913
    %v2968 = vsub.f32 %v2107, %v2916
    %v2969 = vsub.f32 %v2181, %v2919
    %v2970 = vsub.f32 %v2255, %v2922
    %v2971 = vsub.f32 %v2329, %v2925
    %v2972 = vsub.f32 %v2403, %v2928
    %v2973 = vsub.f32 %v2477, %v2931
    %v2974 = vsub.f32 %v2551, %v2934
    %v2975 = vsub.f32 %v2625, %v2937
    %v2976 = vsub.f32 %v2699, %v2940
    %v2977 = vsub.f32 %v2773, %v2943
    %v2978 = vsub.f32 %v2847, %v2946
    %v2979 = vmul.f32 %v2947, 1.442695
    %v2980 = vpow.pop %v2979
    %v2981 = vmul.f32 %v2948, 1.442695
    %v2982 = vpow.pop %v2981
    %v2983 = vmul.f32 %v2949, 1.442695
    %v2984 = vpow.pop %v2983
    %v2985 = vmul.f32 %v2950, 1.442695
    %v2986 = vpow.pop %v2985
    %v2987 = vmul.f32 %v2951, 1.442695
    %v2988 = vpow.pop %v2987
    %v2989 = vmul.f32 %v2952, 1.442695
    %v2990 = vpow.pop %v2989
    %v2991 = vmul.f32 %v2953, 1.442695
    %v2992 = vpow.pop %v2991
    %v2993 = vmul.f32 %v2954, 1.442695
    %v2994 = vpow.pop %v2993
    %v2995 = vmul.f32 %v2955, 1.442695
    %v2996 = vpow.pop %v2995
    %v2997 = vmul.f32 %v2956, 1.442695
    %v2998 = vpow.pop %v2997
    %v2999 = vmul.f32 %v2957, 1.442695
    %v3000 = vpow.pop %v2999
    %v3001 = vmul.f32 %v2958, 1.442695
    %v3002 = vpow.pop %v3001
    %v3003 = vmul.f32 %v2959, 1.442695
    %v3004 = vpow.pop %v3003
    %v3005 = vmul.f32 %v2960, 1.442695
    %v3006 = vpow.pop %v3005
    %v3007 = vmul.f32 %v2961, 1.442695
    %v3008 = vpow.pop %v3007
    %v3009 = vmul.f32 %v2962, 1.442695
    %v3010 = vpow.pop %v3009
    %v3011 = vmul.f32 %v2963, 1.442695
    %v3012 = vpow.pop %v3011
    %v3013 = vmul.f32 %v2964, 1.442695
    %v3014 = vpow.pop %v3013
    %v3015 = vmul.f32 %v2965, 1.442695
    %v3016 = vpow.pop %v3015
    %v3017 = vmul.f32 %v2966, 1.442695
    %v3018 = vpow.pop %v3017
    %v3019 = vmul.f32 %v2967, 1.442695
    %v3020 = vpow.pop %v3019
    %v3021 = vmul.f32 %v2968, 1.442695
    %v3022 = vpow.pop %v3021
    %v3023 = vmul.f32 %v2969, 1.442695
    %v3024 = vpow.pop %v3023
    %v3025 = vmul.f32 %v2970, 1.442695
    %v3026 = vpow.pop %v3025
    %v3027 = vmul.f32 %v2971, 1.442695
    %v3028 = vpow.pop %v3027
    %v3029 = vmul.f32 %v2972, 1.442695
    %v3030 = vpow.pop %v3029
    %v3031 = vmul.f32 %v2973, 1.442695
    %v3032 = vpow.pop %v3031
    %v3033 = vmul.f32 %v2974, 1.442695
    %v3034 = vpow.pop %v3033
    %v3035 = vmul.f32 %v2975, 1.442695
    %v3036 = vpow.pop %v3035
    %v3037 = vmul.f32 %v2976, 1.442695
    %v3038 = vpow.pop %v3037
    %v3039 = vmul.f32 %v2977, 1.442695
    %v3040 = vpow.pop %v3039
    %v3041 = vmul.f32 %v2978, 1.442695
    %v3042 = vpow.pop %v3041
    %v3043 = vsel %vm2850, %v2980, 0.0
    %3044 = vadd.xlane.f32.xlu0 %v3043
    %v3045 = vpop.xlane.xlu0 %3044
    %v3046 = vsel %vm2850, %v2982, 0.0
    %3047 = vadd.xlane.f32.xlu0 %v3046
    %v3048 = vpop.xlane.xlu0 %3047
    %v3049 = vsel %vm2850, %v2984, 0.0
    %3050 = vadd.xlane.f32.xlu0 %v3049
    %v3051 = vpop.xlane.xlu0 %3050
    %v3052 = vsel %vm2850, %v2986, 0.0
    %3053 = vadd.xlane.f32.xlu0 %v3052
    %v3054 = vpop.xlane.xlu0 %3053
    %v3055 = vsel %vm2850, %v2988, 0.0
    %3056 = vadd.xlane.f32.xlu0 %v3055
    %v3057 = vpop.xlane.xlu0 %3056
    %v3058 = vsel %vm2850, %v2990, 0.0
    %3059 = vadd.xlane.f32.xlu0 %v3058
    %v3060 = vpop.xlane.xlu0 %3059
    %v3061 = vsel %vm2850, %v2992, 0.0
    %3062 = vadd.xlane.f32.xlu0 %v3061
    %v3063 = vpop.xlane.xlu0 %3062
    %v3064 = vsel %vm2850, %v2994, 0.0
    %3065 = vadd.xlane.f32.xlu0 %v3064
    %v3066 = vpop.xlane.xlu0 %3065
    %v3067 = vsel %vm2850, %v2996, 0.0
    %3068 = vadd.xlane.f32.xlu0 %v3067
    %v3069 = vpop.xlane.xlu0 %3068
    %v3070 = vsel %vm2850, %v2998, 0.0
    %3071 = vadd.xlane.f32.xlu0 %v3070
    %v3072 = vpop.xlane.xlu0 %3071
    %v3073 = vsel %vm2850, %v3000, 0.0
    %3074 = vadd.xlane.f32.xlu0 %v3073
    %v3075 = vpop.xlane.xlu0 %3074
    %v3076 = vsel %vm2850, %v3002, 0.0
    %3077 = vadd.xlane.f32.xlu0 %v3076
    %v3078 = vpop.xlane.xlu0 %3077
    %v3079 = vsel %vm2850, %v3004, 0.0
    %3080 = vadd.xlane.f32.xlu0 %v3079
    %v3081 = vpop.xlane.xlu0 %3080
    %v3082 = vsel %vm2850, %v3006, 0.0
    %3083 = vadd.xlane.f32.xlu0 %v3082
    %v3084 = vpop.xlane.xlu0 %3083
    %v3085 = vsel %vm2850, %v3008, 0.0
    %3086 = vadd.xlane.f32.xlu0 %v3085
    %v3087 = vpop.xlane.xlu0 %3086
    %v3088 = vsel %vm2850, %v3010, 0.0
    %3089 = vadd.xlane.f32.xlu0 %v3088
    %v3090 = vpop.xlane.xlu0 %3089
    %v3091 = vsel %vm2850, %v3012, 0.0
    %3092 = vadd.xlane.f32.xlu0 %v3091
    %v3093 = vpop.xlane.xlu0 %3092
    %v3094 = vsel %vm2850, %v3014, 0.0
    %3095 = vadd.xlane.f32.xlu0 %v3094
    %v3096 = vpop.xlane.xlu0 %3095
    %v3097 = vsel %vm2850, %v3016, 0.0
    %3098 = vadd.xlane.f32.xlu0 %v3097
    %v3099 = vpop.xlane.xlu0 %3098
    %v3100 = vsel %vm2850, %v3018, 0.0
    %3101 = vadd.xlane.f32.xlu0 %v3100
    %v3102 = vpop.xlane.xlu0 %3101
    %v3103 = vsel %vm2850, %v3020, 0.0
    %3104 = vadd.xlane.f32.xlu0 %v3103
    %v3105 = vpop.xlane.xlu0 %3104
    %v3106 = vsel %vm2850, %v3022, 0.0
    %3107 = vadd.xlane.f32.xlu0 %v3106
    %v3108 = vpop.xlane.xlu0 %3107
    %v3109 = vsel %vm2850, %v3024, 0.0
    %3110 = vadd.xlane.f32.xlu0 %v3109
    %v3111 = vpop.xlane.xlu0 %3110
    %v3112 = vsel %vm2850, %v3026, 0.0
    %3113 = vadd.xlane.f32.xlu0 %v3112
    %v3114 = vpop.xlane.xlu0 %3113
    %v3115 = vsel %vm2850, %v3028, 0.0
    %3116 = vadd.xlane.f32.xlu0 %v3115
    %v3117 = vpop.xlane.xlu0 %3116
    %v3118 = vsel %vm2850, %v3030, 0.0
    %3119 = vadd.xlane.f32.xlu0 %v3118
    %v3120 = vpop.xlane.xlu0 %3119
    %v3121 = vsel %vm2850, %v3032, 0.0
    %3122 = vadd.xlane.f32.xlu0 %v3121
    %v3123 = vpop.xlane.xlu0 %3122
    %v3124 = vsel %vm2850, %v3034, 0.0
    %3125 = vadd.xlane.f32.xlu0 %v3124
    %v3126 = vpop.xlane.xlu0 %3125
    %v3127 = vsel %vm2850, %v3036, 0.0
    %3128 = vadd.xlane.f32.xlu0 %v3127
    %v3129 = vpop.xlane.xlu0 %3128
    %v3130 = vsel %vm2850, %v3038, 0.0
    %3131 = vadd.xlane.f32.xlu0 %v3130
    %v3132 = vpop.xlane.xlu0 %3131
    %v3133 = vsel %vm2850, %v3040, 0.0
    %3134 = vadd.xlane.f32.xlu0 %v3133
    %v3135 = vpop.xlane.xlu0 %3134
    %v3136 = vsel %vm2850, %v3042, 0.0
    %3137 = vadd.xlane.f32.xlu0 %v3136
    %v3138 = vpop.xlane.xlu0 %3137
    %v3139 = vrcp.pop %v3045
    %v3140 = vrcp.pop %v3048
    %v3141 = vrcp.pop %v3051
    %v3142 = vrcp.pop %v3054
    %v3143 = vrcp.pop %v3057
    %v3144 = vrcp.pop %v3060
    %v3145 = vrcp.pop %v3063
    %v3146 = vrcp.pop %v3066
    %v3147 = vrcp.pop %v3069
    %v3148 = vrcp.pop %v3072
    %v3149 = vrcp.pop %v3075
    %v3150 = vrcp.pop %v3078
    %v3151 = vrcp.pop %v3081
    %v3152 = vrcp.pop %v3084
    %v3153 = vrcp.pop %v3087
    %v3154 = vrcp.pop %v3090
    %v3155 = vrcp.pop %v3093
    %v3156 = vrcp.pop %v3096
    %v3157 = vrcp.pop %v3099
    %v3158 = vrcp.pop %v3102
    %v3159 = vrcp.pop %v3105
    %v3160 = vrcp.pop %v3108
    %v3161 = vrcp.pop %v3111
    %v3162 = vrcp.pop %v3114
    %v3163 = vrcp.pop %v3117
    %v3164 = vrcp.pop %v3120
    %v3165 = vrcp.pop %v3123
    %v3166 = vrcp.pop %v3126
    %v3167 = vrcp.pop %v3129
    %v3168 = vrcp.pop %v3132
    %v3169 = vrcp.pop %v3135
    %v3170 = vrcp.pop %v3138
    %v3171 = vmul.f32 %v2980, %v3139
    %v3172 = vmul.f32 %v2982, %v3140
    %v3173 = vmul.f32 %v2984, %v3141
    %v3174 = vmul.f32 %v2986, %v3142
    %v3175 = vmul.f32 %v2988, %v3143
    %v3176 = vmul.f32 %v2990, %v3144
    %v3177 = vmul.f32 %v2992, %v3145
    %v3178 = vmul.f32 %v2994, %v3146
    %v3179 = vmul.f32 %v2996, %v3147
    %v3180 = vmul.f32 %v2998, %v3148
    %v3181 = vmul.f32 %v3000, %v3149
    %v3182 = vmul.f32 %v3002, %v3150
    %v3183 = vmul.f32 %v3004, %v3151
    %v3184 = vmul.f32 %v3006, %v3152
    %v3185 = vmul.f32 %v3008, %v3153
    %v3186 = vmul.f32 %v3010, %v3154
    %v3187 = vmul.f32 %v3012, %v3155
    %v3188 = vmul.f32 %v3014, %v3156
    %v3189 = vmul.f32 %v3016, %v3157
    %v3190 = vmul.f32 %v3018, %v3158
    %v3191 = vmul.f32 %v3020, %v3159
    %v3192 = vmul.f32 %v3022, %v3160
    %v3193 = vmul.f32 %v3024, %v3161
    %v3194 = vmul.f32 %v3026, %v3162
    %v3195 = vmul.f32 %v3028, %v3163
    %v3196 = vmul.f32 %v3030, %v3164
    %v3197 = vmul.f32 %v3032, %v3165
    %v3198 = vmul.f32 %v3034, %v3166
    %v3199 = vmul.f32 %v3036, %v3167
    %v3200 = vmul.f32 %v3038, %v3168
    %v3201 = vmul.f32 %v3040, %v3169
    %v3202 = vmul.f32 %v3042, %v3170
    %v3204 = vsel %vm2850, %v3171, 0
    %3206 = vmatprep.subr.mxu0 0.0
    %3207 = vmatpush1.msra.mxu0 %v255
    %3208 = vmatprep.subr.mxu0 0.0
    %3209 = vmatpush1.msra.mxu0 0.0
    %3210 = vmatprep.subr.mxu0 0.0
    %3211 = vmatpush1.msra.mxu0 0.0
    %3212 = vmatprep.subr.mxu0 0.0
    %3213 = vmatpush1.msra.mxu0 0.0
    %3214 = vmatprep.subr.mxu0 0.0
    %3215 = vmatpush1.msra.mxu0 0.0
    %3216 = vmatprep.subr.mxu0 0.0
    %3217 = vmatpush1.msra.mxu0 0.0
    %3218 = vmatprep.subr.mxu0 0.0
    %3219 = vmatpush1.msra.mxu0 0.0
    %3220 = vmatprep.subr.mxu0 0.0
    %3221 = vmatpush1.msra.mxu0 0.0
    %3222 = vmatprep.subr.mxu0 0.0
    %3223 = vmatpush1.msra.mxu0 0.0
    %3224 = vmatprep.subr.mxu0 0.0
    %3225 = vmatpush1.msra.mxu0 0.0
    %3226 = vmatprep.subr.mxu0 0.0
    %3227 = vmatpush1.msra.mxu0 0.0
    %3228 = vmatprep.subr.mxu0 0.0
    %3229 = vmatpush1.msra.mxu0 0.0
    %3230 = vmatprep.subr.mxu0 0.0
    %3231 = vmatpush1.msra.mxu0 0.0
    %3232 = vmatprep.subr.mxu0 0.0
    %3233 = vmatpush1.msra.mxu0 0.0
    %3234 = vmatprep.subr.mxu0 0.0
    %3235 = vmatpush1.msra.mxu0 0.0
    %3236 = vmatprep.subr.mxu0 0.0
    %3237 = vmatpush1.msra.mxu0 0.0
    %3238 = vmatprep.subr.mxu0 0.0
    %3239 = vmatpush1.msra.mxu0 0.0
    %3240 = vmatprep.subr.mxu0 0.0
    %3241 = vmatpush1.msra.mxu0 0.0
    %3242 = vmatprep.subr.mxu0 0.0
    %3243 = vmatpush1.msra.mxu0 0.0
    %3244 = vmatprep.subr.mxu0 0.0
    %3245 = vmatpush1.msra.mxu0 0.0
    %3246 = vmatprep.subr.mxu0 0.0
    %3247 = vmatpush1.msra.mxu0 0.0
    %3248 = vmatprep.subr.mxu0 0.0
    %3249 = vmatpush1.msra.mxu0 0.0
    %3250 = vmatprep.subr.mxu0 0.0
    %3251 = vmatpush1.msra.mxu0 0.0
    %3252 = vmatprep.subr.mxu0 0.0
    %3253 = vmatpush1.msra.mxu0 0.0
    %3254 = vmatprep.subr.mxu0 0.0
    %3255 = vmatpush1.msra.mxu0 0.0
    %3256 = vmatprep.subr.mxu0 0.0
    %3257 = vmatpush1.msra.mxu0 0.0
    %3258 = vmatprep.subr.mxu0 0.0
    %3259 = vmatpush1.msra.mxu0 0.0
    %3260 = vmatprep.subr.mxu0 0.0
    %3261 = vmatpush1.msra.mxu0 0.0
    %3262 = vmatprep.subr.mxu0 0.0
    %3263 = vmatpush1.msra.mxu0 0.0
    %3264 = vmatprep.subr.mxu0 0.0
    %3265 = vmatpush1.msra.mxu0 0.0
    %3266 = vmatprep.subr.mxu0 0.0
    %3267 = vmatpush1.msra.mxu0 0.0
    %3268 = vmatprep.subr.mxu0 0.0
    %3269 = vmatpush1.msra.mxu0 0.0
    %3270 = vmatprep.mubr.f32.mxu0 0.0
    %3271 = vmatmul.mubr.f32.gmra.mrb[0].mxu0 %v3204
    %v3272 = vpop.f32.mrb[0].mxu0
    %v3273 = vadd.f32 0.0, %v3272
    %v3274 = vpop.f32.mrb[0].mxu0
    %3275 = vdwg.mxu0
    %v3277 = vsel %vm2850, %v3172, 0
    %3279 = vmatprep.subr.mxu0 0.0
    %3280 = vmatpush1.msra.mxu0 %v260
    %3281 = vmatprep.subr.mxu0 0.0
    %3282 = vmatpush1.msra.mxu0 0.0
    %3283 = vmatprep.subr.mxu0 0.0
    %3284 = vmatpush1.msra.mxu0 0.0
    %3285 = vmatprep.subr.mxu0 0.0
    %3286 = vmatpush1.msra.mxu0 0.0
    %3287 = vmatprep.subr.mxu0 0.0
    %3288 = vmatpush1.msra.mxu0 0.0
    %3289 = vmatprep.subr.mxu0 0.0
    %3290 = vmatpush1.msra.mxu0 0.0
    %3291 = vmatprep.subr.mxu0 0.0
    %3292 = vmatpush1.msra.mxu0 0.0
    %3293 = vmatprep.subr.mxu0 0.0
    %3294 = vmatpush1.msra.mxu0 0.0
    %3295 = vmatprep.subr.mxu0 0.0
    %3296 = vmatpush1.msra.mxu0 0.0
    %3297 = vmatprep.subr.mxu0 0.0
    %3298 = vmatpush1.msra.mxu0 0.0
    %3299 = vmatprep.subr.mxu0 0.0
    %3300 = vmatpush1.msra.mxu0 0.0
    %3301 = vmatprep.subr.mxu0 0.0
    %3302 = vmatpush1.msra.mxu0 0.0
    %3303 = vmatprep.subr.mxu0 0.0
    %3304 = vmatpush1.msra.mxu0 0.0
    %3305 = vmatprep.subr.mxu0 0.0
    %3306 = vmatpush1.msra.mxu0 0.0
    %3307 = vmatprep.subr.mxu0 0.0
    %3308 = vmatpush1.msra.mxu0 0.0
    %3309 = vmatprep.subr.mxu0 0.0
    %3310 = vmatpush1.msra.mxu0 0.0
    %3311 = vmatprep.subr.mxu0 0.0
    %3312 = vmatpush1.msra.mxu0 0.0
    %3313 = vmatprep.subr.mxu0 0.0
    %3314 = vmatpush1.msra.mxu0 0.0
    %3315 = vmatprep.subr.mxu0 0.0
    %3316 = vmatpush1.msra.mxu0 0.0
    %3317 = vmatprep.subr.mxu0 0.0
    %3318 = vmatpush1.msra.mxu0 0.0
    %3319 = vmatprep.subr.mxu0 0.0
    %3320 = vmatpush1.msra.mxu0 0.0
    %3321 = vmatprep.subr.mxu0 0.0
    %3322 = vmatpush1.msra.mxu0 0.0
    %3323 = vmatprep.subr.mxu0 0.0
    %3324 = vmatpush1.msra.mxu0 0.0
    %3325 = vmatprep.subr.mxu0 0.0
    %3326 = vmatpush1.msra.mxu0 0.0
    %3327 = vmatprep.subr.mxu0 0.0
    %3328 = vmatpush1.msra.mxu0 0.0
    %3329 = vmatprep.subr.mxu0 0.0
    %3330 = vmatpush1.msra.mxu0 0.0
    %3331 = vmatprep.subr.mxu0 0.0
    %3332 = vmatpush1.msra.mxu0 0.0
    %3333 = vmatprep.subr.mxu0 0.0
    %3334 = vmatpush1.msra.mxu0 0.0
    %3335 = vmatprep.subr.mxu0 0.0
    %3336 = vmatpush1.msra.mxu0 0.0
    %3337 = vmatprep.subr.mxu0 0.0
    %3338 = vmatpush1.msra.mxu0 0.0
    %3339 = vmatprep.subr.mxu0 0.0
    %3340 = vmatpush1.msra.mxu0 0.0
    %3341 = vmatprep.subr.mxu0 0.0
    %3342 = vmatpush1.msra.mxu0 0.0
    %3343 = vmatprep.mubr.f32.mxu0 0.0
    %3344 = vmatmul.mubr.f32.gmra.mrb[0].mxu0 %v3277
    %v3345 = vpop.f32.mrb[0].mxu0
    %v3346 = vadd.f32 0.0, %v3345
    %v3347 = vpop.f32.mrb[0].mxu0
    %3348 = vdwg.mxu0
    %v3350 = vsel %vm2850, %v3173, 0
    %3352 = vmatprep.subr.mxu0 0.0
    %3353 = vmatpush1.msra.mxu0 %v265
    %3354 = vmatprep.subr.mxu0 0.0
    %3355 = vmatpush1.msra.mxu0 0.0
    %3356 = vmatprep.subr.mxu0 0.0
    %3357 = vmatpush1.msra.mxu0 0.0
    %3358 = vmatprep.subr.mxu0 0.0
    %3359 = vmatpush1.msra.mxu0 0.0
    %3360 = vmatprep.subr.mxu0 0.0
    %3361 = vmatpush1.msra.mxu0 0.0
    %3362 = vmatprep.subr.mxu0 0.0
    %3363 = vmatpush1.msra.mxu0 0.0
    %3364 = vmatprep.subr.mxu0 0.0
    %3365 = vmatpush1.msra.mxu0 0.0
    %3366 = vmatprep.subr.mxu0 0.0
    %3367 = vmatpush1.msra.mxu0 0.0
    %3368 = vmatprep.subr.mxu0 0.0
    %3369 = vmatpush1.msra.mxu0 0.0
    %3370 = vmatprep.subr.mxu0 0.0
    %3371 = vmatpush1.msra.mxu0 0.0
    %3372 = vmatprep.subr.mxu0 0.0
    %3373 = vmatpush1.msra.mxu0 0.0
    %3374 = vmatprep.subr.mxu0 0.0
    %3375 = vmatpush1.msra.mxu0 0.0
    %3376 = vmatprep.subr.mxu0 0.0
    %3377 = vmatpush1.msra.mxu0 0.0
    %3378 = vmatprep.subr.mxu0 0.0
    %3379 = vmatpush1.msra.mxu0 0.0
    %3380 = vmatprep.subr.mxu0 0.0
    %3381 = vmatpush1.msra.mxu0 0.0
    %3382 = vmatprep.subr.mxu0 0.0
    %3383 = vmatpush1.msra.mxu0 0.0
    %3384 = vmatprep.subr.mxu0 0.0
    %3385 = vmatpush1.msra.mxu0 0.0
    %3386 = vmatprep.subr.mxu0 0.0
    %3387 = vmatpush1.msra.mxu0 0.0
    %3388 = vmatprep.subr.mxu0 0.0
    %3389 = vmatpush1.msra.mxu0 0.0
    %3390 = vmatprep.subr.mxu0 0.0
    %3391 = vmatpush1.msra.mxu0 0.0
    %3392 = vmatprep.subr.mxu0 0.0
    %3393 = vmatpush1.msra.mxu0 0.0
    %3394 = vmatprep.subr.mxu0 0.0
    %3395 = vmatpush1.msra.mxu0 0.0
    %3396 = vmatprep.subr.mxu0 0.0
    %3397 = vmatpush1.msra.mxu0 0.0
    %3398 = vmatprep.subr.mxu0 0.0
    %3399 = vmatpush1.msra.mxu0 0.0
    %3400 = vmatprep.subr.mxu0 0.0
    %3401 = vmatpush1.msra.mxu0 0.0
    %3402 = vmatprep.subr.mxu0 0.0
    %3403 = vmatpush1.msra.mxu0 0.0
    %3404 = vmatprep.subr.mxu0 0.0
    %3405 = vmatpush1.msra.mxu0 0.0
    %3406 = vmatprep.subr.mxu0 0.0
    %3407 = vmatpush1.msra.mxu0 0.0
    %3408 = vmatprep.subr.mxu0 0.0
    %3409 = vmatpush1.msra.mxu0 0.0
    %3410 = vmatprep.subr.mxu0 0.0
    %3411 = vmatpush1.msra.mxu0 0.0
    %3412 = vmatprep.subr.mxu0 0.0
    %3413 = vmatpush1.msra.mxu0 0.0
    %3414 = vmatprep.subr.mxu0 0.0
    %3415 = vmatpush1.msra.mxu0 0.0
    %3416 = vmatprep.mubr.f32.mxu0 0.0
    %3417 = vmatmul.mubr.f32.gmra.mrb[0].mxu0 %v3350
    %v3418 = vpop.f32.mrb[0].mxu0
    %v3419 = vadd.f32 0.0, %v3418
    %v3420 = vpop.f32.mrb[0].mxu0
    %3421 = vdwg.mxu0
    %v3423 = vsel %vm2850, %v3174, 0
    %3425 = vmatprep.subr.mxu0 0.0
    %3426 = vmatpush1.msra.mxu0 %v270
    %3427 = vmatprep.subr.mxu0 0.0
    %3428 = vmatpush1.msra.mxu0 0.0
    %3429 = vmatprep.subr.mxu0 0.0
    %3430 = vmatpush1.msra.mxu0 0.0
    %3431 = vmatprep.subr.mxu0 0.0
    %3432 = vmatpush1.msra.mxu0 0.0
    %3433 = vmatprep.subr.mxu0 0.0
    %3434 = vmatpush1.msra.mxu0 0.0
    %3435 = vmatprep.subr.mxu0 0.0
    %3436 = vmatpush1.msra.mxu0 0.0
    %3437 = vmatprep.subr.mxu0 0.0
    %3438 = vmatpush1.msra.mxu0 0.0
    %3439 = vmatprep.subr.mxu0 0.0
    %3440 = vmatpush1.msra.mxu0 0.0
    %3441 = vmatprep.subr.mxu0 0.0
    %3442 = vmatpush1.msra.mxu0 0.0
    %3443 = vmatprep.subr.mxu0 0.0
    %3444 = vmatpush1.msra.mxu0 0.0
    %3445 = vmatprep.subr.mxu0 0.0
    %3446 = vmatpush1.msra.mxu0 0.0
    %3447 = vmatprep.subr.mxu0 0.0
    %3448 = vmatpush1.msra.mxu0 0.0
    %3449 = vmatprep.subr.mxu0 0.0
    %3450 = vmatpush1.msra.mxu0 0.0
    %3451 = vmatprep.subr.mxu0 0.0
    %3452 = vmatpush1.msra.mxu0 0.0
    %3453 = vmatprep.subr.mxu0 0.0
    %3454 = vmatpush1.msra.mxu0 0.0
    %3455 = vmatprep.subr.mxu0 0.0
    %3456 = vmatpush1.msra.mxu0 0.0
    %3457 = vmatprep.subr.mxu0 0.0
    %3458 = vmatpush1.msra.mxu0 0.0
    %3459 = vmatprep.subr.mxu0 0.0
    %3460 = vmatpush1.msra.mxu0 0.0
    %3461 = vmatprep.subr.mxu0 0.0
    %3462 = vmatpush1.msra.mxu0 0.0
    %3463 = vmatprep.subr.mxu0 0.0
    %3464 = vmatpush1.msra.mxu0 0.0
    %3465 = vmatprep.subr.mxu0 0.0
    %3466 = vmatpush1.msra.mxu0 0.0
    %3467 = vmatprep.subr.mxu0 0.0
    %3468 = vmatpush1.msra.mxu0 0.0
    %3469 = vmatprep.subr.mxu0 0.0
    %3470 = vmatpush1.msra.mxu0 0.0
    %3471 = vmatprep.subr.mxu0 0.0
    %3472 = vmatpush1.msra.mxu0 0.0
    %3473 = vmatprep.subr.mxu0 0.0
    %3474 = vmatpush1.msra.mxu0 0.0
    %3475 = vmatprep.subr.mxu0 0.0
    %3476 = vmatpush1.msra.mxu0 0.0
    %3477 = vmatprep.subr.mxu0 0.0
    %3478 = vmatpush1.msra.mxu0 0.0
    %3479 = vmatprep.subr.mxu0 0.0
    %3480 = vmatpush1.msra.mxu0 0.0
    %3481 = vmatprep.subr.mxu0 0.0
    %3482 = vmatpush1.msra.mxu0 0.0
    %3483 = vmatprep.subr.mxu0 0.0
    %3484 = vmatpush1.msra.mxu0 0.0
    %3485 = vmatprep.subr.mxu0 0.0
    %3486 = vmatpush1.msra.mxu0 0.0
    %3487 = vmatprep.subr.mxu0 0.0
    %3488 = vmatpush1.msra.mxu0 0.0
    %3489 = vmatprep.mubr.f32.mxu0 0.0
    %3490 = vmatmul.mubr.f32.gmra.mrb[0].mxu0 %v3423
    %v3491 = vpop.f32.mrb[0].mxu0
    %v3492 = vadd.f32 0.0, %v3491
    %v3493 = vpop.f32.mrb[0].mxu0
    %3494 = vdwg.mxu0
    %v3496 = vsel %vm2850, %v3175, 0
    %3498 = vmatprep.subr.mxu0 0.0
    %3499 = vmatpush1.msra.mxu0 %v398
    %3500 = vmatprep.subr.mxu0 0.0
    %3501 = vmatpush1.msra.mxu0 0.0
    %3502 = vmatprep.subr.mxu0 0.0
    %3503 = vmatpush1.msra.mxu0 0.0
    %3504 = vmatprep.subr.mxu0 0.0
    %3505 = vmatpush1.msra.mxu0 0.0
    %3506 = vmatprep.subr.mxu0 0.0
    %3507 = vmatpush1.msra.mxu0 0.0
    %3508 = vmatprep.subr.mxu0 0.0
    %3509 = vmatpush1.msra.mxu0 0.0
    %3510 = vmatprep.subr.mxu0 0.0
    %3511 = vmatpush1.msra.mxu0 0.0
    %3512 = vmatprep.subr.mxu0 0.0
    %3513 = vmatpush1.msra.mxu0 0.0
    %3514 = vmatprep.subr.mxu0 0.0
    %3515 = vmatpush1.msra.mxu0 0.0
    %3516 = vmatprep.subr.mxu0 0.0
    %3517 = vmatpush1.msra.mxu0 0.0
    %3518 = vmatprep.subr.mxu0 0.0
    %3519 = vmatpush1.msra.mxu0 0.0
    %3520 = vmatprep.subr.mxu0 0.0
    %3521 = vmatpush1.msra.mxu0 0.0
    %3522 = vmatprep.subr.mxu0 0.0
    %3523 = vmatpush1.msra.mxu0 0.0
    %3524 = vmatprep.subr.mxu0 0.0
    %3525 = vmatpush1.msra.mxu0 0.0
    %3526 = vmatprep.subr.mxu0 0.0
    %3527 = vmatpush1.msra.mxu0 0.0
    %3528 = vmatprep.subr.mxu0 0.0
    %3529 = vmatpush1.msra.mxu0 0.0
    %3530 = vmatprep.subr.mxu0 0.0
    %3531 = vmatpush1.msra.mxu0 0.0
    %3532 = vmatprep.subr.mxu0 0.0
    %3533 = vmatpush1.msra.mxu0 0.0
    %3534 = vmatprep.subr.mxu0 0.0
    %3535 = vmatpush1.msra.mxu0 0.0
    %3536 = vmatprep.subr.mxu0 0.0
    %3537 = vmatpush1.msra.mxu0 0.0
    %3538 = vmatprep.subr.mxu0 0.0
    %3539 = vmatpush1.msra.mxu0 0.0
    %3540 = vmatprep.subr.mxu0 0.0
    %3541 = vmatpush1.msra.mxu0 0.0
    %3542 = vmatprep.subr.mxu0 0.0
    %3543 = vmatpush1.msra.mxu0 0.0
    %3544 = vmatprep.subr.mxu0 0.0
    %3545 = vmatpush1.msra.mxu0 0.0
    %3546 = vmatprep.subr.mxu0 0.0
    %3547 = vmatpush1.msra.mxu0 0.0
    %3548 = vmatprep.subr.mxu0 0.0
    %3549 = vmatpush1.msra.mxu0 0.0
    %3550 = vmatprep.subr.mxu0 0.0
    %3551 = vmatpush1.msra.mxu0 0.0
    %3552 = vmatprep.subr.mxu0 0.0
    %3553 = vmatpush1.msra.mxu0 0.0
    %3554 = vmatprep.subr.mxu0 0.0
    %3555 = vmatpush1.msra.mxu0 0.0
    %3556 = vmatprep.subr.mxu0 0.0
    %3557 = vmatpush1.msra.mxu0 0.0
    %3558 = vmatprep.subr.mxu0 0.0
    %3559 = vmatpush1.msra.mxu0 0.0
    %3560 = vmatprep.subr.mxu0 0.0
    %3561 = vmatpush1.msra.mxu0 0.0
    %3562 = vmatprep.mubr.f32.mxu0 0.0
    %3563 = vmatmul.mubr.f32.gmra.mrb[0].mxu0 %v3496
    %v3564 = vpop.f32.mrb[0].mxu0
    %v3565 = vadd.f32 0.0, %v3564
    %v3566 = vpop.f32.mrb[0].mxu0
    %3567 = vdwg.mxu0
    %v3569 = vsel %vm2850, %v3176, 0
    %3571 = vmatprep.subr.mxu0 0.0
    %3572 = vmatpush1.msra.mxu0 %v400
    %3573 = vmatprep.subr.mxu0 0.0
    %3574 = vmatpush1.msra.mxu0 0.0
    %3575 = vmatprep.subr.mxu0 0.0
    %3576 = vmatpush1.msra.mxu0 0.0
    %3577 = vmatprep.subr.mxu0 0.0
    %3578 = vmatpush1.msra.mxu0 0.0
    %3579 = vmatprep.subr.mxu0 0.0
    %3580 = vmatpush1.msra.mxu0 0.0
    %3581 = vmatprep.subr.mxu0 0.0
    %3582 = vmatpush1.msra.mxu0 0.0
    %3583 = vmatprep.subr.mxu0 0.0
    %3584 = vmatpush1.msra.mxu0 0.0
    %3585 = vmatprep.subr.mxu0 0.0
    %3586 = vmatpush1.msra.mxu0 0.0
    %3587 = vmatprep.subr.mxu0 0.0
    %3588 = vmatpush1.msra.mxu0 0.0
    %3589 = vmatprep.subr.mxu0 0.0
    %3590 = vmatpush1.msra.mxu0 0.0
    %3591 = vmatprep.subr.mxu0 0.0
    %3592 = vmatpush1.msra.mxu0 0.0
    %3593 = vmatprep.subr.mxu0 0.0
    %3594 = vmatpush1.msra.mxu0 0.0
    %3595 = vmatprep.subr.mxu0 0.0
    %3596 = vmatpush1.msra.mxu0 0.0
    %3597 = vmatprep.subr.mxu0 0.0
    %3598 = vmatpush1.msra.mxu0 0.0
    %3599 = vmatprep.subr.mxu0 0.0
    %3600 = vmatpush1.msra.mxu0 0.0
    %3601 = vmatprep.subr.mxu0 0.0
    %3602 = vmatpush1.msra.mxu0 0.0
    %3603 = vmatprep.subr.mxu0 0.0
    %3604 = vmatpush1.msra.mxu0 0.0
    %3605 = vmatprep.subr.mxu0 0.0
    %3606 = vmatpush1.msra.mxu0 0.0
    %3607 = vmatprep.subr.mxu0 0.0
    %3608 = vmatpush1.msra.mxu0 0.0
    %3609 = vmatprep.subr.mxu0 0.0
    %3610 = vmatpush1.msra.mxu0 0.0
    %3611 = vmatprep.subr.mxu0 0.0
    %3612 = vmatpush1.msra.mxu0 0.0
    %3613 = vmatprep.subr.mxu0 0.0
    %3614 = vmatpush1.msra.mxu0 0.0
    %3615 = vmatprep.subr.mxu0 0.0
    %3616 = vmatpush1.msra.mxu0 0.0
    %3617 = vmatprep.subr.mxu0 0.0
    %3618 = vmatpush1.msra.mxu0 0.0
    %3619 = vmatprep.subr.mxu0 0.0
    %3620 = vmatpush1.msra.mxu0 0.0
    %3621 = vmatprep.subr.mxu0 0.0
    %3622 = vmatpush1.msra.mxu0 0.0
    %3623 = vmatprep.subr.mxu0 0.0
    %3624 = vmatpush1.msra.mxu0 0.0
    %3625 = vmatprep.subr.mxu0 0.0
    %3626 = vmatpush1.msra.mxu0 0.0
    %3627 = vmatprep.subr.mxu0 0.0
    %3628 = vmatpush1.msra.mxu0 0.0
    %3629 = vmatprep.subr.mxu0 0.0
    %3630 = vmatpush1.msra.mxu0 0.0
    %3631 = vmatprep.subr.mxu0 0.0
    %3632 = vmatpush1.msra.mxu0 0.0
    %3633 = vmatprep.subr.mxu0 0.0
    %3634 = vmatpush1.msra.mxu0 0.0
    %3635 = vmatprep.mubr.f32.mxu0 0.0
    %3636 = vmatmul.mubr.f32.gmra.mrb[0].mxu0 %v3569
    %v3637 = vpop.f32.mrb[0].mxu0
    %v3638 = vadd.f32 0.0, %v3637
    %v3639 = vpop.f32.mrb[0].mxu0
    %3640 = vdwg.mxu0
    %v3642 = vsel %vm2850, %v3177, 0
    %3644 = vmatprep.subr.mxu0 0.0
    %3645 = vmatpush1.msra.mxu0 %v402
    %3646 = vmatprep.subr.mxu0 0.0
    %3647 = vmatpush1.msra.mxu0 0.0
    %3648 = vmatprep.subr.mxu0 0.0
    %3649 = vmatpush1.msra.mxu0 0.0
    %3650 = vmatprep.subr.mxu0 0.0
    %3651 = vmatpush1.msra.mxu0 0.0
    %3652 = vmatprep.subr.mxu0 0.0
    %3653 = vmatpush1.msra.mxu0 0.0
    %3654 = vmatprep.subr.mxu0 0.0
    %3655 = vmatpush1.msra.mxu0 0.0
    %3656 = vmatprep.subr.mxu0 0.0
    %3657 = vmatpush1.msra.mxu0 0.0
    %3658 = vmatprep.subr.mxu0 0.0
    %3659 = vmatpush1.msra.mxu0 0.0
    %3660 = vmatprep.subr.mxu0 0.0
    %3661 = vmatpush1.msra.mxu0 0.0
    %3662 = vmatprep.subr.mxu0 0.0
    %3663 = vmatpush1.msra.mxu0 0.0
    %3664 = vmatprep.subr.mxu0 0.0
    %3665 = vmatpush1.msra.mxu0 0.0
    %3666 = vmatprep.subr.mxu0 0.0
    %3667 = vmatpush1.msra.mxu0 0.0
    %3668 = vmatprep.subr.mxu0 0.0
    %3669 = vmatpush1.msra.mxu0 0.0
    %3670 = vmatprep.subr.mxu0 0.0
    %3671 = vmatpush1.msra.mxu0 0.0
    %3672 = vmatprep.subr.mxu0 0.0
    %3673 = vmatpush1.msra.mxu0 0.0
    %3674 = vmatprep.subr.mxu0 0.0
    %3675 = vmatpush1.msra.mxu0 0.0
    %3676 = vmatprep.subr.mxu0 0.0
    %3677 = vmatpush1.msra.mxu0 0.0
    %3678 = vmatprep.subr.mxu0 0.0
    %3679 = vmatpush1.msra.mxu0 0.0
    %3680 = vmatprep.subr.mxu0 0.0
    %3681 = vmatpush1.msra.mxu0 0.0
    %3682 = vmatprep.subr.mxu0 0.0
    %3683 = vmatpush1.msra.mxu0 0.0
    %3684 = vmatprep.subr.mxu0 0.0
    %3685 = vmatpush1.msra.mxu0 0.0
    %3686 = vmatprep.subr.mxu0 0.0
    %3687 = vmatpush1.msra.mxu0 0.0
    %3688 = vmatprep.subr.mxu0 0.0
    %3689 = vmatpush1.msra.mxu0 0.0
    %3690 = vmatprep.subr.mxu0 0.0
    %3691 = vmatpush1.msra.mxu0 0.0
    %3692 = vmatprep.subr.mxu0 0.0
    %3693 = vmatpush1.msra.mxu0 0.0
    %3694 = vmatprep.subr.mxu0 0.0
    %3695 = vmatpush1.msra.mxu0 0.0
    %3696 = vmatprep.subr.mxu0 0.0
    %3697 = vmatpush1.msra.mxu0 0.0
    %3698 = vmatprep.subr.mxu0 0.0
    %3699 = vmatpush1.msra.mxu0 0.0
    %3700 = vmatprep.subr.mxu0 0.0
    %3701 = vmatpush1.msra.mxu0 0.0
    %3702 = vmatprep.subr.mxu0 0.0
    %3703 = vmatpush1.msra.mxu0 0.0
    %3704 = vmatprep.subr.mxu0 0.0
    %3705 = vmatpush1.msra.mxu0 0.0
    %3706 = vmatprep.subr.mxu0 0.0
    %3707 = vmatpush1.msra.mxu0 0.0
    %3708 = vmatprep.mubr.f32.mxu0 0.0
    %3709 = vmatmul.mubr.f32.gmra.mrb[0].mxu0 %v3642
    %v3710 = vpop.f32.mrb[0].mxu0
    %v3711 = vadd.f32 0.0, %v3710
    %v3712 = vpop.f32.mrb[0].mxu0
    %3713 = vdwg.mxu0
    %v3715 = vsel %vm2850, %v3178, 0
    %3717 = vmatprep.subr.mxu0 0.0
    %3718 = vmatpush1.msra.mxu0 %v404
    %3719 = vmatprep.subr.mxu0 0.0
    %3720 = vmatpush1.msra.mxu0 0.0
    %3721 = vmatprep.subr.mxu0 0.0
    %3722 = vmatpush1.msra.mxu0 0.0
    %3723 = vmatprep.subr.mxu0 0.0
    %3724 = vmatpush1.msra.mxu0 0.0
    %3725 = vmatprep.subr.mxu0 0.0
    %3726 = vmatpush1.msra.mxu0 0.0
    %3727 = vmatprep.subr.mxu0 0.0
    %3728 = vmatpush1.msra.mxu0 0.0
    %3729 = vmatprep.subr.mxu0 0.0
    %3730 = vmatpush1.msra.mxu0 0.0
    %3731 = vmatprep.subr.mxu0 0.0
    %3732 = vmatpush1.msra.mxu0 0.0
    %3733 = vmatprep.subr.mxu0 0.0
    %3734 = vmatpush1.msra.mxu0 0.0
    %3735 = vmatprep.subr.mxu0 0.0
    %3736 = vmatpush1.msra.mxu0 0.0
    %3737 = vmatprep.subr.mxu0 0.0
    %3738 = vmatpush1.msra.mxu0 0.0
    %3739 = vmatprep.subr.mxu0 0.0
    %3740 = vmatpush1.msra.mxu0 0.0
    %3741 = vmatprep.subr.mxu0 0.0
    %3742 = vmatpush1.msra.mxu0 0.0
    %3743 = vmatprep.subr.mxu0 0.0
    %3744 = vmatpush1.msra.mxu0 0.0
    %3745 = vmatprep.subr.mxu0 0.0
    %3746 = vmatpush1.msra.mxu0 0.0
    %3747 = vmatprep.subr.mxu0 0.0
    %3748 = vmatpush1.msra.mxu0 0.0
    %3749 = vmatprep.subr.mxu0 0.0
    %3750 = vmatpush1.msra.mxu0 0.0
    %3751 = vmatprep.subr.mxu0 0.0
    %3752 = vmatpush1.msra.mxu0 0.0
    %3753 = vmatprep.subr.mxu0 0.0
    %3754 = vmatpush1.msra.mxu0 0.0
    %3755 = vmatprep.subr.mxu0 0.0
    %3756 = vmatpush1.msra.mxu0 0.0
    %3757 = vmatprep.subr.mxu0 0.0
    %3758 = vmatpush1.msra.mxu0 0.0
    %3759 = vmatprep.subr.mxu0 0.0
    %3760 = vmatpush1.msra.mxu0 0.0
    %3761 = vmatprep.subr.mxu0 0.0
    %3762 = vmatpush1.msra.mxu0 0.0
    %3763 = vmatprep.subr.mxu0 0.0
    %3764 = vmatpush1.msra.mxu0 0.0
    %3765 = vmatprep.subr.mxu0 0.0
    %3766 = vmatpush1.msra.mxu0 0.0
    %3767 = vmatprep.subr.mxu0 0.0
    %3768 = vmatpush1.msra.mxu0 0.0
    %3769 = vmatprep.subr.mxu0 0.0
    %3770 = vmatpush1.msra.mxu0 0.0
    %3771 = vmatprep.subr.mxu0 0.0
    %3772 = vmatpush1.msra.mxu0 0.0
    %3773 = vmatprep.subr.mxu0 0.0
    %3774 = vmatpush1.msra.mxu0 0.0
    %3775 = vmatprep.subr.mxu0 0.0
    %3776 = vmatpush1.msra.mxu0 0.0
    %3777 = vmatprep.subr.mxu0 0.0
    %3778 = vmatpush1.msra.mxu0 0.0
    %3779 = vmatprep.subr.mxu0 0.0
    %3780 = vmatpush1.msra.mxu0 0.0
    %3781 = vmatprep.mubr.f32.mxu0 0.0
    %3782 = vmatmul.mubr.f32.gmra.mrb[0].mxu0 %v3715
    %v3783 = vpop.f32.mrb[0].mxu0
    %v3784 = vadd.f32 0.0, %v3783
    %v3785 = vpop.f32.mrb[0].mxu0
    %3786 = vdwg.mxu0
    %v3788 = vsel %vm2850, %v3179, 0
    %3790 = vmatprep.subr.mxu0 0.0
    %3791 = vmatpush1.msra.mxu0 %v410
    %3792 = vmatprep.subr.mxu0 0.0
    %3793 = vmatpush1.msra.mxu0 0.0
    %3794 = vmatprep.subr.mxu0 0.0
    %3795 = vmatpush1.msra.mxu0 0.0
    %3796 = vmatprep.subr.mxu0 0.0
    %3797 = vmatpush1.msra.mxu0 0.0
    %3798 = vmatprep.subr.mxu0 0.0
    %3799 = vmatpush1.msra.mxu0 0.0
    %3800 = vmatprep.subr.mxu0 0.0
    %3801 = vmatpush1.msra.mxu0 0.0
    %3802 = vmatprep.subr.mxu0 0.0
    %3803 = vmatpush1.msra.mxu0 0.0
    %3804 = vmatprep.subr.mxu0 0.0
    %3805 = vmatpush1.msra.mxu0 0.0
    %3806 = vmatprep.subr.mxu0 0.0
    %3807 = vmatpush1.msra.mxu0 0.0
    %3808 = vmatprep.subr.mxu0 0.0
    %3809 = vmatpush1.msra.mxu0 0.0
    %3810 = vmatprep.subr.mxu0 0.0
    %3811 = vmatpush1.msra.mxu0 0.0
    %3812 = vmatprep.subr.mxu0 0.0
    %3813 = vmatpush1.msra.mxu0 0.0
    %3814 = vmatprep.subr.mxu0 0.0
    %3815 = vmatpush1.msra.mxu0 0.0
    %3816 = vmatprep.subr.mxu0 0.0
    %3817 = vmatpush1.msra.mxu0 0.0
    %3818 = vmatprep.subr.mxu0 0.0
    %3819 = vmatpush1.msra.mxu0 0.0
    %3820 = vmatprep.subr.mxu0 0.0
    %3821 = vmatpush1.msra.mxu0 0.0
    %3822 = vmatprep.subr.mxu0 0.0
    %3823 = vmatpush1.msra.mxu0 0.0
    %3824 = vmatprep.subr.mxu0 0.0
    %3825 = vmatpush1.msra.mxu0 0.0
    %3826 = vmatprep.subr.mxu0 0.0
    %3827 = vmatpush1.msra.mxu0 0.0
    %3828 = vmatprep.subr.mxu0 0.0
    %3829 = vmatpush1.msra.mxu0 0.0
    %3830 = vmatprep.subr.mxu0 0.0
    %3831 = vmatpush1.msra.mxu0 0.0
    %3832 = vmatprep.subr.mxu0 0.0
    %3833 = vmatpush1.msra.mxu0 0.0
    %3834 = vmatprep.subr.mxu0 0.0
    %3835 = vmatpush1.msra.mxu0 0.0
    %3836 = vmatprep.subr.mxu0 0.0
    %3837 = vmatpush1.msra.mxu0 0.0
    %3838 = vmatprep.subr.mxu0 0.0
    %3839 = vmatpush1.msra.mxu0 0.0
    %3840 = vmatprep.subr.mxu0 0.0
    %3841 = vmatpush1.msra.mxu0 0.0
    %3842 = vmatprep.subr.mxu0 0.0
    %3843 = vmatpush1.msra.mxu0 0.0
    %3844 = vmatprep.subr.mxu0 0.0
    %3845 = vmatpush1.msra.mxu0 0.0
    %3846 = vmatprep.subr.mxu0 0.0
    %3847 = vmatpush1.msra.mxu0 0.0
    %3848 = vmatprep.subr.mxu0 0.0
    %3849 = vmatpush1.msra.mxu0 0.0
    %3850 = vmatprep.subr.mxu0 0.0
    %3851 = vmatpush1.msra.mxu0 0.0
    %3852 = vmatprep.subr.mxu0 0.0
    %3853 = vmatpush1.msra.mxu0 0.0
    %3854 = vmatprep.mubr.f32.mxu0 0.0
    %3855 = vmatmul.mubr.f32.gmra.mrb[0].mxu0 %v3788
    %v3856 = vpop.f32.mrb[0].mxu0
    %v3857 = vadd.f32 0.0, %v3856
    %v3858 = vpop.f32.mrb[0].mxu0
    %3859 = vdwg.mxu0
    %v3861 = vsel %vm2850, %v3180, 0
    %3863 = vmatprep.subr.mxu0 0.0
    %3864 = vmatpush1.msra.mxu0 %v412
    %3865 = vmatprep.subr.mxu0 0.0
    %3866 = vmatpush1.msra.mxu0 0.0
    %3867 = vmatprep.subr.mxu0 0.0
    %3868 = vmatpush1.msra.mxu0 0.0
    %3869 = vmatprep.subr.mxu0 0.0
    %3870 = vmatpush1.msra.mxu0 0.0
    %3871 = vmatprep.subr.mxu0 0.0
    %3872 = vmatpush1.msra.mxu0 0.0
    %3873 = vmatprep.subr.mxu0 0.0
    %3874 = vmatpush1.msra.mxu0 0.0
    %3875 = vmatprep.subr.mxu0 0.0
    %3876 = vmatpush1.msra.mxu0 0.0
    %3877 = vmatprep.subr.mxu0 0.0
    %3878 = vmatpush1.msra.mxu0 0.0
    %3879 = vmatprep.subr.mxu0 0.0
    %3880 = vmatpush1.msra.mxu0 0.0
    %3881 = vmatprep.subr.mxu0 0.0
    %3882 = vmatpush1.msra.mxu0 0.0
    %3883 = vmatprep.subr.mxu0 0.0
    %3884 = vmatpush1.msra.mxu0 0.0
    %3885 = vmatprep.subr.mxu0 0.0
    %3886 = vmatpush1.msra.mxu0 0.0
    %3887 = vmatprep.subr.mxu0 0.0
    %3888 = vmatpush1.msra.mxu0 0.0
    %3889 = vmatprep.subr.mxu0 0.0
    %3890 = vmatpush1.msra.mxu0 0.0
    %3891 = vmatprep.subr.mxu0 0.0
    %3892 = vmatpush1.msra.mxu0 0.0
    %3893 = vmatprep.subr.mxu0 0.0
    %3894 = vmatpush1.msra.mxu0 0.0
    %3895 = vmatprep.subr.mxu0 0.0
    %3896 = vmatpush1.msra.mxu0 0.0
    %3897 = vmatprep.subr.mxu0 0.0
    %3898 = vmatpush1.msra.mxu0 0.0
    %3899 = vmatprep.subr.mxu0 0.0
    %3900 = vmatpush1.msra.mxu0 0.0
    %3901 = vmatprep.subr.mxu0 0.0
    %3902 = vmatpush1.msra.mxu0 0.0
    %3903 = vmatprep.subr.mxu0 0.0
    %3904 = vmatpush1.msra.mxu0 0.0
    %3905 = vmatprep.subr.mxu0 0.0
    %3906 = vmatpush1.msra.mxu0 0.0
    %3907 = vmatprep.subr.mxu0 0.0
    %3908 = vmatpush1.msra.mxu0 0.0
    %3909 = vmatprep.subr.mxu0 0.0
    %3910 = vmatpush1.msra.mxu0 0.0
    %3911 = vmatprep.subr.mxu0 0.0
    %3912 = vmatpush1.msra.mxu0 0.0
    %3913 = vmatprep.subr.mxu0 0.0
    %3914 = vmatpush1.msra.mxu0 0.0
    %3915 = vmatprep.subr.mxu0 0.0
    %3916 = vmatpush1.msra.mxu0 0.0
    %3917 = vmatprep.subr.mxu0 0.0
    %3918 = vmatpush1.msra.mxu0 0.0
    %3919 = vmatprep.subr.mxu0 0.0
    %3920 = vmatpush1.msra.mxu0 0.0
    %3921 = vmatprep.subr.mxu0 0.0
    %3922 = vmatpush1.msra.mxu0 0.0
    %3923 = vmatprep.subr.mxu0 0.0
    %3924 = vmatpush1.msra.mxu0 0.0
    %3925 = vmatprep.subr.mxu0 0.0
    %3926 = vmatpush1.msra.mxu0 0.0
    %3927 = vmatprep.mubr.f32.mxu0 0.0
    %3928 = vmatmul.mubr.f32.gmra.mrb[0].mxu0 %v3861
    %v3929 = vpop.f32.mrb[0].mxu0
    %v3930 = vadd.f32 0.0, %v3929
    %v3931 = vpop.f32.mrb[0].mxu0
    %3932 = vdwg.mxu0
    %v3934 = vsel %vm2850, %v3181, 0
    %3936 = vmatprep.subr.mxu0 0.0
    %3937 = vmatpush1.msra.mxu0 %v414
    %3938 = vmatprep.subr.mxu0 0.0
    %3939 = vmatpush1.msra.mxu0 0.0
    %3940 = vmatprep.subr.mxu0 0.0
    %3941 = vmatpush1.msra.mxu0 0.0
    %3942 = vmatprep.subr.mxu0 0.0
    %3943 = vmatpush1.msra.mxu0 0.0
    %3944 = vmatprep.subr.mxu0 0.0
    %3945 = vmatpush1.msra.mxu0 0.0
    %3946 = vmatprep.subr.mxu0 0.0
    %3947 = vmatpush1.msra.mxu0 0.0
    %3948 = vmatprep.subr.mxu0 0.0
    %3949 = vmatpush1.msra.mxu0 0.0
    %3950 = vmatprep.subr.mxu0 0.0
    %3951 = vmatpush1.msra.mxu0 0.0
    %3952 = vmatprep.subr.mxu0 0.0
    %3953 = vmatpush1.msra.mxu0 0.0
    %3954 = vmatprep.subr.mxu0 0.0
    %3955 = vmatpush1.msra.mxu0 0.0
    %3956 = vmatprep.subr.mxu0 0.0
    %3957 = vmatpush1.msra.mxu0 0.0
    %3958 = vmatprep.subr.mxu0 0.0
    %3959 = vmatpush1.msra.mxu0 0.0
    %3960 = vmatprep.subr.mxu0 0.0
    %3961 = vmatpush1.msra.mxu0 0.0
    %3962 = vmatprep.subr.mxu0 0.0
    %3963 = vmatpush1.msra.mxu0 0.0
    %3964 = vmatprep.subr.mxu0 0.0
    %3965 = vmatpush1.msra.mxu0 0.0
    %3966 = vmatprep.subr.mxu0 0.0
    %3967 = vmatpush1.msra.mxu0 0.0
    %3968 = vmatprep.subr.mxu0 0.0
    %3969 = vmatpush1.msra.mxu0 0.0
    %3970 = vmatprep.subr.mxu0 0.0
    %3971 = vmatpush1.msra.mxu0 0.0
    %3972 = vmatprep.subr.mxu0 0.0
    %3973 = vmatpush1.msra.mxu0 0.0
    %3974 = vmatprep.subr.mxu0 0.0
    %3975 = vmatpush1.msra.mxu0 0.0
    %3976 = vmatprep.subr.mxu0 0.0
    %3977 = vmatpush1.msra.mxu0 0.0
    %3978 = vmatprep.subr.mxu0 0.0
    %3979 = vmatpush1.msra.mxu0 0.0
    %3980 = vmatprep.subr.mxu0 0.0
    %3981 = vmatpush1.msra.mxu0 0.0
    %3982 = vmatprep.subr.mxu0 0.0
    %3983 = vmatpush1.msra.mxu0 0.0
    %3984 = vmatprep.subr.mxu0 0.0
    %3985 = vmatpush1.msra.mxu0 0.0
    %3986 = vmatprep.subr.mxu0 0.0
    %3987 = vmatpush1.msra.mxu0 0.0
    %3988 = vmatprep.subr.mxu0 0.0
    %3989 = vmatpush1.msra.mxu0 0.0
    %3990 = vmatprep.subr.mxu0 0.0
    %3991 = vmatpush1.msra.mxu0 0.0
    %3992 = vmatprep.subr.mxu0 0.0
    %3993 = vmatpush1.msra.mxu0 0.0
    %3994 = vmatprep.subr.mxu0 0.0
    %3995 = vmatpush1.msra.mxu0 0.0
    %3996 = vmatprep.subr.mxu0 0.0
    %3997 = vmatpush1.msra.mxu0 0.0
    %3998 = vmatprep.subr.mxu0 0.0
    %3999 = vmatpush1.msra.mxu0 0.0
    %4000 = vmatprep.mubr.f32.mxu0 0.0
    %4001 = vmatmul.mubr.f32.gmra.mrb[0].mxu0 %v3934
    %v4002 = vpop.f32.mrb[0].mxu0
    %v4003 = vadd.f32 0.0, %v4002
    %v4004 = vpop.f32.mrb[0].mxu0
    %4005 = vdwg.mxu0
    %v4007 = vsel %vm2850, %v3182, 0
    %4009 = vmatprep.subr.mxu0 0.0
    %4010 = vmatpush1.msra.mxu0 %v416
    %4011 = vmatprep.subr.mxu0 0.0
    %4012 = vmatpush1.msra.mxu0 0.0
    %4013 = vmatprep.subr.mxu0 0.0
    %4014 = vmatpush1.msra.mxu0 0.0
    %4015 = vmatprep.subr.mxu0 0.0
    %4016 = vmatpush1.msra.mxu0 0.0
    %4017 = vmatprep.subr.mxu0 0.0
    %4018 = vmatpush1.msra.mxu0 0.0
    %4019 = vmatprep.subr.mxu0 0.0
    %4020 = vmatpush1.msra.mxu0 0.0
    %4021 = vmatprep.subr.mxu0 0.0
    %4022 = vmatpush1.msra.mxu0 0.0
    %4023 = vmatprep.subr.mxu0 0.0
    %4024 = vmatpush1.msra.mxu0 0.0
    %4025 = vmatprep.subr.mxu0 0.0
    %4026 = vmatpush1.msra.mxu0 0.0
    %4027 = vmatprep.subr.mxu0 0.0
    %4028 = vmatpush1.msra.mxu0 0.0
    %4029 = vmatprep.subr.mxu0 0.0
    %4030 = vmatpush1.msra.mxu0 0.0
    %4031 = vmatprep.subr.mxu0 0.0
    %4032 = vmatpush1.msra.mxu0 0.0
    %4033 = vmatprep.subr.mxu0 0.0
    %4034 = vmatpush1.msra.mxu0 0.0
    %4035 = vmatprep.subr.mxu0 0.0
    %4036 = vmatpush1.msra.mxu0 0.0
    %4037 = vmatprep.subr.mxu0 0.0
    %4038 = vmatpush1.msra.mxu0 0.0
    %4039 = vmatprep.subr.mxu0 0.0
    %4040 = vmatpush1.msra.mxu0 0.0
    %4041 = vmatprep.subr.mxu0 0.0
    %4042 = vmatpush1.msra.mxu0 0.0
    %4043 = vmatprep.subr.mxu0 0.0
    %4044 = vmatpush1.msra.mxu0 0.0
    %4045 = vmatprep.subr.mxu0 0.0
    %4046 = vmatpush1.msra.mxu0 0.0
    %4047 = vmatprep.subr.mxu0 0.0
    %4048 = vmatpush1.msra.mxu0 0.0
    %4049 = vmatprep.subr.mxu0 0.0
    %4050 = vmatpush1.msra.mxu0 0.0
    %4051 = vmatprep.subr.mxu0 0.0
    %4052 = vmatpush1.msra.mxu0 0.0
    %4053 = vmatprep.subr.mxu0 0.0
    %4054 = vmatpush1.msra.mxu0 0.0
    %4055 = vmatprep.subr.mxu0 0.0
    %4056 = vmatpush1.msra.mxu0 0.0
    %4057 = vmatprep.subr.mxu0 0.0
    %4058 = vmatpush1.msra.mxu0 0.0
    %4059 = vmatprep.subr.mxu0 0.0
    %4060 = vmatpush1.msra.mxu0 0.0
    %4061 = vmatprep.subr.mxu0 0.0
    %4062 = vmatpush1.msra.mxu0 0.0
    %4063 = vmatprep.subr.mxu0 0.0
    %4064 = vmatpush1.msra.mxu0 0.0
    %4065 = vmatprep.subr.mxu0 0.0
    %4066 = vmatpush1.msra.mxu0 0.0
    %4067 = vmatprep.subr.mxu0 0.0
    %4068 = vmatpush1.msra.mxu0 0.0
    %4069 = vmatprep.subr.mxu0 0.0
    %4070 = vmatpush1.msra.mxu0 0.0
    %4071 = vmatprep.subr.mxu0 0.0
    %4072 = vmatpush1.msra.mxu0 0.0
    %4073 = vmatprep.mubr.f32.mxu0 0.0
    %4074 = vmatmul.mubr.f32.gmra.mrb[0].mxu0 %v4007
    %v4075 = vpop.f32.mrb[0].mxu0
    %v4076 = vadd.f32 0.0, %v4075
    %v4077 = vpop.f32.mrb[0].mxu0
    %4078 = vdwg.mxu0
    %v4080 = vsel %vm2850, %v3183, 0
    %4082 = vmatprep.subr.mxu0 0.0
    %4083 = vmatpush1.msra.mxu0 %v422
    %4084 = vmatprep.subr.mxu0 0.0
    %4085 = vmatpush1.msra.mxu0 0.0
    %4086 = vmatprep.subr.mxu0 0.0
    %4087 = vmatpush1.msra.mxu0 0.0
    %4088 = vmatprep.subr.mxu0 0.0
    %4089 = vmatpush1.msra.mxu0 0.0
    %4090 = vmatprep.subr.mxu0 0.0
    %4091 = vmatpush1.msra.mxu0 0.0
    %4092 = vmatprep.subr.mxu0 0.0
    %4093 = vmatpush1.msra.mxu0 0.0
    %4094 = vmatprep.subr.mxu0 0.0
    %4095 = vmatpush1.msra.mxu0 0.0
    %4096 = vmatprep.subr.mxu0 0.0
    %4097 = vmatpush1.msra.mxu0 0.0
    %4098 = vmatprep.subr.mxu0 0.0
    %4099 = vmatpush1.msra.mxu0 0.0
    %4100 = vmatprep.subr.mxu0 0.0
    %4101 = vmatpush1.msra.mxu0 0.0
    %4102 = vmatprep.subr.mxu0 0.0
    %4103 = vmatpush1.msra.mxu0 0.0
    %4104 = vmatprep.subr.mxu0 0.0
    %4105 = vmatpush1.msra.mxu0 0.0
    %4106 = vmatprep.subr.mxu0 0.0
    %4107 = vmatpush1.msra.mxu0 0.0
    %4108 = vmatprep.subr.mxu0 0.0
    %4109 = vmatpush1.msra.mxu0 0.0
    %4110 = vmatprep.subr.mxu0 0.0
    %4111 = vmatpush1.msra.mxu0 0.0
    %4112 = vmatprep.subr.mxu0 0.0
    %4113 = vmatpush1.msra.mxu0 0.0
    %4114 = vmatprep.subr.mxu0 0.0
    %4115 = vmatpush1.msra.mxu0 0.0
    %4116 = vmatprep.subr.mxu0 0.0
    %4117 = vmatpush1.msra.mxu0 0.0
    %4118 = vmatprep.subr.mxu0 0.0
    %4119 = vmatpush1.msra.mxu0 0.0
    %4120 = vmatprep.subr.mxu0 0.0
    %4121 = vmatpush1.msra.mxu0 0.0
    %4122 = vmatprep.subr.mxu0 0.0
    %4123 = vmatpush1.msra.mxu0 0.0
    %4124 = vmatprep.subr.mxu0 0.0
    %4125 = vmatpush1.msra.mxu0 0.0
    %4126 = vmatprep.subr.mxu0 0.0
    %4127 = vmatpush1.msra.mxu0 0.0
    %4128 = vmatprep.subr.mxu0 0.0
    %4129 = vmatpush1.msra.mxu0 0.0
    %4130 = vmatprep.subr.mxu0 0.0
    %4131 = vmatpush1.msra.mxu0 0.0
    %4132 = vmatprep.subr.mxu0 0.0
    %4133 = vmatpush1.msra.mxu0 0.0
    %4134 = vmatprep.subr.mxu0 0.0
    %4135 = vmatpush1.msra.mxu0 0.0
    %4136 = vmatprep.subr.mxu0 0.0
    %4137 = vmatpush1.msra.mxu0 0.0
    %4138 = vmatprep.subr.mxu0 0.0
    %4139 = vmatpush1.msra.mxu0 0.0
    %4140 = vmatprep.subr.mxu0 0.0
    %4141 = vmatpush1.msra.mxu0 0.0
    %4142 = vmatprep.subr.mxu0 0.0
    %4143 = vmatpush1.msra.mxu0 0.0
    %4144 = vmatprep.subr.mxu0 0.0
    %4145 = vmatpush1.msra.mxu0 0.0
    %4146 = vmatprep.mubr.f32.mxu0 0.0
    %4147 = vmatmul.mubr.f32.gmra.mrb[0].mxu0 %v4080
    %v4148 = vpop.f32.mrb[0].mxu0
    %v4149 = vadd.f32 0.0, %v4148
    %v4150 = vpop.f32.mrb[0].mxu0
    %4151 = vdwg.mxu0
    %v4153 = vsel %vm2850, %v3184, 0
    %4155 = vmatprep.subr.mxu0 0.0
    %4156 = vmatpush1.msra.mxu0 %v424
    %4157 = vmatprep.subr.mxu0 0.0
    %4158 = vmatpush1.msra.mxu0 0.0
    %4159 = vmatprep.subr.mxu0 0.0
    %4160 = vmatpush1.msra.mxu0 0.0
    %4161 = vmatprep.subr.mxu0 0.0
    %4162 = vmatpush1.msra.mxu0 0.0
    %4163 = vmatprep.subr.mxu0 0.0
    %4164 = vmatpush1.msra.mxu0 0.0
    %4165 = vmatprep.subr.mxu0 0.0
    %4166 = vmatpush1.msra.mxu0 0.0
    %4167 = vmatprep.subr.mxu0 0.0
    %4168 = vmatpush1.msra.mxu0 0.0
    %4169 = vmatprep.subr.mxu0 0.0
    %4170 = vmatpush1.msra.mxu0 0.0
    %4171 = vmatprep.subr.mxu0 0.0
    %4172 = vmatpush1.msra.mxu0 0.0
    %4173 = vmatprep.subr.mxu0 0.0
    %4174 = vmatpush1.msra.mxu0 0.0
    %4175 = vmatprep.subr.mxu0 0.0
    %4176 = vmatpush1.msra.mxu0 0.0
    %4177 = vmatprep.subr.mxu0 0.0
    %4178 = vmatpush1.msra.mxu0 0.0
    %4179 = vmatprep.subr.mxu0 0.0
    %4180 = vmatpush1.msra.mxu0 0.0
    %4181 = vmatprep.subr.mxu0 0.0
    %4182 = vmatpush1.msra.mxu0 0.0
    %4183 = vmatprep.subr.mxu0 0.0
    %4184 = vmatpush1.msra.mxu0 0.0
    %4185 = vmatprep.subr.mxu0 0.0
    %4186 = vmatpush1.msra.mxu0 0.0
    %4187 = vmatprep.subr.mxu0 0.0
    %4188 = vmatpush1.msra.mxu0 0.0
    %4189 = vmatprep.subr.mxu0 0.0
    %4190 = vmatpush1.msra.mxu0 0.0
    %4191 = vmatprep.subr.mxu0 0.0
    %4192 = vmatpush1.msra.mxu0 0.0
    %4193 = vmatprep.subr.mxu0 0.0
    %4194 = vmatpush1.msra.mxu0 0.0
    %4195 = vmatprep.subr.mxu0 0.0
    %4196 = vmatpush1.msra.mxu0 0.0
    %4197 = vmatprep.subr.mxu0 0.0
    %4198 = vmatpush1.msra.mxu0 0.0
    %4199 = vmatprep.subr.mxu0 0.0
    %4200 = vmatpush1.msra.mxu0 0.0
    %4201 = vmatprep.subr.mxu0 0.0
    %4202 = vmatpush1.msra.mxu0 0.0
    %4203 = vmatprep.subr.mxu0 0.0
    %4204 = vmatpush1.msra.mxu0 0.0
    %4205 = vmatprep.subr.mxu0 0.0
    %4206 = vmatpush1.msra.mxu0 0.0
    %4207 = vmatprep.subr.mxu0 0.0
    %4208 = vmatpush1.msra.mxu0 0.0
    %4209 = vmatprep.subr.mxu0 0.0
    %4210 = vmatpush1.msra.mxu0 0.0
    %4211 = vmatprep.subr.mxu0 0.0
    %4212 = vmatpush1.msra.mxu0 0.0
    %4213 = vmatprep.subr.mxu0 0.0
    %4214 = vmatpush1.msra.mxu0 0.0
    %4215 = vmatprep.subr.mxu0 0.0
    %4216 = vmatpush1.msra.mxu0 0.0
    %4217 = vmatprep.subr.mxu0 0.0
    %4218 = vmatpush1.msra.mxu0 0.0
    %4219 = vmatprep.mubr.f32.mxu0 0.0
    %4220 = vmatmul.mubr.f32.gmra.mrb[0].mxu0 %v4153
    %v4221 = vpop.f32.mrb[0].mxu0
    %v4222 = vadd.f32 0.0, %v4221
    %v4223 = vpop.f32.mrb[0].mxu0
    %4224 = vdwg.mxu0
    %v4226 = vsel %vm2850, %v3185, 0
    %4228 = vmatprep.subr.mxu0 0.0
    %4229 = vmatpush1.msra.mxu0 %v426
    %4230 = vmatprep.subr.mxu0 0.0
    %4231 = vmatpush1.msra.mxu0 0.0
    %4232 = vmatprep.subr.mxu0 0.0
    %4233 = vmatpush1.msra.mxu0 0.0
    %4234 = vmatprep.subr.mxu0 0.0
    %4235 = vmatpush1.msra.mxu0 0.0
    %4236 = vmatprep.subr.mxu0 0.0
    %4237 = vmatpush1.msra.mxu0 0.0
    %4238 = vmatprep.subr.mxu0 0.0
    %4239 = vmatpush1.msra.mxu0 0.0
    %4240 = vmatprep.subr.mxu0 0.0
    %4241 = vmatpush1.msra.mxu0 0.0
    %4242 = vmatprep.subr.mxu0 0.0
    %4243 = vmatpush1.msra.mxu0 0.0
    %4244 = vmatprep.subr.mxu0 0.0
    %4245 = vmatpush1.msra.mxu0 0.0
    %4246 = vmatprep.subr.mxu0 0.0
    %4247 = vmatpush1.msra.mxu0 0.0
    %4248 = vmatprep.subr.mxu0 0.0
    %4249 = vmatpush1.msra.mxu0 0.0
    %4250 = vmatprep.subr.mxu0 0.0
    %4251 = vmatpush1.msra.mxu0 0.0
    %4252 = vmatprep.subr.mxu0 0.0
    %4253 = vmatpush1.msra.mxu0 0.0
    %4254 = vmatprep.subr.mxu0 0.0
    %4255 = vmatpush1.msra.mxu0 0.0
    %4256 = vmatprep.subr.mxu0 0.0
    %4257 = vmatpush1.msra.mxu0 0.0
    %4258 = vmatprep.subr.mxu0 0.0
    %4259 = vmatpush1.msra.mxu0 0.0
    %4260 = vmatprep.subr.mxu0 0.0
    %4261 = vmatpush1.msra.mxu0 0.0
    %4262 = vmatprep.subr.mxu0 0.0
    %4263 = vmatpush1.msra.mxu0 0.0
    %4264 = vmatprep.subr.mxu0 0.0
    %4265 = vmatpush1.msra.mxu0 0.0
    %4266 = vmatprep.subr.mxu0 0.0
    %4267 = vmatpush1.msra.mxu0 0.0
    %4268 = vmatprep.subr.mxu0 0.0
    %4269 = vmatpush1.msra.mxu0 0.0
    %4270 = vmatprep.subr.mxu0 0.0
    %4271 = vmatpush1.msra.mxu0 0.0
    %4272 = vmatprep.subr.mxu0 0.0
    %4273 = vmatpush1.msra.mxu0 0.0
    %4274 = vmatprep.subr.mxu0 0.0
    %4275 = vmatpush1.msra.mxu0 0.0
    %4276 = vmatprep.subr.mxu0 0.0
    %4277 = vmatpush1.msra.mxu0 0.0
    %4278 = vmatprep.subr.mxu0 0.0
    %4279 = vmatpush1.msra.mxu0 0.0
    %4280 = vmatprep.subr.mxu0 0.0
    %4281 = vmatpush1.msra.mxu0 0.0
    %4282 = vmatprep.subr.mxu0 0.0
    %4283 = vmatpush1.msra.mxu0 0.0
    %4284 = vmatprep.subr.mxu0 0.0
    %4285 = vmatpush1.msra.mxu0 0.0
    %4286 = vmatprep.subr.mxu0 0.0
    %4287 = vmatpush1.msra.mxu0 0.0
    %4288 = vmatprep.subr.mxu0 0.0
    %4289 = vmatpush1.msra.mxu0 0.0
    %4290 = vmatprep.subr.mxu0 0.0
    %4291 = vmatpush1.msra.mxu0 0.0
    %4292 = vmatprep.mubr.f32.mxu0 0.0
    %4293 = vmatmul.mubr.f32.gmra.mrb[0].mxu0 %v4226
    %v4294 = vpop.f32.mrb[0].mxu0
    %v4295 = vadd.f32 0.0, %v4294
    %v4296 = vpop.f32.mrb[0].mxu0
    %4297 = vdwg.mxu0
    %v4299 = vsel %vm2850, %v3186, 0
    %4301 = vmatprep.subr.mxu0 0.0
    %4302 = vmatpush1.msra.mxu0 %v428
    %4303 = vmatprep.subr.mxu0 0.0
    %4304 = vmatpush1.msra.mxu0 0.0
    %4305 = vmatprep.subr.mxu0 0.0
    %4306 = vmatpush1.msra.mxu0 0.0
    %4307 = vmatprep.subr.mxu0 0.0
    %4308 = vmatpush1.msra.mxu0 0.0
    %4309 = vmatprep.subr.mxu0 0.0
    %4310 = vmatpush1.msra.mxu0 0.0
    %4311 = vmatprep.subr.mxu0 0.0
    %4312 = vmatpush1.msra.mxu0 0.0
    %4313 = vmatprep.subr.mxu0 0.0
    %4314 = vmatpush1.msra.mxu0 0.0
    %4315 = vmatprep.subr.mxu0 0.0
    %4316 = vmatpush1.msra.mxu0 0.0
    %4317 = vmatprep.subr.mxu0 0.0
    %4318 = vmatpush1.msra.mxu0 0.0
    %4319 = vmatprep.subr.mxu0 0.0
    %4320 = vmatpush1.msra.mxu0 0.0
    %4321 = vmatprep.subr.mxu0 0.0
    %4322 = vmatpush1.msra.mxu0 0.0
    %4323 = vmatprep.subr.mxu0 0.0
    %4324 = vmatpush1.msra.mxu0 0.0
    %4325 = vmatprep.subr.mxu0 0.0
    %4326 = vmatpush1.msra.mxu0 0.0
    %4327 = vmatprep.subr.mxu0 0.0
    %4328 = vmatpush1.msra.mxu0 0.0
    %4329 = vmatprep.subr.mxu0 0.0
    %4330 = vmatpush1.msra.mxu0 0.0
    %4331 = vmatprep.subr.mxu0 0.0
    %4332 = vmatpush1.msra.mxu0 0.0
    %4333 = vmatprep.subr.mxu0 0.0
    %4334 = vmatpush1.msra.mxu0 0.0
    %4335 = vmatprep.subr.mxu0 0.0
    %4336 = vmatpush1.msra.mxu0 0.0
    %4337 = vmatprep.subr.mxu0 0.0
    %4338 = vmatpush1.msra.mxu0 0.0
    %4339 = vmatprep.subr.mxu0 0.0
    %4340 = vmatpush1.msra.mxu0 0.0
    %4341 = vmatprep.subr.mxu0 0.0
    %4342 = vmatpush1.msra.mxu0 0.0
    %4343 = vmatprep.subr.mxu0 0.0
    %4344 = vmatpush1.msra.mxu0 0.0
    %4345 = vmatprep.subr.mxu0 0.0
    %4346 = vmatpush1.msra.mxu0 0.0
    %4347 = vmatprep.subr.mxu0 0.0
    %4348 = vmatpush1.msra.mxu0 0.0
    %4349 = vmatprep.subr.mxu0 0.0
    %4350 = vmatpush1.msra.mxu0 0.0
    %4351 = vmatprep.subr.mxu0 0.0
    %4352 = vmatpush1.msra.mxu0 0.0
    %4353 = vmatprep.subr.mxu0 0.0
    %4354 = vmatpush1.msra.mxu0 0.0
    %4355 = vmatprep.subr.mxu0 0.0
    %4356 = vmatpush1.msra.mxu0 0.0
    %4357 = vmatprep.subr.mxu0 0.0
    %4358 = vmatpush1.msra.mxu0 0.0
    %4359 = vmatprep.subr.mxu0 0.0
    %4360 = vmatpush1.msra.mxu0 0.0
    %4361 = vmatprep.subr.mxu0 0.0
    %4362 = vmatpush1.msra.mxu0 0.0
    %4363 = vmatprep.subr.mxu0 0.0
    %4364 = vmatpush1.msra.mxu0 0.0
    %4365 = vmatprep.mubr.f32.mxu0 0.0
    %4366 = vmatmul.mubr.f32.gmra.mrb[0].mxu0 %v4299
    %v4367 = vpop.f32.mrb[0].mxu0
    %v4368 = vadd.f32 0.0, %v4367
    %v4369 = vpop.f32.mrb[0].mxu0
    %4370 = vdwg.mxu0
    %v4372 = vsel %vm2850, %v3187, 0
    %4374 = vmatprep.subr.mxu0 0.0
    %4375 = vmatpush1.msra.mxu0 %v434
    %4376 = vmatprep.subr.mxu0 0.0
    %4377 = vmatpush1.msra.mxu0 0.0
    %4378 = vmatprep.subr.mxu0 0.0
    %4379 = vmatpush1.msra.mxu0 0.0
    %4380 = vmatprep.subr.mxu0 0.0
    %4381 = vmatpush1.msra.mxu0 0.0
    %4382 = vmatprep.subr.mxu0 0.0
    %4383 = vmatpush1.msra.mxu0 0.0
    %4384 = vmatprep.subr.mxu0 0.0
    %4385 = vmatpush1.msra.mxu0 0.0
    %4386 = vmatprep.subr.mxu0 0.0
    %4387 = vmatpush1.msra.mxu0 0.0
    %4388 = vmatprep.subr.mxu0 0.0
    %4389 = vmatpush1.msra.mxu0 0.0
    %4390 = vmatprep.subr.mxu0 0.0
    %4391 = vmatpush1.msra.mxu0 0.0
    %4392 = vmatprep.subr.mxu0 0.0
    %4393 = vmatpush1.msra.mxu0 0.0
    %4394 = vmatprep.subr.mxu0 0.0
    %4395 = vmatpush1.msra.mxu0 0.0
    %4396 = vmatprep.subr.mxu0 0.0
    %4397 = vmatpush1.msra.mxu0 0.0
    %4398 = vmatprep.subr.mxu0 0.0
    %4399 = vmatpush1.msra.mxu0 0.0
    %4400 = vmatprep.subr.mxu0 0.0
    %4401 = vmatpush1.msra.mxu0 0.0
    %4402 = vmatprep.subr.mxu0 0.0
    %4403 = vmatpush1.msra.mxu0 0.0
    %4404 = vmatprep.subr.mxu0 0.0
    %4405 = vmatpush1.msra.mxu0 0.0
    %4406 = vmatprep.subr.mxu0 0.0
    %4407 = vmatpush1.msra.mxu0 0.0
    %4408 = vmatprep.subr.mxu0 0.0
    %4409 = vmatpush1.msra.mxu0 0.0
    %4410 = vmatprep.subr.mxu0 0.0
    %4411 = vmatpush1.msra.mxu0 0.0
    %4412 = vmatprep.subr.mxu0 0.0
    %4413 = vmatpush1.msra.mxu0 0.0
    %4414 = vmatprep.subr.mxu0 0.0
    %4415 = vmatpush1.msra.mxu0 0.0
    %4416 = vmatprep.subr.mxu0 0.0
    %4417 = vmatpush1.msra.mxu0 0.0
    %4418 = vmatprep.subr.mxu0 0.0
    %4419 = vmatpush1.msra.mxu0 0.0
    %4420 = vmatprep.subr.mxu0 0.0
    %4421 = vmatpush1.msra.mxu0 0.0
    %4422 = vmatprep.subr.mxu0 0.0
    %4423 = vmatpush1.msra.mxu0 0.0
    %4424 = vmatprep.subr.mxu0 0.0
    %4425 = vmatpush1.msra.mxu0 0.0
    %4426 = vmatprep.subr.mxu0 0.0
    %4427 = vmatpush1.msra.mxu0 0.0
    %4428 = vmatprep.subr.mxu0 0.0
    %4429 = vmatpush1.msra.mxu0 0.0
    %4430 = vmatprep.subr.mxu0 0.0
    %4431 = vmatpush1.msra.mxu0 0.0
    %4432 = vmatprep.subr.mxu0 0.0
    %4433 = vmatpush1.msra.mxu0 0.0
    %4434 = vmatprep.subr.mxu0 0.0
    %4435 = vmatpush1.msra.mxu0 0.0
    %4436 = vmatprep.subr.mxu0 0.0
    %4437 = vmatpush1.msra.mxu0 0.0
    %4438 = vmatprep.mubr.f32.mxu0 0.0
    %4439 = vmatmul.mubr.f32.gmra.mrb[0].mxu0 %v4372
    %v4440 = vpop.f32.mrb[0].mxu0
    %v4441 = vadd.f32 0.0, %v4440
    %v4442 = vpop.f32.mrb[0].mxu0
    %4443 = vdwg.mxu0
    %v4445 = vsel %vm2850, %v3188, 0
    %4447 = vmatprep.subr.mxu0 0.0
    %4448 = vmatpush1.msra.mxu0 %v436
    %4449 = vmatprep.subr.mxu0 0.0
    %4450 = vmatpush1.msra.mxu0 0.0
    %4451 = vmatprep.subr.mxu0 0.0
    %4452 = vmatpush1.msra.mxu0 0.0
    %4453 = vmatprep.subr.mxu0 0.0
    %4454 = vmatpush1.msra.mxu0 0.0
    %4455 = vmatprep.subr.mxu0 0.0
    %4456 = vmatpush1.msra.mxu0 0.0
    %4457 = vmatprep.subr.mxu0 0.0
    %4458 = vmatpush1.msra.mxu0 0.0
    %4459 = vmatprep.subr.mxu0 0.0
    %4460 = vmatpush1.msra.mxu0 0.0
    %4461 = vmatprep.subr.mxu0 0.0
    %4462 = vmatpush1.msra.mxu0 0.0
    %4463 = vmatprep.subr.mxu0 0.0
    %4464 = vmatpush1.msra.mxu0 0.0
    %4465 = vmatprep.subr.mxu0 0.0
    %4466 = vmatpush1.msra.mxu0 0.0
    %4467 = vmatprep.subr.mxu0 0.0
    %4468 = vmatpush1.msra.mxu0 0.0
    %4469 = vmatprep.subr.mxu0 0.0
    %4470 = vmatpush1.msra.mxu0 0.0
    %4471 = vmatprep.subr.mxu0 0.0
    %4472 = vmatpush1.msra.mxu0 0.0
    %4473 = vmatprep.subr.mxu0 0.0
    %4474 = vmatpush1.msra.mxu0 0.0
    %4475 = vmatprep.subr.mxu0 0.0
    %4476 = vmatpush1.msra.mxu0 0.0
    %4477 = vmatprep.subr.mxu0 0.0
    %4478 = vmatpush1.msra.mxu0 0.0
    %4479 = vmatprep.subr.mxu0 0.0
    %4480 = vmatpush1.msra.mxu0 0.0
    %4481 = vmatprep.subr.mxu0 0.0
    %4482 = vmatpush1.msra.mxu0 0.0
    %4483 = vmatprep.subr.mxu0 0.0
    %4484 = vmatpush1.msra.mxu0 0.0
    %4485 = vmatprep.subr.mxu0 0.0
    %4486 = vmatpush1.msra.mxu0 0.0
    %4487 = vmatprep.subr.mxu0 0.0
    %4488 = vmatpush1.msra.mxu0 0.0
    %4489 = vmatprep.subr.mxu0 0.0
    %4490 = vmatpush1.msra.mxu0 0.0
    %4491 = vmatprep.subr.mxu0 0.0
    %4492 = vmatpush1.msra.mxu0 0.0
    %4493 = vmatprep.subr.mxu0 0.0
    %4494 = vmatpush1.msra.mxu0 0.0
    %4495 = vmatprep.subr.mxu0 0.0
    %4496 = vmatpush1.msra.mxu0 0.0
    %4497 = vmatprep.subr.mxu0 0.0
    %4498 = vmatpush1.msra.mxu0 0.0
    %4499 = vmatprep.subr.mxu0 0.0
    %4500 = vmatpush1.msra.mxu0 0.0
    %4501 = vmatprep.subr.mxu0 0.0
    %4502 = vmatpush1.msra.mxu0 0.0
    %4503 = vmatprep.subr.mxu0 0.0
    %4504 = vmatpush1.msra.mxu0 0.0
    %4505 = vmatprep.subr.mxu0 0.0
    %4506 = vmatpush1.msra.mxu0 0.0
    %4507 = vmatprep.subr.mxu0 0.0
    %4508 = vmatpush1.msra.mxu0 0.0
    %4509 = vmatprep.subr.mxu0 0.0
    %4510 = vmatpush1.msra.mxu0 0.0
    %4511 = vmatprep.mubr.f32.mxu0 0.0
    %4512 = vmatmul.mubr.f32.gmra.mrb[0].mxu0 %v4445
    %v4513 = vpop.f32.mrb[0].mxu0
    %v4514 = vadd.f32 0.0, %v4513
    %v4515 = vpop.f32.mrb[0].mxu0
    %4516 = vdwg.mxu0
    %v4518 = vsel %vm2850, %v3189, 0
    %4520 = vmatprep.subr.mxu0 0.0
    %4521 = vmatpush1.msra.mxu0 %v438
    %4522 = vmatprep.subr.mxu0 0.0
    %4523 = vmatpush1.msra.mxu0 0.0
    %4524 = vmatprep.subr.mxu0 0.0
    %4525 = vmatpush1.msra.mxu0 0.0
    %4526 = vmatprep.subr.mxu0 0.0
    %4527 = vmatpush1.msra.mxu0 0.0
    %4528 = vmatprep.subr.mxu0 0.0
    %4529 = vmatpush1.msra.mxu0 0.0
    %4530 = vmatprep.subr.mxu0 0.0
    %4531 = vmatpush1.msra.mxu0 0.0
    %4532 = vmatprep.subr.mxu0 0.0
    %4533 = vmatpush1.msra.mxu0 0.0
    %4534 = vmatprep.subr.mxu0 0.0
    %4535 = vmatpush1.msra.mxu0 0.0
    %4536 = vmatprep.subr.mxu0 0.0
    %4537 = vmatpush1.msra.mxu0 0.0
    %4538 = vmatprep.subr.mxu0 0.0
    %4539 = vmatpush1.msra.mxu0 0.0
    %4540 = vmatprep.subr.mxu0 0.0
    %4541 = vmatpush1.msra.mxu0 0.0
    %4542 = vmatprep.subr.mxu0 0.0
    %4543 = vmatpush1.msra.mxu0 0.0
    %4544 = vmatprep.subr.mxu0 0.0
    %4545 = vmatpush1.msra.mxu0 0.0
    %4546 = vmatprep.subr.mxu0 0.0
    %4547 = vmatpush1.msra.mxu0 0.0
    %4548 = vmatprep.subr.mxu0 0.0
    %4549 = vmatpush1.msra.mxu0 0.0
    %4550 = vmatprep.subr.mxu0 0.0
    %4551 = vmatpush1.msra.mxu0 0.0
    %4552 = vmatprep.subr.mxu0 0.0
    %4553 = vmatpush1.msra.mxu0 0.0
    %4554 = vmatprep.subr.mxu0 0.0
    %4555 = vmatpush1.msra.mxu0 0.0
    %4556 = vmatprep.subr.mxu0 0.0
    %4557 = vmatpush1.msra.mxu0 0.0
    %4558 = vmatprep.subr.mxu0 0.0
    %4559 = vmatpush1.msra.mxu0 0.0
    %4560 = vmatprep.subr.mxu0 0.0
    %4561 = vmatpush1.msra.mxu0 0.0
    %4562 = vmatprep.subr.mxu0 0.0
    %4563 = vmatpush1.msra.mxu0 0.0
    %4564 = vmatprep.subr.mxu0 0.0
    %4565 = vmatpush1.msra.mxu0 0.0
    %4566 = vmatprep.subr.mxu0 0.0
    %4567 = vmatpush1.msra.mxu0 0.0
    %4568 = vmatprep.subr.mxu0 0.0
    %4569 = vmatpush1.msra.mxu0 0.0
    %4570 = vmatprep.subr.mxu0 0.0
    %4571 = vmatpush1.msra.mxu0 0.0
    %4572 = vmatprep.subr.mxu0 0.0
    %4573 = vmatpush1.msra.mxu0 0.0
    %4574 = vmatprep.subr.mxu0 0.0
    %4575 = vmatpush1.msra.mxu0 0.0
    %4576 = vmatprep.subr.mxu0 0.0
    %4577 = vmatpush1.msra.mxu0 0.0
    %4578 = vmatprep.subr.mxu0 0.0
    %4579 = vmatpush1.msra.mxu0 0.0
    %4580 = vmatprep.subr.mxu0 0.0
    %4581 = vmatpush1.msra.mxu0 0.0
    %4582 = vmatprep.subr.mxu0 0.0
    %4583 = vmatpush1.msra.mxu0 0.0
    %4584 = vmatprep.mubr.f32.mxu0 0.0
    %4585 = vmatmul.mubr.f32.gmra.mrb[0].mxu0 %v4518
    %v4586 = vpop.f32.mrb[0].mxu0
    %v4587 = vadd.f32 0.0, %v4586
    %v4588 = vpop.f32.mrb[0].mxu0
    %4589 = vdwg.mxu0
    %v4591 = vsel %vm2850, %v3190, 0
    %4593 = vmatprep.subr.mxu0 0.0
    %4594 = vmatpush1.msra.mxu0 %v440
    %4595 = vmatprep.subr.mxu0 0.0
    %4596 = vmatpush1.msra.mxu0 0.0
    %4597 = vmatprep.subr.mxu0 0.0
    %4598 = vmatpush1.msra.mxu0 0.0
    %4599 = vmatprep.subr.mxu0 0.0
    %4600 = vmatpush1.msra.mxu0 0.0
    %4601 = vmatprep.subr.mxu0 0.0
    %4602 = vmatpush1.msra.mxu0 0.0
    %4603 = vmatprep.subr.mxu0 0.0
    %4604 = vmatpush1.msra.mxu0 0.0
    %4605 = vmatprep.subr.mxu0 0.0
    %4606 = vmatpush1.msra.mxu0 0.0
    %4607 = vmatprep.subr.mxu0 0.0
    %4608 = vmatpush1.msra.mxu0 0.0
    %4609 = vmatprep.subr.mxu0 0.0
    %4610 = vmatpush1.msra.mxu0 0.0
    %4611 = vmatprep.subr.mxu0 0.0
    %4612 = vmatpush1.msra.mxu0 0.0
    %4613 = vmatprep.subr.mxu0 0.0
    %4614 = vmatpush1.msra.mxu0 0.0
    %4615 = vmatprep.subr.mxu0 0.0
    %4616 = vmatpush1.msra.mxu0 0.0
    %4617 = vmatprep.subr.mxu0 0.0
    %4618 = vmatpush1.msra.mxu0 0.0
    %4619 = vmatprep.subr.mxu0 0.0
    %4620 = vmatpush1.msra.mxu0 0.0
    %4621 = vmatprep.subr.mxu0 0.0
    %4622 = vmatpush1.msra.mxu0 0.0
    %4623 = vmatprep.subr.mxu0 0.0
    %4624 = vmatpush1.msra.mxu0 0.0
    %4625 = vmatprep.subr.mxu0 0.0
    %4626 = vmatpush1.msra.mxu0 0.0
    %4627 = vmatprep.subr.mxu0 0.0
    %4628 = vmatpush1.msra.mxu0 0.0
    %4629 = vmatprep.subr.mxu0 0.0
    %4630 = vmatpush1.msra.mxu0 0.0
    %4631 = vmatprep.subr.mxu0 0.0
    %4632 = vmatpush1.msra.mxu0 0.0
    %4633 = vmatprep.subr.mxu0 0.0
    %4634 = vmatpush1.msra.mxu0 0.0
    %4635 = vmatprep.subr.mxu0 0.0
    %4636 = vmatpush1.msra.mxu0 0.0
    %4637 = vmatprep.subr.mxu0 0.0
    %4638 = vmatpush1.msra.mxu0 0.0
    %4639 = vmatprep.subr.mxu0 0.0
    %4640 = vmatpush1.msra.mxu0 0.0
    %4641 = vmatprep.subr.mxu0 0.0
    %4642 = vmatpush1.msra.mxu0 0.0
    %4643 = vmatprep.subr.mxu0 0.0
    %4644 = vmatpush1.msra.mxu0 0.0
    %4645 = vmatprep.subr.mxu0 0.0
    %4646 = vmatpush1.msra.mxu0 0.0
    %4647 = vmatprep.subr.mxu0 0.0
    %4648 = vmatpush1.msra.mxu0 0.0
    %4649 = vmatprep.subr.mxu0 0.0
    %4650 = vmatpush1.msra.mxu0 0.0
    %4651 = vmatprep.subr.mxu0 0.0
    %4652 = vmatpush1.msra.mxu0 0.0
    %4653 = vmatprep.subr.mxu0 0.0
    %4654 = vmatpush1.msra.mxu0 0.0
    %4655 = vmatprep.subr.mxu0 0.0
    %4656 = vmatpush1.msra.mxu0 0.0
    %4657 = vmatprep.mubr.f32.mxu0 0.0
    %4658 = vmatmul.mubr.f32.gmra.mrb[0].mxu0 %v4591
    %v4659 = vpop.f32.mrb[0].mxu0
    %v4660 = vadd.f32 0.0, %v4659
    %v4661 = vpop.f32.mrb[0].mxu0
    %4662 = vdwg.mxu0
    %v4664 = vsel %vm2850, %v3191, 0
    %4666 = vmatprep.subr.mxu0 0.0
    %4667 = vmatpush1.msra.mxu0 %v446
    %4668 = vmatprep.subr.mxu0 0.0
    %4669 = vmatpush1.msra.mxu0 0.0
    %4670 = vmatprep.subr.mxu0 0.0
    %4671 = vmatpush1.msra.mxu0 0.0
    %4672 = vmatprep.subr.mxu0 0.0
    %4673 = vmatpush1.msra.mxu0 0.0
    %4674 = vmatprep.subr.mxu0 0.0
    %4675 = vmatpush1.msra.mxu0 0.0
    %4676 = vmatprep.subr.mxu0 0.0
    %4677 = vmatpush1.msra.mxu0 0.0
    %4678 = vmatprep.subr.mxu0 0.0
    %4679 = vmatpush1.msra.mxu0 0.0
    %4680 = vmatprep.subr.mxu0 0.0
    %4681 = vmatpush1.msra.mxu0 0.0
    %4682 = vmatprep.subr.mxu0 0.0
    %4683 = vmatpush1.msra.mxu0 0.0
    %4684 = vmatprep.subr.mxu0 0.0
    %4685 = vmatpush1.msra.mxu0 0.0
    %4686 = vmatprep.subr.mxu0 0.0
    %4687 = vmatpush1.msra.mxu0 0.0
    %4688 = vmatprep.subr.mxu0 0.0
    %4689 = vmatpush1.msra.mxu0 0.0
    %4690 = vmatprep.subr.mxu0 0.0
    %4691 = vmatpush1.msra.mxu0 0.0
    %4692 = vmatprep.subr.mxu0 0.0
    %4693 = vmatpush1.msra.mxu0 0.0
    %4694 = vmatprep.subr.mxu0 0.0
    %4695 = vmatpush1.msra.mxu0 0.0
    %4696 = vmatprep.subr.mxu0 0.0
    %4697 = vmatpush1.msra.mxu0 0.0
    %4698 = vmatprep.subr.mxu0 0.0
    %4699 = vmatpush1.msra.mxu0 0.0
    %4700 = vmatprep.subr.mxu0 0.0
    %4701 = vmatpush1.msra.mxu0 0.0
    %4702 = vmatprep.subr.mxu0 0.0
    %4703 = vmatpush1.msra.mxu0 0.0
    %4704 = vmatprep.subr.mxu0 0.0
    %4705 = vmatpush1.msra.mxu0 0.0
    %4706 = vmatprep.subr.mxu0 0.0
    %4707 = vmatpush1.msra.mxu0 0.0
    %4708 = vmatprep.subr.mxu0 0.0
    %4709 = vmatpush1.msra.mxu0 0.0
    %4710 = vmatprep.subr.mxu0 0.0
    %4711 = vmatpush1.msra.mxu0 0.0
    %4712 = vmatprep.subr.mxu0 0.0
    %4713 = vmatpush1.msra.mxu0 0.0
    %4714 = vmatprep.subr.mxu0 0.0
    %4715 = vmatpush1.msra.mxu0 0.0
    %4716 = vmatprep.subr.mxu0 0.0
    %4717 = vmatpush1.msra.mxu0 0.0
    %4718 = vmatprep.subr.mxu0 0.0
    %4719 = vmatpush1.msra.mxu0 0.0
    %4720 = vmatprep.subr.mxu0 0.0
    %4721 = vmatpush1.msra.mxu0 0.0
    %4722 = vmatprep.subr.mxu0 0.0
    %4723 = vmatpush1.msra.mxu0 0.0
    %4724 = vmatprep.subr.mxu0 0.0
    %4725 = vmatpush1.msra.mxu0 0.0
    %4726 = vmatprep.subr.mxu0 0.0
    %4727 = vmatpush1.msra.mxu0 0.0
    %4728 = vmatprep.subr.mxu0 0.0
    %4729 = vmatpush1.msra.mxu0 0.0
    %4730 = vmatprep.mubr.f32.mxu0 0.0
    %4731 = vmatmul.mubr.f32.gmra.mrb[0].mxu0 %v4664
    %v4732 = vpop.f32.mrb[0].mxu0
    %v4733 = vadd.f32 0.0, %v4732
    %v4734 = vpop.f32.mrb[0].mxu0
    %4735 = vdwg.mxu0
    %v4737 = vsel %vm2850, %v3192, 0
    %4739 = vmatprep.subr.mxu0 0.0
    %4740 = vmatpush1.msra.mxu0 %v448
    %4741 = vmatprep.subr.mxu0 0.0
    %4742 = vmatpush1.msra.mxu0 0.0
    %4743 = vmatprep.subr.mxu0 0.0
    %4744 = vmatpush1.msra.mxu0 0.0
    %4745 = vmatprep.subr.mxu0 0.0
    %4746 = vmatpush1.msra.mxu0 0.0
    %4747 = vmatprep.subr.mxu0 0.0
    %4748 = vmatpush1.msra.mxu0 0.0
    %4749 = vmatprep.subr.mxu0 0.0
    %4750 = vmatpush1.msra.mxu0 0.0
    %4751 = vmatprep.subr.mxu0 0.0
    %4752 = vmatpush1.msra.mxu0 0.0
    %4753 = vmatprep.subr.mxu0 0.0
    %4754 = vmatpush1.msra.mxu0 0.0
    %4755 = vmatprep.subr.mxu0 0.0
    %4756 = vmatpush1.msra.mxu0 0.0
    %4757 = vmatprep.subr.mxu0 0.0
    %4758 = vmatpush1.msra.mxu0 0.0
    %4759 = vmatprep.subr.mxu0 0.0
    %4760 = vmatpush1.msra.mxu0 0.0
    %4761 = vmatprep.subr.mxu0 0.0
    %4762 = vmatpush1.msra.mxu0 0.0
    %4763 = vmatprep.subr.mxu0 0.0
    %4764 = vmatpush1.msra.mxu0 0.0
    %4765 = vmatprep.subr.mxu0 0.0
    %4766 = vmatpush1.msra.mxu0 0.0
    %4767 = vmatprep.subr.mxu0 0.0
    %4768 = vmatpush1.msra.mxu0 0.0
    %4769 = vmatprep.subr.mxu0 0.0
    %4770 = vmatpush1.msra.mxu0 0.0
    %4771 = vmatprep.subr.mxu0 0.0
    %4772 = vmatpush1.msra.mxu0 0.0
    %4773 = vmatprep.subr.mxu0 0.0
    %4774 = vmatpush1.msra.mxu0 0.0
    %4775 = vmatprep.subr.mxu0 0.0
    %4776 = vmatpush1.msra.mxu0 0.0
    %4777 = vmatprep.subr.mxu0 0.0
    %4778 = vmatpush1.msra.mxu0 0.0
    %4779 = vmatprep.subr.mxu0 0.0
    %4780 = vmatpush1.msra.mxu0 0.0
    %4781 = vmatprep.subr.mxu0 0.0
    %4782 = vmatpush1.msra.mxu0 0.0
    %4783 = vmatprep.subr.mxu0 0.0
    %4784 = vmatpush1.msra.mxu0 0.0
    %4785 = vmatprep.subr.mxu0 0.0
    %4786 = vmatpush1.msra.mxu0 0.0
    %4787 = vmatprep.subr.mxu0 0.0
    %4788 = vmatpush1.msra.mxu0 0.0
    %4789 = vmatprep.subr.mxu0 0.0
    %4790 = vmatpush1.msra.mxu0 0.0
    %4791 = vmatprep.subr.mxu0 0.0
    %4792 = vmatpush1.msra.mxu0 0.0
    %4793 = vmatprep.subr.mxu0 0.0
    %4794 = vmatpush1.msra.mxu0 0.0
    %4795 = vmatprep.subr.mxu0 0.0
    %4796 = vmatpush1.msra.mxu0 0.0
    %4797 = vmatprep.subr.mxu0 0.0
    %4798 = vmatpush1.msra.mxu0 0.0
    %4799 = vmatprep.subr.mxu0 0.0
    %4800 = vmatpush1.msra.mxu0 0.0
    %4801 = vmatprep.subr.mxu0 0.0
    %4802 = vmatpush1.msra.mxu0 0.0
    %4803 = vmatprep.mubr.f32.mxu0 0.0
    %4804 = vmatmul.mubr.f32.gmra.mrb[0].mxu0 %v4737
    %v4805 = vpop.f32.mrb[0].mxu0
    %v4806 = vadd.f32 0.0, %v4805
    %v4807 = vpop.f32.mrb[0].mxu0
    %4808 = vdwg.mxu0
    %v4810 = vsel %vm2850, %v3193, 0
    %4812 = vmatprep.subr.mxu0 0.0
    %4813 = vmatpush1.msra.mxu0 %v450
    %4814 = vmatprep.subr.mxu0 0.0
    %4815 = vmatpush1.msra.mxu0 0.0
    %4816 = vmatprep.subr.mxu0 0.0
    %4817 = vmatpush1.msra.mxu0 0.0
    %4818 = vmatprep.subr.mxu0 0.0
    %4819 = vmatpush1.msra.mxu0 0.0
    %4820 = vmatprep.subr.mxu0 0.0
    %4821 = vmatpush1.msra.mxu0 0.0
    %4822 = vmatprep.subr.mxu0 0.0
    %4823 = vmatpush1.msra.mxu0 0.0
    %4824 = vmatprep.subr.mxu0 0.0
    %4825 = vmatpush1.msra.mxu0 0.0
    %4826 = vmatprep.subr.mxu0 0.0
    %4827 = vmatpush1.msra.mxu0 0.0
    %4828 = vmatprep.subr.mxu0 0.0
    %4829 = vmatpush1.msra.mxu0 0.0
    %4830 = vmatprep.subr.mxu0 0.0
    %4831 = vmatpush1.msra.mxu0 0.0
    %4832 = vmatprep.subr.mxu0 0.0
    %4833 = vmatpush1.msra.mxu0 0.0
    %4834 = vmatprep.subr.mxu0 0.0
    %4835 = vmatpush1.msra.mxu0 0.0
    %4836 = vmatprep.subr.mxu0 0.0
    %4837 = vmatpush1.msra.mxu0 0.0
    %4838 = vmatprep.subr.mxu0 0.0
    %4839 = vmatpush1.msra.mxu0 0.0
    %4840 = vmatprep.subr.mxu0 0.0
    %4841 = vmatpush1.msra.mxu0 0.0
    %4842 = vmatprep.subr.mxu0 0.0
    %4843 = vmatpush1.msra.mxu0 0.0
    %4844 = vmatprep.subr.mxu0 0.0
    %4845 = vmatpush1.msra.mxu0 0.0
    %4846 = vmatprep.subr.mxu0 0.0
    %4847 = vmatpush1.msra.mxu0 0.0
    %4848 = vmatprep.subr.mxu0 0.0
    %4849 = vmatpush1.msra.mxu0 0.0
    %4850 = vmatprep.subr.mxu0 0.0
    %4851 = vmatpush1.msra.mxu0 0.0
    %4852 = vmatprep.subr.mxu0 0.0
    %4853 = vmatpush1.msra.mxu0 0.0
    %4854 = vmatprep.subr.mxu0 0.0
    %4855 = vmatpush1.msra.mxu0 0.0
    %4856 = vmatprep.subr.mxu0 0.0
    %4857 = vmatpush1.msra.mxu0 0.0
    %4858 = vmatprep.subr.mxu0 0.0
    %4859 = vmatpush1.msra.mxu0 0.0
    %4860 = vmatprep.subr.mxu0 0.0
    %4861 = vmatpush1.msra.mxu0 0.0
    %4862 = vmatprep.subr.mxu0 0.0
    %4863 = vmatpush1.msra.mxu0 0.0
    %4864 = vmatprep.subr.mxu0 0.0
    %4865 = vmatpush1.msra.mxu0 0.0
    %4866 = vmatprep.subr.mxu0 0.0
    %4867 = vmatpush1.msra.mxu0 0.0
    %4868 = vmatprep.subr.mxu0 0.0
    %4869 = vmatpush1.msra.mxu0 0.0
    %4870 = vmatprep.subr.mxu0 0.0
    %4871 = vmatpush1.msra.mxu0 0.0
    %4872 = vmatprep.subr.mxu0 0.0
    %4873 = vmatpush1.msra.mxu0 0.0
    %4874 = vmatprep.subr.mxu0 0.0
    %4875 = vmatpush1.msra.mxu0 0.0
    %4876 = vmatprep.mubr.f32.mxu0 0.0
    %4877 = vmatmul.mubr.f32.gmra.mrb[0].mxu0 %v4810
    %v4878 = vpop.f32.mrb[0].mxu0
    %v4879 = vadd.f32 0.0, %v4878
    %v4880 = vpop.f32.mrb[0].mxu0
    %4881 = vdwg.mxu0
    %v4883 = vsel %vm2850, %v3194, 0
    %4885 = vmatprep.subr.mxu0 0.0
    %4886 = vmatpush1.msra.mxu0 %v452
    %4887 = vmatprep.subr.mxu0 0.0
    %4888 = vmatpush1.msra.mxu0 0.0
    %4889 = vmatprep.subr.mxu0 0.0
    %4890 = vmatpush1.msra.mxu0 0.0
    %4891 = vmatprep.subr.mxu0 0.0
    %4892 = vmatpush1.msra.mxu0 0.0
    %4893 = vmatprep.subr.mxu0 0.0
    %4894 = vmatpush1.msra.mxu0 0.0
    %4895 = vmatprep.subr.mxu0 0.0
    %4896 = vmatpush1.msra.mxu0 0.0
    %4897 = vmatprep.subr.mxu0 0.0
    %4898 = vmatpush1.msra.mxu0 0.0
    %4899 = vmatprep.subr.mxu0 0.0
    %4900 = vmatpush1.msra.mxu0 0.0
    %4901 = vmatprep.subr.mxu0 0.0
    %4902 = vmatpush1.msra.mxu0 0.0
    %4903 = vmatprep.subr.mxu0 0.0
    %4904 = vmatpush1.msra.mxu0 0.0
    %4905 = vmatprep.subr.mxu0 0.0
    %4906 = vmatpush1.msra.mxu0 0.0
    %4907 = vmatprep.subr.mxu0 0.0
    %4908 = vmatpush1.msra.mxu0 0.0
    %4909 = vmatprep.subr.mxu0 0.0
    %4910 = vmatpush1.msra.mxu0 0.0
    %4911 = vmatprep.subr.mxu0 0.0
    %4912 = vmatpush1.msra.mxu0 0.0
    %4913 = vmatprep.subr.mxu0 0.0
    %4914 = vmatpush1.msra.mxu0 0.0
    %4915 = vmatprep.subr.mxu0 0.0
    %4916 = vmatpush1.msra.mxu0 0.0
    %4917 = vmatprep.subr.mxu0 0.0
    %4918 = vmatpush1.msra.mxu0 0.0
    %4919 = vmatprep.subr.mxu0 0.0
    %4920 = vmatpush1.msra.mxu0 0.0
    %4921 = vmatprep.subr.mxu0 0.0
    %4922 = vmatpush1.msra.mxu0 0.0
    %4923 = vmatprep.subr.mxu0 0.0
    %4924 = vmatpush1.msra.mxu0 0.0
    %4925 = vmatprep.subr.mxu0 0.0
    %4926 = vmatpush1.msra.mxu0 0.0
    %4927 = vmatprep.subr.mxu0 0.0
    %4928 = vmatpush1.msra.mxu0 0.0
    %4929 = vmatprep.subr.mxu0 0.0
    %4930 = vmatpush1.msra.mxu0 0.0
    %4931 = vmatprep.subr.mxu0 0.0
    %4932 = vmatpush1.msra.mxu0 0.0
    %4933 = vmatprep.subr.mxu0 0.0
    %4934 = vmatpush1.msra.mxu0 0.0
    %4935 = vmatprep.subr.mxu0 0.0
    %4936 = vmatpush1.msra.mxu0 0.0
    %4937 = vmatprep.subr.mxu0 0.0
    %4938 = vmatpush1.msra.mxu0 0.0
    %4939 = vmatprep.subr.mxu0 0.0
    %4940 = vmatpush1.msra.mxu0 0.0
    %4941 = vmatprep.subr.mxu0 0.0
    %4942 = vmatpush1.msra.mxu0 0.0
    %4943 = vmatprep.subr.mxu0 0.0
    %4944 = vmatpush1.msra.mxu0 0.0
    %4945 = vmatprep.subr.mxu0 0.0
    %4946 = vmatpush1.msra.mxu0 0.0
    %4947 = vmatprep.subr.mxu0 0.0
    %4948 = vmatpush1.msra.mxu0 0.0
    %4949 = vmatprep.mubr.f32.mxu0 0.0
    %4950 = vmatmul.mubr.f32.gmra.mrb[0].mxu0 %v4883
    %v4951 = vpop.f32.mrb[0].mxu0
    %v4952 = vadd.f32 0.0, %v4951
    %v4953 = vpop.f32.mrb[0].mxu0
    %4954 = vdwg.mxu0
    %v4956 = vsel %vm2850, %v3195, 0
    %4958 = vmatprep.subr.mxu0 0.0
    %4959 = vmatpush1.msra.mxu0 %v458
    %4960 = vmatprep.subr.mxu0 0.0
    %4961 = vmatpush1.msra.mxu0 0.0
    %4962 = vmatprep.subr.mxu0 0.0
    %4963 = vmatpush1.msra.mxu0 0.0
    %4964 = vmatprep.subr.mxu0 0.0
    %4965 = vmatpush1.msra.mxu0 0.0
    %4966 = vmatprep.subr.mxu0 0.0
    %4967 = vmatpush1.msra.mxu0 0.0
    %4968 = vmatprep.subr.mxu0 0.0
    %4969 = vmatpush1.msra.mxu0 0.0
    %4970 = vmatprep.subr.mxu0 0.0
    %4971 = vmatpush1.msra.mxu0 0.0
    %4972 = vmatprep.subr.mxu0 0.0
    %4973 = vmatpush1.msra.mxu0 0.0
    %4974 = vmatprep.subr.mxu0 0.0
    %4975 = vmatpush1.msra.mxu0 0.0
    %4976 = vmatprep.subr.mxu0 0.0
    %4977 = vmatpush1.msra.mxu0 0.0
    %4978 = vmatprep.subr.mxu0 0.0
    %4979 = vmatpush1.msra.mxu0 0.0
    %4980 = vmatprep.subr.mxu0 0.0
    %4981 = vmatpush1.msra.mxu0 0.0
    %4982 = vmatprep.subr.mxu0 0.0
    %4983 = vmatpush1.msra.mxu0 0.0
    %4984 = vmatprep.subr.mxu0 0.0
    %4985 = vmatpush1.msra.mxu0 0.0
    %4986 = vmatprep.subr.mxu0 0.0
    %4987 = vmatpush1.msra.mxu0 0.0
    %4988 = vmatprep.subr.mxu0 0.0
    %4989 = vmatpush1.msra.mxu0 0.0
    %4990 = vmatprep.subr.mxu0 0.0
    %4991 = vmatpush1.msra.mxu0 0.0
    %4992 = vmatprep.subr.mxu0 0.0
    %4993 = vmatpush1.msra.mxu0 0.0
    %4994 = vmatprep.subr.mxu0 0.0
    %4995 = vmatpush1.msra.mxu0 0.0
    %4996 = vmatprep.subr.mxu0 0.0
    %4997 = vmatpush1.msra.mxu0 0.0
    %4998 = vmatprep.subr.mxu0 0.0
    %4999 = vmatpush1.msra.mxu0 0.0
    %5000 = vmatprep.subr.mxu0 0.0
    %5001 = vmatpush1.msra.mxu0 0.0
    %5002 = vmatprep.subr.mxu0 0.0
    %5003 = vmatpush1.msra.mxu0 0.0
    %5004 = vmatprep.subr.mxu0 0.0
    %5005 = vmatpush1.msra.mxu0 0.0
    %5006 = vmatprep.subr.mxu0 0.0
    %5007 = vmatpush1.msra.mxu0 0.0
    %5008 = vmatprep.subr.mxu0 0.0
    %5009 = vmatpush1.msra.mxu0 0.0
    %5010 = vmatprep.subr.mxu0 0.0
    %5011 = vmatpush1.msra.mxu0 0.0
    %5012 = vmatprep.subr.mxu0 0.0
    %5013 = vmatpush1.msra.mxu0 0.0
    %5014 = vmatprep.subr.mxu0 0.0
    %5015 = vmatpush1.msra.mxu0 0.0
    %5016 = vmatprep.subr.mxu0 0.0
    %5017 = vmatpush1.msra.mxu0 0.0
    %5018 = vmatprep.subr.mxu0 0.0
    %5019 = vmatpush1.msra.mxu0 0.0
    %5020 = vmatprep.subr.mxu0 0.0
    %5021 = vmatpush1.msra.mxu0 0.0
    %5022 = vmatprep.mubr.f32.mxu0 0.0
    %5023 = vmatmul.mubr.f32.gmra.mrb[0].mxu0 %v4956
    %v5024 = vpop.f32.mrb[0].mxu0
    %v5025 = vadd.f32 0.0, %v5024
    %v5026 = vpop.f32.mrb[0].mxu0
    %5027 = vdwg.mxu0
    %v5029 = vsel %vm2850, %v3196, 0
    %5031 = vmatprep.subr.mxu0 0.0
    %5032 = vmatpush1.msra.mxu0 %v460
    %5033 = vmatprep.subr.mxu0 0.0
    %5034 = vmatpush1.msra.mxu0 0.0
    %5035 = vmatprep.subr.mxu0 0.0
    %5036 = vmatpush1.msra.mxu0 0.0
    %5037 = vmatprep.subr.mxu0 0.0
    %5038 = vmatpush1.msra.mxu0 0.0
    %5039 = vmatprep.subr.mxu0 0.0
    %5040 = vmatpush1.msra.mxu0 0.0
    %5041 = vmatprep.subr.mxu0 0.0
    %5042 = vmatpush1.msra.mxu0 0.0
    %5043 = vmatprep.subr.mxu0 0.0
    %5044 = vmatpush1.msra.mxu0 0.0
    %5045 = vmatprep.subr.mxu0 0.0
    %5046 = vmatpush1.msra.mxu0 0.0
    %5047 = vmatprep.subr.mxu0 0.0
    %5048 = vmatpush1.msra.mxu0 0.0
    %5049 = vmatprep.subr.mxu0 0.0
    %5050 = vmatpush1.msra.mxu0 0.0
    %5051 = vmatprep.subr.mxu0 0.0
    %5052 = vmatpush1.msra.mxu0 0.0
    %5053 = vmatprep.subr.mxu0 0.0
    %5054 = vmatpush1.msra.mxu0 0.0
    %5055 = vmatprep.subr.mxu0 0.0
    %5056 = vmatpush1.msra.mxu0 0.0
    %5057 = vmatprep.subr.mxu0 0.0
    %5058 = vmatpush1.msra.mxu0 0.0
    %5059 = vmatprep.subr.mxu0 0.0
    %5060 = vmatpush1.msra.mxu0 0.0
    %5061 = vmatprep.subr.mxu0 0.0
    %5062 = vmatpush1.msra.mxu0 0.0
    %5063 = vmatprep.subr.mxu0 0.0
    %5064 = vmatpush1.msra.mxu0 0.0
    %5065 = vmatprep.subr.mxu0 0.0
    %5066 = vmatpush1.msra.mxu0 0.0
    %5067 = vmatprep.subr.mxu0 0.0
    %5068 = vmatpush1.msra.mxu0 0.0
    %5069 = vmatprep.subr.mxu0 0.0
    %5070 = vmatpush1.msra.mxu0 0.0
    %5071 = vmatprep.subr.mxu0 0.0
    %5072 = vmatpush1.msra.mxu0 0.0
    %5073 = vmatprep.subr.mxu0 0.0
    %5074 = vmatpush1.msra.mxu0 0.0
    %5075 = vmatprep.subr.mxu0 0.0
    %5076 = vmatpush1.msra.mxu0 0.0
    %5077 = vmatprep.subr.mxu0 0.0
    %5078 = vmatpush1.msra.mxu0 0.0
    %5079 = vmatprep.subr.mxu0 0.0
    %5080 = vmatpush1.msra.mxu0 0.0
    %5081 = vmatprep.subr.mxu0 0.0
    %5082 = vmatpush1.msra.mxu0 0.0
    %5083 = vmatprep.subr.mxu0 0.0
    %5084 = vmatpush1.msra.mxu0 0.0
    %5085 = vmatprep.subr.mxu0 0.0
    %5086 = vmatpush1.msra.mxu0 0.0
    %5087 = vmatprep.subr.mxu0 0.0
    %5088 = vmatpush1.msra.mxu0 0.0
    %5089 = vmatprep.subr.mxu0 0.0
    %5090 = vmatpush1.msra.mxu0 0.0
    %5091 = vmatprep.subr.mxu0 0.0
    %5092 = vmatpush1.msra.mxu0 0.0
    %5093 = vmatprep.subr.mxu0 0.0
    %5094 = vmatpush1.msra.mxu0 0.0
    %5095 = vmatprep.mubr.f32.mxu0 0.0
    %5096 = vmatmul.mubr.f32.gmra.mrb[0].mxu0 %v5029
    %v5097 = vpop.f32.mrb[0].mxu0
    %v5098 = vadd.f32 0.0, %v5097
    %v5099 = vpop.f32.mrb[0].mxu0
    %5100 = vdwg.mxu0
    %v5102 = vsel %vm2850, %v3197, 0
    %5104 = vmatprep.subr.mxu0 0.0
    %5105 = vmatpush1.msra.mxu0 %v462
    %5106 = vmatprep.subr.mxu0 0.0
    %5107 = vmatpush1.msra.mxu0 0.0
    %5108 = vmatprep.subr.mxu0 0.0
    %5109 = vmatpush1.msra.mxu0 0.0
    %5110 = vmatprep.subr.mxu0 0.0
    %5111 = vmatpush1.msra.mxu0 0.0
    %5112 = vmatprep.subr.mxu0 0.0
    %5113 = vmatpush1.msra.mxu0 0.0
    %5114 = vmatprep.subr.mxu0 0.0
    %5115 = vmatpush1.msra.mxu0 0.0
    %5116 = vmatprep.subr.mxu0 0.0
    %5117 = vmatpush1.msra.mxu0 0.0
    %5118 = vmatprep.subr.mxu0 0.0
    %5119 = vmatpush1.msra.mxu0 0.0
    %5120 = vmatprep.subr.mxu0 0.0
    %5121 = vmatpush1.msra.mxu0 0.0
    %5122 = vmatprep.subr.mxu0 0.0
    %5123 = vmatpush1.msra.mxu0 0.0
    %5124 = vmatprep.subr.mxu0 0.0
    %5125 = vmatpush1.msra.mxu0 0.0
    %5126 = vmatprep.subr.mxu0 0.0
    %5127 = vmatpush1.msra.mxu0 0.0
    %5128 = vmatprep.subr.mxu0 0.0
    %5129 = vmatpush1.msra.mxu0 0.0
    %5130 = vmatprep.subr.mxu0 0.0
    %5131 = vmatpush1.msra.mxu0 0.0
    %5132 = vmatprep.subr.mxu0 0.0
    %5133 = vmatpush1.msra.mxu0 0.0
    %5134 = vmatprep.subr.mxu0 0.0
    %5135 = vmatpush1.msra.mxu0 0.0
    %5136 = vmatprep.subr.mxu0 0.0
    %5137 = vmatpush1.msra.mxu0 0.0
    %5138 = vmatprep.subr.mxu0 0.0
    %5139 = vmatpush1.msra.mxu0 0.0
    %5140 = vmatprep.subr.mxu0 0.0
    %5141 = vmatpush1.msra.mxu0 0.0
    %5142 = vmatprep.subr.mxu0 0.0
    %5143 = vmatpush1.msra.mxu0 0.0
    %5144 = vmatprep.subr.mxu0 0.0
    %5145 = vmatpush1.msra.mxu0 0.0
    %5146 = vmatprep.subr.mxu0 0.0
    %5147 = vmatpush1.msra.mxu0 0.0
    %5148 = vmatprep.subr.mxu0 0.0
    %5149 = vmatpush1.msra.mxu0 0.0
    %5150 = vmatprep.subr.mxu0 0.0
    %5151 = vmatpush1.msra.mxu0 0.0
    %5152 = vmatprep.subr.mxu0 0.0
    %5153 = vmatpush1.msra.mxu0 0.0
    %5154 = vmatprep.subr.mxu0 0.0
    %5155 = vmatpush1.msra.mxu0 0.0
    %5156 = vmatprep.subr.mxu0 0.0
    %5157 = vmatpush1.msra.mxu0 0.0
    %5158 = vmatprep.subr.mxu0 0.0
    %5159 = vmatpush1.msra.mxu0 0.0
    %5160 = vmatprep.subr.mxu0 0.0
    %5161 = vmatpush1.msra.mxu0 0.0
    %5162 = vmatprep.subr.mxu0 0.0
    %5163 = vmatpush1.msra.mxu0 0.0
    %5164 = vmatprep.subr.mxu0 0.0
    %5165 = vmatpush1.msra.mxu0 0.0
    %5166 = vmatprep.subr.mxu0 0.0
    %5167 = vmatpush1.msra.mxu0 0.0
    %5168 = vmatprep.mubr.f32.mxu0 0.0
    %5169 = vmatmul.mubr.f32.gmra.mrb[0].mxu0 %v5102
    %v5170 = vpop.f32.mrb[0].mxu0
    %v5171 = vadd.f32 0.0, %v5170
    %v5172 = vpop.f32.mrb[0].mxu0
    %5173 = vdwg.mxu0
    %v5175 = vsel %vm2850, %v3198, 0
    %5177 = vmatprep.subr.mxu0 0.0
    %5178 = vmatpush1.msra.mxu0 %v464
    %5179 = vmatprep.subr.mxu0 0.0
    %5180 = vmatpush1.msra.mxu0 0.0
    %5181 = vmatprep.subr.mxu0 0.0
    %5182 = vmatpush1.msra.mxu0 0.0
    %5183 = vmatprep.subr.mxu0 0.0
    %5184 = vmatpush1.msra.mxu0 0.0
    %5185 = vmatprep.subr.mxu0 0.0
    %5186 = vmatpush1.msra.mxu0 0.0
    %5187 = vmatprep.subr.mxu0 0.0
    %5188 = vmatpush1.msra.mxu0 0.0
    %5189 = vmatprep.subr.mxu0 0.0
    %5190 = vmatpush1.msra.mxu0 0.0
    %5191 = vmatprep.subr.mxu0 0.0
    %5192 = vmatpush1.msra.mxu0 0.0
    %5193 = vmatprep.subr.mxu0 0.0
    %5194 = vmatpush1.msra.mxu0 0.0
    %5195 = vmatprep.subr.mxu0 0.0
    %5196 = vmatpush1.msra.mxu0 0.0
    %5197 = vmatprep.subr.mxu0 0.0
    %5198 = vmatpush1.msra.mxu0 0.0
    %5199 = vmatprep.subr.mxu0 0.0
    %5200 = vmatpush1.msra.mxu0 0.0
    %5201 = vmatprep.subr.mxu0 0.0
    %5202 = vmatpush1.msra.mxu0 0.0
    %5203 = vmatprep.subr.mxu0 0.0
    %5204 = vmatpush1.msra.mxu0 0.0
    %5205 = vmatprep.subr.mxu0 0.0
    %5206 = vmatpush1.msra.mxu0 0.0
    %5207 = vmatprep.subr.mxu0 0.0
    %5208 = vmatpush1.msra.mxu0 0.0
    %5209 = vmatprep.subr.mxu0 0.0
    %5210 = vmatpush1.msra.mxu0 0.0
    %5211 = vmatprep.subr.mxu0 0.0
    %5212 = vmatpush1.msra.mxu0 0.0
    %5213 = vmatprep.subr.mxu0 0.0
    %5214 = vmatpush1.msra.mxu0 0.0
    %5215 = vmatprep.subr.mxu0 0.0
    %5216 = vmatpush1.msra.mxu0 0.0
    %5217 = vmatprep.subr.mxu0 0.0
    %5218 = vmatpush1.msra.mxu0 0.0
    %5219 = vmatprep.subr.mxu0 0.0
    %5220 = vmatpush1.msra.mxu0 0.0
    %5221 = vmatprep.subr.mxu0 0.0
    %5222 = vmatpush1.msra.mxu0 0.0
    %5223 = vmatprep.subr.mxu0 0.0
    %5224 = vmatpush1.msra.mxu0 0.0
    %5225 = vmatprep.subr.mxu0 0.0
    %5226 = vmatpush1.msra.mxu0 0.0
    %5227 = vmatprep.subr.mxu0 0.0
    %5228 = vmatpush1.msra.mxu0 0.0
    %5229 = vmatprep.subr.mxu0 0.0
    %5230 = vmatpush1.msra.mxu0 0.0
    %5231 = vmatprep.subr.mxu0 0.0
    %5232 = vmatpush1.msra.mxu0 0.0
    %5233 = vmatprep.subr.mxu0 0.0
    %5234 = vmatpush1.msra.mxu0 0.0
    %5235 = vmatprep.subr.mxu0 0.0
    %5236 = vmatpush1.msra.mxu0 0.0
    %5237 = vmatprep.subr.mxu0 0.0
    %5238 = vmatpush1.msra.mxu0 0.0
    %5239 = vmatprep.subr.mxu0 0.0
    %5240 = vmatpush1.msra.mxu0 0.0
    %5241 = vmatprep.mubr.f32.mxu0 0.0
    %5242 = vmatmul.mubr.f32.gmra.mrb[0].mxu0 %v5175
    %v5243 = vpop.f32.mrb[0].mxu0
    %v5244 = vadd.f32 0.0, %v5243
    %v5245 = vpop.f32.mrb[0].mxu0
    %5246 = vdwg.mxu0
    %v5248 = vsel %vm2850, %v3199, 0
    %5250 = vmatprep.subr.mxu0 0.0
    %5251 = vmatpush1.msra.mxu0 %v470
    %5252 = vmatprep.subr.mxu0 0.0
    %5253 = vmatpush1.msra.mxu0 0.0
    %5254 = vmatprep.subr.mxu0 0.0
    %5255 = vmatpush1.msra.mxu0 0.0
    %5256 = vmatprep.subr.mxu0 0.0
    %5257 = vmatpush1.msra.mxu0 0.0
    %5258 = vmatprep.subr.mxu0 0.0
    %5259 = vmatpush1.msra.mxu0 0.0
    %5260 = vmatprep.subr.mxu0 0.0
    %5261 = vmatpush1.msra.mxu0 0.0
    %5262 = vmatprep.subr.mxu0 0.0
    %5263 = vmatpush1.msra.mxu0 0.0
    %5264 = vmatprep.subr.mxu0 0.0
    %5265 = vmatpush1.msra.mxu0 0.0
    %5266 = vmatprep.subr.mxu0 0.0
    %5267 = vmatpush1.msra.mxu0 0.0
    %5268 = vmatprep.subr.mxu0 0.0
    %5269 = vmatpush1.msra.mxu0 0.0
    %5270 = vmatprep.subr.mxu0 0.0
    %5271 = vmatpush1.msra.mxu0 0.0
    %5272 = vmatprep.subr.mxu0 0.0
    %5273 = vmatpush1.msra.mxu0 0.0
    %5274 = vmatprep.subr.mxu0 0.0
    %5275 = vmatpush1.msra.mxu0 0.0
    %5276 = vmatprep.subr.mxu0 0.0
    %5277 = vmatpush1.msra.mxu0 0.0
    %5278 = vmatprep.subr.mxu0 0.0
    %5279 = vmatpush1.msra.mxu0 0.0
    %5280 = vmatprep.subr.mxu0 0.0
    %5281 = vmatpush1.msra.mxu0 0.0
    %5282 = vmatprep.subr.mxu0 0.0
    %5283 = vmatpush1.msra.mxu0 0.0
    %5284 = vmatprep.subr.mxu0 0.0
    %5285 = vmatpush1.msra.mxu0 0.0
    %5286 = vmatprep.subr.mxu0 0.0
    %5287 = vmatpush1.msra.mxu0 0.0
    %5288 = vmatprep.subr.mxu0 0.0
    %5289 = vmatpush1.msra.mxu0 0.0
    %5290 = vmatprep.subr.mxu0 0.0
    %5291 = vmatpush1.msra.mxu0 0.0
    %5292 = vmatprep.subr.mxu0 0.0
    %5293 = vmatpush1.msra.mxu0 0.0
    %5294 = vmatprep.subr.mxu0 0.0
    %5295 = vmatpush1.msra.mxu0 0.0
    %5296 = vmatprep.subr.mxu0 0.0
    %5297 = vmatpush1.msra.mxu0 0.0
    %5298 = vmatprep.subr.mxu0 0.0
    %5299 = vmatpush1.msra.mxu0 0.0
    %5300 = vmatprep.subr.mxu0 0.0
    %5301 = vmatpush1.msra.mxu0 0.0
    %5302 = vmatprep.subr.mxu0 0.0
    %5303 = vmatpush1.msra.mxu0 0.0
    %5304 = vmatprep.subr.mxu0 0.0
    %5305 = vmatpush1.msra.mxu0 0.0
    %5306 = vmatprep.subr.mxu0 0.0
    %5307 = vmatpush1.msra.mxu0 0.0
    %5308 = vmatprep.subr.mxu0 0.0
    %5309 = vmatpush1.msra.mxu0 0.0
    %5310 = vmatprep.subr.mxu0 0.0
    %5311 = vmatpush1.msra.mxu0 0.0
    %5312 = vmatprep.subr.mxu0 0.0
    %5313 = vmatpush1.msra.mxu0 0.0
    %5314 = vmatprep.mubr.f32.mxu0 0.0
    %5315 = vmatmul.mubr.f32.gmra.mrb[0].mxu0 %v5248
    %v5316 = vpop.f32.mrb[0].mxu0
    %v5317 = vadd.f32 0.0, %v5316
    %v5318 = vpop.f32.mrb[0].mxu0
    %5319 = vdwg.mxu0
    %v5321 = vsel %vm2850, %v3200, 0
    %5323 = vmatprep.subr.mxu0 0.0
    %5324 = vmatpush1.msra.mxu0 %v472
    %5325 = vmatprep.subr.mxu0 0.0
    %5326 = vmatpush1.msra.mxu0 0.0
    %5327 = vmatprep.subr.mxu0 0.0
    %5328 = vmatpush1.msra.mxu0 0.0
    %5329 = vmatprep.subr.mxu0 0.0
    %5330 = vmatpush1.msra.mxu0 0.0
    %5331 = vmatprep.subr.mxu0 0.0
    %5332 = vmatpush1.msra.mxu0 0.0
    %5333 = vmatprep.subr.mxu0 0.0
    %5334 = vmatpush1.msra.mxu0 0.0
    %5335 = vmatprep.subr.mxu0 0.0
    %5336 = vmatpush1.msra.mxu0 0.0
    %5337 = vmatprep.subr.mxu0 0.0
    %5338 = vmatpush1.msra.mxu0 0.0
    %5339 = vmatprep.subr.mxu0 0.0
    %5340 = vmatpush1.msra.mxu0 0.0
    %5341 = vmatprep.subr.mxu0 0.0
    %5342 = vmatpush1.msra.mxu0 0.0
    %5343 = vmatprep.subr.mxu0 0.0
    %5344 = vmatpush1.msra.mxu0 0.0
    %5345 = vmatprep.subr.mxu0 0.0
    %5346 = vmatpush1.msra.mxu0 0.0
    %5347 = vmatprep.subr.mxu0 0.0
    %5348 = vmatpush1.msra.mxu0 0.0
    %5349 = vmatprep.subr.mxu0 0.0
    %5350 = vmatpush1.msra.mxu0 0.0
    %5351 = vmatprep.subr.mxu0 0.0
    %5352 = vmatpush1.msra.mxu0 0.0
    %5353 = vmatprep.subr.mxu0 0.0
    %5354 = vmatpush1.msra.mxu0 0.0
    %5355 = vmatprep.subr.mxu0 0.0
    %5356 = vmatpush1.msra.mxu0 0.0
    %5357 = vmatprep.subr.mxu0 0.0
    %5358 = vmatpush1.msra.mxu0 0.0
    %5359 = vmatprep.subr.mxu0 0.0
    %5360 = vmatpush1.msra.mxu0 0.0
    %5361 = vmatprep.subr.mxu0 0.0
    %5362 = vmatpush1.msra.mxu0 0.0
    %5363 = vmatprep.subr.mxu0 0.0
    %5364 = vmatpush1.msra.mxu0 0.0
    %5365 = vmatprep.subr.mxu0 0.0
    %5366 = vmatpush1.msra.mxu0 0.0
    %5367 = vmatprep.subr.mxu0 0.0
    %5368 = vmatpush1.msra.mxu0 0.0
    %5369 = vmatprep.subr.mxu0 0.0
    %5370 = vmatpush1.msra.mxu0 0.0
    %5371 = vmatprep.subr.mxu0 0.0
    %5372 = vmatpush1.msra.mxu0 0.0
    %5373 = vmatprep.subr.mxu0 0.0
    %5374 = vmatpush1.msra.mxu0 0.0
    %5375 = vmatprep.subr.mxu0 0.0
    %5376 = vmatpush1.msra.mxu0 0.0
    %5377 = vmatprep.subr.mxu0 0.0
    %5378 = vmatpush1.msra.mxu0 0.0
    %5379 = vmatprep.subr.mxu0 0.0
    %5380 = vmatpush1.msra.mxu0 0.0
    %5381 = vmatprep.subr.mxu0 0.0
    %5382 = vmatpush1.msra.mxu0 0.0
    %5383 = vmatprep.subr.mxu0 0.0
    %5384 = vmatpush1.msra.mxu0 0.0
    %5385 = vmatprep.subr.mxu0 0.0
    %5386 = vmatpush1.msra.mxu0 0.0
    %5387 = vmatprep.mubr.f32.mxu0 0.0
    %5388 = vmatmul.mubr.f32.gmra.mrb[0].mxu0 %v5321
    %v5389 = vpop.f32.mrb[0].mxu0
    %v5390 = vadd.f32 0.0, %v5389
    %v5391 = vpop.f32.mrb[0].mxu0
    %5392 = vdwg.mxu0
    %v5394 = vsel %vm2850, %v3201, 0
    %5396 = vmatprep.subr.mxu0 0.0
    %5397 = vmatpush1.msra.mxu0 %v474
    %5398 = vmatprep.subr.mxu0 0.0
    %5399 = vmatpush1.msra.mxu0 0.0
    %5400 = vmatprep.subr.mxu0 0.0
    %5401 = vmatpush1.msra.mxu0 0.0
    %5402 = vmatprep.subr.mxu0 0.0
    %5403 = vmatpush1.msra.mxu0 0.0
    %5404 = vmatprep.subr.mxu0 0.0
    %5405 = vmatpush1.msra.mxu0 0.0
    %5406 = vmatprep.subr.mxu0 0.0
    %5407 = vmatpush1.msra.mxu0 0.0
    %5408 = vmatprep.subr.mxu0 0.0
    %5409 = vmatpush1.msra.mxu0 0.0
    %5410 = vmatprep.subr.mxu0 0.0
    %5411 = vmatpush1.msra.mxu0 0.0
    %5412 = vmatprep.subr.mxu0 0.0
    %5413 = vmatpush1.msra.mxu0 0.0
    %5414 = vmatprep.subr.mxu0 0.0
    %5415 = vmatpush1.msra.mxu0 0.0
    %5416 = vmatprep.subr.mxu0 0.0
    %5417 = vmatpush1.msra.mxu0 0.0
    %5418 = vmatprep.subr.mxu0 0.0
    %5419 = vmatpush1.msra.mxu0 0.0
    %5420 = vmatprep.subr.mxu0 0.0
    %5421 = vmatpush1.msra.mxu0 0.0
    %5422 = vmatprep.subr.mxu0 0.0
    %5423 = vmatpush1.msra.mxu0 0.0
    %5424 = vmatprep.subr.mxu0 0.0
    %5425 = vmatpush1.msra.mxu0 0.0
    %5426 = vmatprep.subr.mxu0 0.0
    %5427 = vmatpush1.msra.mxu0 0.0
    %5428 = vmatprep.subr.mxu0 0.0
    %5429 = vmatpush1.msra.mxu0 0.0
    %5430 = vmatprep.subr.mxu0 0.0
    %5431 = vmatpush1.msra.mxu0 0.0
    %5432 = vmatprep.subr.mxu0 0.0
    %5433 = vmatpush1.msra.mxu0 0.0
    %5434 = vmatprep.subr.mxu0 0.0
    %5435 = vmatpush1.msra.mxu0 0.0
    %5436 = vmatprep.subr.mxu0 0.0
    %5437 = vmatpush1.msra.mxu0 0.0
    %5438 = vmatprep.subr.mxu0 0.0
    %5439 = vmatpush1.msra.mxu0 0.0
    %5440 = vmatprep.subr.mxu0 0.0
    %5441 = vmatpush1.msra.mxu0 0.0
    %5442 = vmatprep.subr.mxu0 0.0
    %5443 = vmatpush1.msra.mxu0 0.0
    %5444 = vmatprep.subr.mxu0 0.0
    %5445 = vmatpush1.msra.mxu0 0.0
    %5446 = vmatprep.subr.mxu0 0.0
    %5447 = vmatpush1.msra.mxu0 0.0
    %5448 = vmatprep.subr.mxu0 0.0
    %5449 = vmatpush1.msra.mxu0 0.0
    %5450 = vmatprep.subr.mxu0 0.0
    %5451 = vmatpush1.msra.mxu0 0.0
    %5452 = vmatprep.subr.mxu0 0.0
    %5453 = vmatpush1.msra.mxu0 0.0
    %5454 = vmatprep.subr.mxu0 0.0
    %5455 = vmatpush1.msra.mxu0 0.0
    %5456 = vmatprep.subr.mxu0 0.0
    %5457 = vmatpush1.msra.mxu0 0.0
    %5458 = vmatprep.subr.mxu0 0.0
    %5459 = vmatpush1.msra.mxu0 0.0
    %5460 = vmatprep.mubr.f32.mxu0 0.0
    %5461 = vmatmul.mubr.f32.gmra.mrb[0].mxu0 %v5394
    %v5462 = vpop.f32.mrb[0].mxu0
    %v5463 = vadd.f32 0.0, %v5462
    %v5464 = vpop.f32.mrb[0].mxu0
    %5465 = vdwg.mxu0
    %v5467 = vsel %vm2850, %v3202, 0
    %5469 = vmatprep.subr.mxu0 0.0
    %5470 = vmatpush1.msra.mxu0 %v476
    %5471 = vmatprep.subr.mxu0 0.0
    %5472 = vmatpush1.msra.mxu0 0.0
    %5473 = vmatprep.subr.mxu0 0.0
    %5474 = vmatpush1.msra.mxu0 0.0
    %5475 = vmatprep.subr.mxu0 0.0
    %5476 = vmatpush1.msra.mxu0 0.0
    %5477 = vmatprep.subr.mxu0 0.0
    %5478 = vmatpush1.msra.mxu0 0.0
    %5479 = vmatprep.subr.mxu0 0.0
    %5480 = vmatpush1.msra.mxu0 0.0
    %5481 = vmatprep.subr.mxu0 0.0
    %5482 = vmatpush1.msra.mxu0 0.0
    %5483 = vmatprep.subr.mxu0 0.0
    %5484 = vmatpush1.msra.mxu0 0.0
    %5485 = vmatprep.subr.mxu0 0.0
    %5486 = vmatpush1.msra.mxu0 0.0
    %5487 = vmatprep.subr.mxu0 0.0
    %5488 = vmatpush1.msra.mxu0 0.0
    %5489 = vmatprep.subr.mxu0 0.0
    %5490 = vmatpush1.msra.mxu0 0.0
    %5491 = vmatprep.subr.mxu0 0.0
    %5492 = vmatpush1.msra.mxu0 0.0
    %5493 = vmatprep.subr.mxu0 0.0
    %5494 = vmatpush1.msra.mxu0 0.0
    %5495 = vmatprep.subr.mxu0 0.0
    %5496 = vmatpush1.msra.mxu0 0.0
    %5497 = vmatprep.subr.mxu0 0.0
    %5498 = vmatpush1.msra.mxu0 0.0
    %5499 = vmatprep.subr.mxu0 0.0
    %5500 = vmatpush1.msra.mxu0 0.0
    %5501 = vmatprep.subr.mxu0 0.0
    %5502 = vmatpush1.msra.mxu0 0.0
    %5503 = vmatprep.subr.mxu0 0.0
    %5504 = vmatpush1.msra.mxu0 0.0
    %5505 = vmatprep.subr.mxu0 0.0
    %5506 = vmatpush1.msra.mxu0 0.0
    %5507 = vmatprep.subr.mxu0 0.0
    %5508 = vmatpush1.msra.mxu0 0.0
    %5509 = vmatprep.subr.mxu0 0.0
    %5510 = vmatpush1.msra.mxu0 0.0
    %5511 = vmatprep.subr.mxu0 0.0
    %5512 = vmatpush1.msra.mxu0 0.0
    %5513 = vmatprep.subr.mxu0 0.0
    %5514 = vmatpush1.msra.mxu0 0.0
    %5515 = vmatprep.subr.mxu0 0.0
    %5516 = vmatpush1.msra.mxu0 0.0
    %5517 = vmatprep.subr.mxu0 0.0
    %5518 = vmatpush1.msra.mxu0 0.0
    %5519 = vmatprep.subr.mxu0 0.0
    %5520 = vmatpush1.msra.mxu0 0.0
    %5521 = vmatprep.subr.mxu0 0.0
    %5522 = vmatpush1.msra.mxu0 0.0
    %5523 = vmatprep.subr.mxu0 0.0
    %5524 = vmatpush1.msra.mxu0 0.0
    %5525 = vmatprep.subr.mxu0 0.0
    %5526 = vmatpush1.msra.mxu0 0.0
    %5527 = vmatprep.subr.mxu0 0.0
    %5528 = vmatpush1.msra.mxu0 0.0
    %5529 = vmatprep.subr.mxu0 0.0
    %5530 = vmatpush1.msra.mxu0 0.0
    %5531 = vmatprep.subr.mxu0 0.0
    %5532 = vmatpush1.msra.mxu0 0.0
    %5533 = vmatprep.mubr.f32.mxu0 0.0
    %5534 = vmatmul.mubr.f32.gmra.mrb[0].mxu0 %v5467
    %v5535 = vpop.f32.mrb[0].mxu0
    %v5536 = vadd.f32 0.0, %v5535
    %v5537 = vpop.f32.mrb[0].mxu0
    %5538 = vdwg.mxu0
    %5539 = vst.msk [vmem:[#allocation2] sm:$0xff] %vm481, %v3273
    %5540 = vst.msk [vmem:[#allocation2 + $0x8] sm:$0xff] %vm481, %v3346
    %5541 = vst.msk [vmem:[#allocation2 + $0x10] sm:$0xff] %vm481, %v3419
    %5542 = vst.msk [vmem:[#allocation2 + $0x18] sm:$0xff] %vm481, %v3492
    %5547 = vrot.lane.b32.xlu0 %v3565, 16
    %v5548 = vpop.permute.xlu0 %5547
    %5549 = vrot.lane.b32.xlu0 %v3638, 16
    %v5550 = vpop.permute.xlu0 %5549
    %5551 = vrot.lane.b32.xlu0 %v3711, 16
    %v5552 = vpop.permute.xlu0 %5551
    %5553 = vrot.lane.b32.xlu0 %v3784, 16
    %v5554 = vpop.permute.xlu0 %5553
    %vm5559 = vcmask 261248
    %5560 = vst.msk [vmem:[#allocation2] sm:$0xff] %vm5559, %v5548
    %5561 = vst.msk [vmem:[#allocation2 + $0x8] sm:$0xff] %vm5559, %v5550
    %5562 = vst.msk [vmem:[#allocation2 + $0x10] sm:$0xff] %vm5559, %v5552
    %5563 = vst.msk [vmem:[#allocation2 + $0x18] sm:$0xff] %vm5559, %v5554
    %5568 = vrot.lane.b32.xlu0 %v3857, 32
    %v5569 = vpop.permute.xlu0 %5568
    %5570 = vrot.lane.b32.xlu0 %v3930, 32
    %v5571 = vpop.permute.xlu0 %5570
    %5572 = vrot.lane.b32.xlu0 %v4003, 32
    %v5573 = vpop.permute.xlu0 %5572
    %5574 = vrot.lane.b32.xlu0 %v4076, 32
    %v5575 = vpop.permute.xlu0 %5574
    %vm5580 = vcmask 392448
    %5581 = vst.msk [vmem:[#allocation2] sm:$0xff] %vm5580, %v5569
    %5582 = vst.msk [vmem:[#allocation2 + $0x8] sm:$0xff] %vm5580, %v5571
    %5583 = vst.msk [vmem:[#allocation2 + $0x10] sm:$0xff] %vm5580, %v5573
    %5584 = vst.msk [vmem:[#allocation2 + $0x18] sm:$0xff] %vm5580, %v5575
    %5589 = vrot.lane.b32.xlu0 %v4149, 48
    %v5590 = vpop.permute.xlu0 %5589
    %5591 = vrot.lane.b32.xlu0 %v4222, 48
    %v5592 = vpop.permute.xlu0 %5591
    %5593 = vrot.lane.b32.xlu0 %v4295, 48
    %v5594 = vpop.permute.xlu0 %5593
    %5595 = vrot.lane.b32.xlu0 %v4368, 48
    %v5596 = vpop.permute.xlu0 %5595
    %vm5601 = vcmask 523648
    %5602 = vst.msk [vmem:[#allocation2] sm:$0xff] %vm5601, %v5590
    %5603 = vst.msk [vmem:[#allocation2 + $0x8] sm:$0xff] %vm5601, %v5592
    %5604 = vst.msk [vmem:[#allocation2 + $0x10] sm:$0xff] %vm5601, %v5594
    %5605 = vst.msk [vmem:[#allocation2 + $0x18] sm:$0xff] %vm5601, %v5596
    %5610 = vrot.lane.b32.xlu0 %v4441, 64
    %v5611 = vpop.permute.xlu0 %5610
    %5612 = vrot.lane.b32.xlu0 %v4514, 64
    %v5613 = vpop.permute.xlu0 %5612
    %5614 = vrot.lane.b32.xlu0 %v4587, 64
    %v5615 = vpop.permute.xlu0 %5614
    %5616 = vrot.lane.b32.xlu0 %v4660, 64
    %v5617 = vpop.permute.xlu0 %5616
    %vm5622 = vcmask 654848
    %5623 = vst.msk [vmem:[#allocation2] sm:$0xff] %vm5622, %v5611
    %5624 = vst.msk [vmem:[#allocation2 + $0x8] sm:$0xff] %vm5622, %v5613
    %5625 = vst.msk [vmem:[#allocation2 + $0x10] sm:$0xff] %vm5622, %v5615
    %5626 = vst.msk [vmem:[#allocation2 + $0x18] sm:$0xff] %vm5622, %v5617
    %5631 = vrot.lane.b32.xlu0 %v4733, 80
    %v5632 = vpop.permute.xlu0 %5631
    %5633 = vrot.lane.b32.xlu0 %v4806, 80
    %v5634 = vpop.permute.xlu0 %5633
    %5635 = vrot.lane.b32.xlu0 %v4879, 80
    %v5636 = vpop.permute.xlu0 %5635
    %5637 = vrot.lane.b32.xlu0 %v4952, 80
    %v5638 = vpop.permute.xlu0 %5637
    %vm5643 = vcmask 786048
    %5644 = vst.msk [vmem:[#allocation2] sm:$0xff] %vm5643, %v5632
    %5645 = vst.msk [vmem:[#allocation2 + $0x8] sm:$0xff] %vm5643, %v5634
    %5646 = vst.msk [vmem:[#allocation2 + $0x10] sm:$0xff] %vm5643, %v5636
    %5647 = vst.msk [vmem:[#allocation2 + $0x18] sm:$0xff] %vm5643, %v5638
    %5652 = vrot.lane.b32.xlu0 %v5025, 96
    %v5653 = vpop.permute.xlu0 %5652
    %5654 = vrot.lane.b32.xlu0 %v5098, 96
    %v5655 = vpop.permute.xlu0 %5654
    %5656 = vrot.lane.b32.xlu0 %v5171, 96
    %v5657 = vpop.permute.xlu0 %5656
    %5658 = vrot.lane.b32.xlu0 %v5244, 96
    %v5659 = vpop.permute.xlu0 %5658
    %vm5664 = vcmask 917248
    %5665 = vst.msk [vmem:[#allocation2] sm:$0xff] %vm5664, %v5653
    %5666 = vst.msk [vmem:[#allocation2 + $0x8] sm:$0xff] %vm5664, %v5655
    %5667 = vst.msk [vmem:[#allocation2 + $0x10] sm:$0xff] %vm5664, %v5657
    %5668 = vst.msk [vmem:[#allocation2 + $0x18] sm:$0xff] %vm5664, %v5659
    %5673 = vrot.lane.b32.xlu0 %v5317, 112
    %v5674 = vpop.permute.xlu0 %5673
    %5675 = vrot.lane.b32.xlu0 %v5390, 112
    %v5676 = vpop.permute.xlu0 %5675
    %5677 = vrot.lane.b32.xlu0 %v5463, 112
    %v5678 = vpop.permute.xlu0 %5677
    %5679 = vrot.lane.b32.xlu0 %v5536, 112
    %v5680 = vpop.permute.xlu0 %5679
    %vm5685 = vcmask 1048448
    %5686 = vst.msk [vmem:[#allocation2] sm:$0xff] %vm5685, %v5674
    %5687 = vst.msk [vmem:[#allocation2 + $0x8] sm:$0xff] %vm5685, %v5676
    %5688 = vst.msk [vmem:[#allocation2 + $0x10] sm:$0xff] %vm5685, %v5678
    %5689 = vst.msk [vmem:[#allocation2 + $0x18] sm:$0xff] %vm5685, %v5680
    %v5690 = vld [vmem:[#allocation2] sm:$0xff]
    %v5691 = vld [vmem:[#allocation2 + $0x8] sm:$0xff]
    %v5692 = vld [vmem:[#allocation2 + $0x10] sm:$0xff]
    %v5693 = vld [vmem:[#allocation2 + $0x18] sm:$0xff]
    %v5694 = vld [vmem:[%s3] sm:$0xff]
    %v5695 = vld [vmem:[%s3 + $0x8] sm:$0xff]
    %v5696 = vld [vmem:[%s3 + $0x10] sm:$0xff]
    %v5697 = vld [vmem:[%s3 + $0x18] sm:$0xff]
    %v5698 = vld [vmem:[%s3 + $0x20] sm:$0xff]
    %v5699 = vld [vmem:[%s3 + $0x28] sm:$0xff]
    %v5700 = vld [vmem:[%s3 + $0x30] sm:$0xff]
    %v5701 = vld [vmem:[%s3 + $0x38] sm:$0xff]
    %v5702 = vld [vmem:[%s3 + $0x40] sm:$0xff]
    %v5703 = vld [vmem:[%s3 + $0x48] sm:$0xff]
    %v5704 = vld [vmem:[%s3 + $0x50] sm:$0xff]
    %v5705 = vld [vmem:[%s3 + $0x58] sm:$0xff]
    %v5706 = vld [vmem:[%s3 + $0x60] sm:$0xff]
    %v5707 = vld [vmem:[%s3 + $0x68] sm:$0xff]
    %v5708 = vld [vmem:[%s3 + $0x70] sm:$0xff]
    %v5709 = vld [vmem:[%s3 + $0x78] sm:$0xff]
    %v5710 = vld [vmem:[%s4] sm:$0x1]
    %v5712 = vlaneseq
    %v5713 = vshrl.u32 %v5712, 7
    %v5714 = vsub.s32 0, %v5713
    %v5715 = vrot.slane %v5710, %v5714
    %5717 = vmatprep.subr.mxu0 0.0
    %5718 = vmatpush1.msra.mxu0 %v5694
    %5719 = vmatprep.subr.mxu0 0.0
    %5720 = vmatpush1.msra.mxu0 %v5695
    %5721 = vmatprep.subr.mxu0 0.0
    %5722 = vmatpush1.msra.mxu0 %v5696
    %5723 = vmatprep.subr.mxu0 0.0
    %5724 = vmatpush1.msra.mxu0 %v5697
    %5725 = vmatprep.subr.mxu0 0.0
    %5726 = vmatpush1.msra.mxu0 %v5698
    %5727 = vmatprep.subr.mxu0 0.0
    %5728 = vmatpush1.msra.mxu0 %v5699
    %5729 = vmatprep.subr.mxu0 0.0
    %5730 = vmatpush1.msra.mxu0 %v5700
    %5731 = vmatprep.subr.mxu0 0.0
    %5732 = vmatpush1.msra.mxu0 %v5701
    %5733 = vmatprep.subr.mxu0 0.0
    %5734 = vmatpush1.msra.mxu0 %v5702
    %5735 = vmatprep.subr.mxu0 0.0
    %5736 = vmatpush1.msra.mxu0 %v5703
    %5737 = vmatprep.subr.mxu0 0.0
    %5738 = vmatpush1.msra.mxu0 %v5704
    %5739 = vmatprep.subr.mxu0 0.0
    %5740 = vmatpush1.msra.mxu0 %v5705
    %5741 = vmatprep.subr.mxu0 0.0
    %5742 = vmatpush1.msra.mxu0 %v5706
    %5743 = vmatprep.subr.mxu0 0.0
    %5744 = vmatpush1.msra.mxu0 %v5707
    %5745 = vmatprep.subr.mxu0 0.0
    %5746 = vmatpush1.msra.mxu0 %v5708
    %5747 = vmatprep.subr.mxu0 0.0
    %5748 = vmatpush1.msra.mxu0 %v5709
    %5749 = vmatprep.subr.mxu0 0.0
    %5750 = vmatpush1.msra.mxu0 0.0
    %5751 = vmatprep.subr.mxu0 0.0
    %5752 = vmatpush1.msra.mxu0 0.0
    %5753 = vmatprep.subr.mxu0 0.0
    %5754 = vmatpush1.msra.mxu0 0.0
    %5755 = vmatprep.subr.mxu0 0.0
    %5756 = vmatpush1.msra.mxu0 0.0
    %5757 = vmatprep.subr.mxu0 0.0
    %5758 = vmatpush1.msra.mxu0 0.0
    %5759 = vmatprep.subr.mxu0 0.0
    %5760 = vmatpush1.msra.mxu0 0.0
    %5761 = vmatprep.subr.mxu0 0.0
    %5762 = vmatpush1.msra.mxu0 0.0
    %5763 = vmatprep.subr.mxu0 0.0
    %5764 = vmatpush1.msra.mxu0 0.0
    %5765 = vmatprep.subr.mxu0 0.0
    %5766 = vmatpush1.msra.mxu0 0.0
    %5767 = vmatprep.subr.mxu0 0.0
    %5768 = vmatpush1.msra.mxu0 0.0
    %5769 = vmatprep.subr.mxu0 0.0
    %5770 = vmatpush1.msra.mxu0 0.0
    %5771 = vmatprep.subr.mxu0 0.0
    %5772 = vmatpush1.msra.mxu0 0.0
    %5773 = vmatprep.subr.mxu0 0.0
    %5774 = vmatpush1.msra.mxu0 0.0
    %5775 = vmatprep.subr.mxu0 0.0
    %5776 = vmatpush1.msra.mxu0 0.0
    %5777 = vmatprep.subr.mxu0 0.0
    %5778 = vmatpush1.msra.mxu0 0.0
    %5779 = vmatprep.subr.mxu0 0.0
    %5780 = vmatpush1.msra.mxu0 0.0
    %5781 = vmatprep.mubr.f32.mxu0 0.0
    %5782 = vmatmul.mubr.f32.gmra.mrb[0].mxu0 %v5690
    %v5783 = vpop.f32.mrb[0].mxu0
    %v5784 = vadd.f32 %v5715, %v5783
    %v5785 = vpop.f32.mrb[0].mxu0
    %5786 = vmatprep.mubr.f32.mxu0 0.0
    %5787 = vmatmul.mubr.f32.gmra.mrb[0].mxu0 %v5691
    %v5788 = vpop.f32.mrb[0].mxu0
    %v5789 = vadd.f32 %v5715, %v5788
    %v5790 = vpop.f32.mrb[0].mxu0
    %5791 = vmatprep.mubr.f32.mxu0 0.0
    %5792 = vmatmul.mubr.f32.gmra.mrb[0].mxu0 %v5692
    %v5793 = vpop.f32.mrb[0].mxu0
    %v5794 = vadd.f32 %v5715, %v5793
    %v5795 = vpop.f32.mrb[0].mxu0
    %5796 = vmatprep.mubr.f32.mxu0 0.0
    %5797 = vmatmul.mubr.f32.gmra.mrb[0].mxu0 %v5693
    %v5798 = vpop.f32.mrb[0].mxu0
    %v5799 = vadd.f32 %v5715, %v5798
    %v5800 = vpop.f32.mrb[0].mxu0
    %5801 = vdwg.mxu0
    %5802 = vst.msk [vmem:[#allocation6] sm:$0xff] %vm86, %v5784
    %5803 = vst.msk [vmem:[#allocation6 + $0x8] sm:$0xff] %vm86, %v5789
    %5804 = vst.msk [vmem:[#allocation6 + $0x10] sm:$0xff] %vm86, %v5794
    %5805 = vst.msk [vmem:[#allocation6 + $0x18] sm:$0xff] %vm86, %v5799
    // Predicated region
    $region26: #{tpu_custom_call.1} parent=1 // pred_check
      _
    $region27: #{tpu_custom_call.1} parent=1 // pred_check_branch
      %5807 = sbr.rel (0) target = $region29
    $region28: #{tpu_custom_call.1} parent=1 // pred_region
      %s5809 = ssub.s32 512, 512
      %5810 = vsyncadd [#allocation5], %s5809
      %s5811 = sshll.u32 [#allocation6], 4
      %s5812 = int_to_ptr.vmem [resolvable:$true] %s5811
      %5817 = dma.vmem_to_hbm [thread:$0]  %s5812, 512, %s5, [#allocation5], 128, 128, 8
    $region29: #{tpu_custom_call.1} parent=1 // pred_fallthru
      _
    // Predicated region
    $region30: #{tpu_custom_call.1} parent=1 // pred_check
      _
    $region31: #{tpu_custom_call.1} parent=1 // pred_check_branch
      %5819 = sbr.rel (0) target = $region33
    $region32: #{tpu_custom_call.1} parent=1 // pred_region
      %5820 = dma.done [#allocation5], 512
    $region33: #{tpu_custom_call.1} parent=1 // pred_fallthru
      _
    %5821 = vsyncpa [#allocation4], 1
    %5822 = vsyncpa [#allocation5], 1

</llo_original>
